<compile_context>
chip_gen: v5e
topology: v5e:2x2
jax: 0.10.0
libtpu: 0.0.40
codegen_flags: <defaults>
</compile_context>

<pallas_src>
import functools

import jax
import jax.numpy as jnp
from jax import lax
from jax.experimental import pallas as pl
from jax.experimental.pallas import tpu as pltpu

EPS = 1e-5
LANE = 128


def _round_up(x, m):
    return (x + m - 1) // m * m


def _vmem_budget():
    """Generation-aware VMEM limit (~3/4 of per-core capacity)."""
    default = 64 * 1024 * 1024
    try:
        info_fn = getattr(pltpu, "get_tpu_info", None)
        cap = getattr(info_fn(), "vmem_capacity_bytes", default) if info_fn else default
    except Exception:
        cap = default
    return max(int(cap) * 3 // 4, 32 * 1024 * 1024)


def _pick_tile_h(N, H, W, ci, cp, weight_bytes, budget_bytes, min_parallel=4):
    """Largest divisor of H whose per-step working set fits the VMEM budget,
    preferring tiles that leave >= min_parallel grid steps (megacore)."""
    # rough live bytes / output row: f32 acc + double-buffered bf16 out (8*cp),
    # double-buffered bf16 in + f32 transform + bf16 im2col (~14*ci)
    per_row = W * (8 * cp + 14 * ci)
    avail = max(budget_bytes - 2 * weight_bytes - (4 << 20), per_row)
    divisors = [d for d in range(1, H + 1) if H % d == 0]
    fitting = [d for d in divisors if d * per_row <= avail] or [1]
    parallel_ok = [d for d in fitting if N * (H // d) >= min_parallel]
    return max(parallel_ok) if parallel_ok else max(fitting)


def _conv3x3_stats_kernel(xm_ref, xt_ref, xb_ref, sc_ref, sh_ref, w_ref,
                          y_ref, st_ref, *, apply_affine: bool, relu_in: bool,
                          fold_all_taps: bool):
    """One (batch, row-tile) grid step of a 3x3 'same' convolution.

    xm_ref: (tile_h, W, Ci) bf16 main rows of the input tile
    xt_ref/xb_ref: (1, W, Ci) halo rows above/below (clamped; masked at borders)
    sc_ref/sh_ref: (1, Ci)    folded input affine (previous BN) [+ optional ReLU]
    w_ref:  (1, 9*Ci, Cp) or (3, 3*Ci, Cp) packed bf16 weights (Cp lane-padded)
    y_ref:  (tile_h, W, Cp)   conv output tile (pre-BN), bf16
    st_ref: (2, Cp)           per-tile partial [sum, sum-of-squares] (f32)
    """
    tile_h, W, Ci = xm_ref.shape
    Cp = y_ref.shape[-1]
    t = pl.program_id(1)
    num_t = pl.num_programs(1)

    if apply_affine:
        scale = sc_ref[...].reshape(1, 1, Ci)
        shift = sh_ref[...].reshape(1, 1, Ci)

        def transform(v):
            v = v.astype(jnp.float32) * scale + shift
            if relu_in:
                v = jnp.maximum(v, 0.0)
            return v.astype(jnp.bfloat16)
    else:
        # identity affine (pass 1): feed bf16 straight through, no f32 round trip
        def transform(v):
            return v

    mid = transform(xm_ref[...])                                 # (tile_h, W, Ci)
    top = transform(xt_ref[...])                                 # (1, W, Ci)
    bot = transform(xb_ref[...])
    zero_row = jnp.zeros_like(top)
    # zero the halo rows at the image border so the conv sees true zero padding
    # of the (post-BN/ReLU) feature map.
    top = jnp.where(t == 0, zero_row, top)
    bot = jnp.where(t == num_t - 1, zero_row, bot)

    # assemble halo'd tile, zero-pad W, fold the 3 W-taps into the lane dim
    rows = jnp.concatenate([top, mid, bot], axis=0)              # (tile_h+2, W, Ci)
    zcol = jnp.zeros((tile_h + 2, 1, Ci), rows.dtype)
    rp = jnp.concatenate([zcol, rows, zcol], axis=1)             # (tile_h+2, W+2, Ci)
    unf = jnp.concatenate(
        [rp[:, 0:W, :], rp[:, 1:W + 1, :], rp[:, 2:W + 2, :]],
        axis=-1)                                                 # (tile_h+2, W, 3*Ci)

    M = tile_h * W
    if fold_all_taps:
        # small Cin: one K = 9*Ci contraction (single MXU matmul)
        lhs9 = jnp.concatenate(
            [unf[0:tile_h], unf[1:tile_h + 1], unf[2:tile_h + 2]],
            axis=-1).reshape(M, 9 * Ci)
        acc = jnp.dot(lhs9, w_ref[0], preferred_element_type=jnp.float32)
    else:
        # large Cin: 3 H-tap matmuls (aligned sublane shifts, K = 3*Ci each)
        acc = jnp.zeros((M, Cp), jnp.float32)
        for dh in range(3):
            lhs = unf[dh:dh + tile_h].reshape(M, 3 * Ci)
            acc = acc + jnp.dot(lhs, w_ref[dh],
                                preferred_element_type=jnp.float32)

    # partial BatchNorm statistics from the exact f32 accumulator, reduced on the
    # MXU (ones-row matmuls) so the epilogue stays off the VALU/XLU critical path.
    ones_row = jnp.ones((1, M), jnp.float32)
    s1 = jnp.dot(ones_row, acc, preferred_element_type=jnp.float32)
    s2 = jnp.dot(ones_row, acc * acc, preferred_element_type=jnp.float32)
    st_ref[...] = jnp.concatenate([s1, s2], axis=0)

    y_ref[...] = acc.reshape(tile_h, W, Cp).astype(y_ref.dtype)


def _bn_relu_kernel(y_ref, sc_ref, sh_ref, o_ref):
    C = y_ref.shape[-1]
    scale = sc_ref[...].reshape(1, 1, C)
    shift = sh_ref[...].reshape(1, 1, C)
    v = y_ref[...].astype(jnp.float32) * scale + shift
    o_ref[...] = jnp.maximum(v, 0.0).astype(o_ref.dtype)


def _conv_pass(x_nhwc, w_packed, scale_in, shift_in, cp, tile_h, *,
               apply_affine, relu_in, out_dtype, vmem_limit_bytes):
    N, H, W, Ci = x_nhwc.shape
    num_t = H // tile_h
    kt, kk, _ = w_packed.shape
    fold_all_taps = (kt == 1)

    kernel = functools.partial(
        _conv3x3_stats_kernel, apply_affine=apply_affine, relu_in=relu_in,
        fold_all_taps=fold_all_taps)
    return pl.pallas_call(
        kernel,
        grid=(N, num_t),
        in_specs=[
            # main rows of the tile (auto double-buffered)
            pl.BlockSpec((None, tile_h, W, Ci), lambda n, t: (n, t, 0, 0)),
            # 1-row halo above / below (index clamped; value masked in-kernel)
            pl.BlockSpec((None, 1, W, Ci),
                         lambda n, t: (n, jnp.maximum(t * tile_h - 1, 0), 0, 0)),
            pl.BlockSpec((None, 1, W, Ci),
                         lambda n, t: (n, jnp.minimum((t + 1) * tile_h, H - 1), 0, 0)),
            pl.BlockSpec((1, Ci), lambda n, t: (0, 0)),
            pl.BlockSpec((1, Ci), lambda n, t: (0, 0)),
            pl.BlockSpec((kt, kk, cp), lambda n, t: (0, 0, 0)),
        ],
        out_shape=(
            jax.ShapeDtypeStruct((N, H, W, cp), out_dtype),
            jax.ShapeDtypeStruct((N, num_t, 2, cp), jnp.float32),
        ),
        out_specs=(
            pl.BlockSpec((None, tile_h, W, cp), lambda n, t: (n, t, 0, 0)),
            pl.BlockSpec((None, None, 2, cp), lambda n, t: (n, t, 0, 0)),
        ),
        compiler_params=pltpu.CompilerParams(
            dimension_semantics=("parallel", "parallel"),
            vmem_limit_bytes=vmem_limit_bytes),
    )(x_nhwc, x_nhwc, x_nhwc, scale_in, shift_in, w_packed)


def _prep_weight(w_oihw, ci_pad, cp, fold_all_taps):
    """(Cout, Cin, 3, 3) OIHW -> packed bf16 weights with zero channel padding.

    fold_all_taps: (1, 9*ci_pad, cp); else (3, 3*ci_pad, cp).
    """
    cout, cin = w_oihw.shape[0], w_oihw.shape[1]
    wt = jnp.transpose(w_oihw, (2, 3, 1, 0))                  # (kh, kw, Cin, Cout)
    wt = jnp.pad(wt, ((0, 0), (0, 0), (0, ci_pad - cin), (0, cp - cout)))
    if fold_all_taps:
        return wt.reshape(1, 9 * ci_pad, cp).astype(jnp.bfloat16)
    return wt.reshape(3, 3 * ci_pad, cp).astype(jnp.bfloat16)


def _bn_affine(partial_stats, gamma, beta, count, cp):
    """Global training-mode BN (biased variance) folded into (scale, shift)."""
    s = jnp.sum(partial_stats.astype(jnp.float32), axis=(0, 1))   # (2, cp)
    mean = s[0] / count
    var = jnp.maximum(s[1] / count - mean * mean, 0.0)
    inv = lax.rsqrt(var + EPS)
    g = jnp.pad(gamma.astype(jnp.float32), (0, cp - gamma.shape[0]))
    b = jnp.pad(beta.astype(jnp.float32), (0, cp - beta.shape[0]))
    scale = g * inv
    shift = b - mean * scale
    return scale.reshape(1, cp), shift.reshape(1, cp)


def double_conv_nhwc(x_nhwc, w1, g1, b1, w2, g2, b2, *, tile_h=None,
                     fuse_output_affine=False, out_dtype=jnp.float32,
                     keep_channel_pad=False):
    """NHWC DoubleConv: (Conv3x3(no bias) -> BatchNorm2d(batch stats) -> ReLU) x 2.

    x_nhwc: (N, H, W, Cin); w1: (Cout, Cin, 3, 3); w2: (Cout, Cout, 3, 3);
    g*, b*: (Cout,).
    If fuse_output_affine: returns (y2_bf16 (N,H,W,Cp), scale2 (1,Cp), shift2 (1,Cp))
    so the consumer folds BN2+ReLU (saves two full-tensor HBM passes).
    Else returns (N, H, W, Cout[+pad]) in out_dtype.
    """
    N, H, W, Cin = x_nhwc.shape
    Cout = w1.shape[0]
    Cp = _round_up(Cout, LANE)

    vmem_limit = _vmem_budget()
    fold1 = Cin <= 32                      # stem / small-Cin: single 9*Cin contraction
    w1p = _prep_weight(w1, Cin, Cp, fold1)     # (1, 9*Cin, Cp) or (3, 3*Cin, Cp)
    w2p = _prep_weight(w2, Cp, Cp, False)      # (3, 3*Cp, Cp)
    weight_bytes = max(int(w1p.size) * 2, int(w2p.size) * 2)

    if tile_h is None:
        tile_h = _pick_tile_h(N, H, W, Cp, Cp, weight_bytes, vmem_limit)
    assert H % tile_h == 0, "tile_h must divide H"
    num_t = H // tile_h
    count = float(N * H * W)

    x = x_nhwc.astype(jnp.bfloat16)
    ident = jnp.zeros((1, Cin), jnp.float32)   # ignored (apply_affine=False)

    # pass 1: conv1 (+ per-tile partial BN1 stats); y1 stored bf16
    y1, ps1 = _conv_pass(x, w1p, ident, ident, Cp, tile_h,
                         apply_affine=False, relu_in=False,
                         out_dtype=jnp.bfloat16, vmem_limit_bytes=vmem_limit)
    scale1, shift1 = _bn_affine(ps1, g1, b1, count, Cp)

    # pass 2: BN1 + ReLU folded into conv2's input, conv2 (+ partial BN2 stats)
    y2, ps2 = _conv_pass(y1, w2p, scale1, shift1, Cp, tile_h,
                         apply_affine=True, relu_in=True,
                         out_dtype=jnp.bfloat16, vmem_limit_bytes=vmem_limit)
    scale2, shift2 = _bn_affine(ps2, g2, b2, count, Cp)

    if fuse_output_affine:
        return y2, scale2, shift2

    # pass 3: BN2 + ReLU, lane-dense elementwise (only when not fused downstream)
    out = pl.pallas_call(
        _bn_relu_kernel,
        grid=(N, num_t),
        in_specs=[
            pl.BlockSpec((None, tile_h, W, Cp), lambda n, t: (n, t, 0, 0)),
            pl.BlockSpec((1, Cp), lambda n, t: (0, 0)),
            pl.BlockSpec((1, Cp), lambda n, t: (0, 0)),
        ],
        out_shape=jax.ShapeDtypeStruct((N, H, W, Cp), out_dtype),
        out_specs=pl.BlockSpec((None, tile_h, W, Cp), lambda n, t: (n, t, 0, 0)),
        compiler_params=pltpu.CompilerParams(
            dimension_semantics=("parallel", "parallel"),
            vmem_limit_bytes=vmem_limit),
    )(y2, scale2, shift2)

    if keep_channel_pad:
        return out              # padded channels are exactly zero (zero-padded BN)
    return out[..., :Cout]


def double_conv(x_nchw, w1, g1, b1, w2, g2, b2, *, tile_h=None):
    """NCHW boundary wrapper matching the PyTorch module interface."""
    x = jnp.transpose(x_nchw, (0, 2, 3, 1))
    out = double_conv_nhwc(x, w1, g1, b1, w2, g2, b2, tile_h=tile_h)
    return jnp.transpose(out, (0, 3, 1, 2))


def _reference_double_conv(x, w1, g1, b1, w2, g2, b2):
    """Pure-JAX reference (NCHW), mirroring PyTorch training-mode forward with the
    kernel's precision policy (bf16 matmul operands, f32 accumulation, f32 BN)."""
    def block(x, w, g, b):
        y = lax.conv_general_dilated(
            x.astype(jnp.bfloat16), w.astype(jnp.bfloat16),
            window_strides=(1, 1), padding=((1, 1), (1, 1)),
            dimension_numbers=("NCHW", "OIHW", "NCHW"),
            preferred_element_type=jnp.float32)
        mean = jnp.mean(y, axis=(0, 2, 3), keepdims=True)
        var = jnp.mean((y - mean) ** 2, axis=(0, 2, 3), keepdims=True)
        yn = (y - mean) * lax.rsqrt(var + EPS)
        return jnp.maximum(yn * g.reshape(1, -1, 1, 1) + b.reshape(1, -1, 1, 1), 0.0)
    return block(block(x, w1, g1, b1), w2, g2, b2)


if __name__ == "__main__":
    N, Cin, Cout, H, W = 2, 4, 8, 16, 16

    key = jax.random.PRNGKey(0)
    kx, kw1, kw2, kg1, kb1, kg2, kb2 = jax.random.split(key, 7)

    x = jax.random.normal(kx, (N, Cin, H, W), dtype=jnp.float32)
    w1 = jax.random.normal(kw1, (Cout, Cin, 3, 3), jnp.float32) * (2.0 / (Cin * 9)) ** 0.5
    w2 = jax.random.normal(kw2, (Cout, Cout, 3, 3), jnp.float32) * (2.0 / (Cout * 9)) ** 0.5
    g1 = 1.0 + 0.1 * jax.random.normal(kg1, (Cout,), jnp.float32)
    b1 = 0.1 * jax.random.normal(kb1, (Cout,), jnp.float32)
    g2 = 1.0 + 0.1 * jax.random.normal(kg2, (Cout,), jnp.float32)
    b2 = 0.1 * jax.random.normal(kb2, (Cout,), jnp.float32)

    # tile_h=8 -> 2 row-tiles per image: exercises halo/boundary masking, the
    # cross-tile BatchNorm partial-stat reduction, the single-dot (Cin=4) path in
    # pass 1 and the 3-tap (Cin=128-padded) path in pass 2.
    fn = jax.jit(functools.partial(double_conv, tile_h=8))
    out = jax.block_until_ready(fn(x, w1, g1, b1, w2, g2, b2))

    ref = _reference_double_conv(x, w1, g1, b1, w2, g2, b2)
    if out.shape != ref.shape:
        raise AssertionError(f"shape mismatch: {out.shape} vs {ref.shape}")
    # bf16 inter-pass intermediates (y1/y2) introduce ~bf16-level error vs the f32
    # reference; 2e-2 tolerances leave comfortable margin.
    if not bool(jnp.allclose(out, ref, atol=2e-2, rtol=2e-2)):
        raise AssertionError("Pallas DoubleConv does not match JAX reference")

    print("KERNEL_OK")
</pallas_src>

<mosaic_0001>
module attributes {stable_mosaic.version = 11 : i64} {
  func.func @_conv3x3_stats_kernel(%arg0: i32, %arg1: i32, %arg2: memref<1x8x16x4xbf16, #tpu.memory_space<vmem>>, %arg3: memref<1x1x16x4xbf16, #tpu.memory_space<vmem>>, %arg4: memref<1x1x16x4xbf16, #tpu.memory_space<vmem>>, %arg5: memref<1x4xf32, #tpu.memory_space<vmem>>, %arg6: memref<1x4xf32, #tpu.memory_space<vmem>>, %arg7: memref<1x36x128xbf16, #tpu.memory_space<vmem>>, %arg8: memref<1x8x16x128xbf16, #tpu.memory_space<vmem>>, %arg9: memref<1x1x2x128xf32, #tpu.memory_space<vmem>>) attributes {dimension_semantics = [#tpu.dimension_semantics<parallel>, #tpu.dimension_semantics<parallel>], iteration_bounds = array<i64: 2, 2>, scalar_prefetch = 0 : i64, scratch_operands = 0 : i64, tpu.core_type = #tpu.core_type<tc>, window_params = [{transform_indices = @transform_0, window_bounds = array<i64: 1, 8, 16, 4>}, {transform_indices = @transform_1, window_bounds = array<i64: 1, 1, 16, 4>}, {transform_indices = @transform_2, window_bounds = array<i64: 1, 1, 16, 4>}, {pipeline_mode = #tpu.pipeline_mode<synchronous>, transform_indices = @transform_3, window_bounds = array<i64: 1, 4>}, {pipeline_mode = #tpu.pipeline_mode<synchronous>, transform_indices = @transform_4, window_bounds = array<i64: 1, 4>}, {pipeline_mode = #tpu.pipeline_mode<synchronous>, transform_indices = @transform_5, window_bounds = array<i64: 1, 36, 128>}, {transform_indices = @transform_6, window_bounds = array<i64: 1, 8, 16, 128>}, {transform_indices = @transform_7, window_bounds = array<i64: 1, 1, 2, 128>}]} {
    %c0 = arith.constant 0 : index
    %c0_0 = arith.constant 0 : index
    %c0_1 = arith.constant 0 : index
    %c0_2 = arith.constant 0 : index
    %0 = vector.load %arg2[%c0, %c0_0, %c0_1, %c0_2] : memref<1x8x16x4xbf16, #tpu.memory_space<vmem>>, vector<1x8x16x4xbf16>
    %1 = vector.shape_cast %0 : vector<1x8x16x4xbf16> to vector<8x16x4xbf16>
    %c0_3 = arith.constant 0 : index
    %c0_4 = arith.constant 0 : index
    %c0_5 = arith.constant 0 : index
    %c0_6 = arith.constant 0 : index
    %2 = vector.load %arg3[%c0_3, %c0_4, %c0_5, %c0_6] : memref<1x1x16x4xbf16, #tpu.memory_space<vmem>>, vector<1x1x16x4xbf16>
    %3 = vector.shape_cast %2 : vector<1x1x16x4xbf16> to vector<1x16x4xbf16>
    %c0_7 = arith.constant 0 : index
    %c0_8 = arith.constant 0 : index
    %c0_9 = arith.constant 0 : index
    %c0_10 = arith.constant 0 : index
    %4 = vector.load %arg4[%c0_7, %c0_8, %c0_9, %c0_10] : memref<1x1x16x4xbf16, #tpu.memory_space<vmem>>, vector<1x1x16x4xbf16>
    %5 = vector.shape_cast %4 : vector<1x1x16x4xbf16> to vector<1x16x4xbf16>
    %cst = arith.constant 0.000000e+00 : bf16
    %6 = vector.broadcast %cst : bf16 to vector<1x16x4xbf16>
    %c0_i32 = arith.constant 0 : i32
    %7 = arith.cmpi eq, %arg1, %c0_i32 : i32
    %8 = arith.select %7, %6, %3 : vector<1x16x4xbf16>
    %c1_i32 = arith.constant 1 : i32
    %9 = arith.cmpi eq, %arg1, %c1_i32 : i32
    %10 = arith.select %9, %6, %5 : vector<1x16x4xbf16>
    %11 = tpu.concatenate %8, %1, %10 in 0 : vector<1x16x4xbf16>, vector<8x16x4xbf16>, vector<1x16x4xbf16> -> vector<10x16x4xbf16>
    %cst_11 = arith.constant 0.000000e+00 : bf16
    %12 = vector.broadcast %cst_11 : bf16 to vector<10x1x4xbf16>
    %13 = tpu.concatenate %12, %11, %12 in 1 : vector<10x1x4xbf16>, vector<10x16x4xbf16>, vector<10x1x4xbf16> -> vector<10x18x4xbf16>
    %14 = vector.extract_strided_slice %13 {offsets = [0, 0, 0], sizes = [10, 16, 4], strides = [1, 1, 1]} : vector<10x18x4xbf16> to vector<10x16x4xbf16>
    %15 = vector.extract_strided_slice %13 {offsets = [0, 1, 0], sizes = [10, 16, 4], strides = [1, 1, 1]} : vector<10x18x4xbf16> to vector<10x16x4xbf16>
    %16 = vector.extract_strided_slice %13 {offsets = [0, 2, 0], sizes = [10, 16, 4], strides = [1, 1, 1]} : vector<10x18x4xbf16> to vector<10x16x4xbf16>
    %17 = tpu.concatenate %14, %15, %16 in 2 : vector<10x16x4xbf16>, vector<10x16x4xbf16>, vector<10x16x4xbf16> -> vector<10x16x12xbf16>
    %18 = vector.extract_strided_slice %17 {offsets = [0, 0, 0], sizes = [8, 16, 12], strides = [1, 1, 1]} : vector<10x16x12xbf16> to vector<8x16x12xbf16>
    %19 = vector.extract_strided_slice %17 {offsets = [1, 0, 0], sizes = [8, 16, 12], strides = [1, 1, 1]} : vector<10x16x12xbf16> to vector<8x16x12xbf16>
    %20 = vector.extract_strided_slice %17 {offsets = [2, 0, 0], sizes = [8, 16, 12], strides = [1, 1, 1]} : vector<10x16x12xbf16> to vector<8x16x12xbf16>
    %21 = tpu.concatenate %18, %19, %20 in 2 : vector<8x16x12xbf16>, vector<8x16x12xbf16>, vector<8x16x12xbf16> -> vector<8x16x36xbf16>
    %22 = vector.shape_cast %21 : vector<8x16x36xbf16> to vector<128x36xbf16>
    %c0_12 = arith.constant 0 : index
    %c0_13 = arith.constant 0 : index
    %c0_14 = arith.constant 0 : index
    %23 = vector.load %arg7[%c0_12, %c0_13, %c0_14] : memref<1x36x128xbf16, #tpu.memory_space<vmem>>, vector<1x36x128xbf16>
    %24 = vector.shape_cast %23 : vector<1x36x128xbf16> to vector<36x128xbf16>
    %cst_15 = arith.constant dense<0.000000e+00> : vector<128x128xf32>
    %25 = tpu.matmul %22, %24, %cst_15 {dimension_numbers = #tpu.dot_dimension_numbers<[1], [0], [0], [1], [0, 0, 1, 1], [], []>} : vector<128x36xbf16>, vector<36x128xbf16>, vector<128x128xf32> -> vector<128x128xf32>
    %cst_16 = arith.constant 1.000000e+00 : f32
    %26 = vector.broadcast %cst_16 : f32 to vector<1x128xf32>
    %cst_17 = arith.constant dense<0.000000e+00> : vector<1x128xf32>
    %27 = tpu.matmul %26, %25, %cst_17 {dimension_numbers = #tpu.dot_dimension_numbers<[1], [0], [0], [1], [0, 0, 1, 1], [], []>} : vector<1x128xf32>, vector<128x128xf32>, vector<1x128xf32> -> vector<1x128xf32>
    %28 = arith.mulf %25, %25 : vector<128x128xf32>
    %cst_18 = arith.constant dense<0.000000e+00> : vector<1x128xf32>
    %29 = tpu.matmul %26, %28, %cst_18 {dimension_numbers = #tpu.dot_dimension_numbers<[1], [0], [0], [1], [0, 0, 1, 1], [], []>} : vector<1x128xf32>, vector<128x128xf32>, vector<1x128xf32> -> vector<1x128xf32>
    %30 = tpu.concatenate %27, %29 in 0 : vector<1x128xf32>, vector<1x128xf32> -> vector<2x128xf32>
    %c0_19 = arith.constant 0 : index
    %c0_20 = arith.constant 0 : index
    %c0_21 = arith.constant 0 : index
    %c0_22 = arith.constant 0 : index
    %31 = vector.load %arg9[%c0_19, %c0_20, %c0_21, %c0_22] : memref<1x1x2x128xf32, #tpu.memory_space<vmem>>, vector<1x1x2x128xf32>
    %32 = vector.shape_cast %31 : vector<1x1x2x128xf32> to vector<2x128xf32>
    %33 = vector.shape_cast %30 : vector<2x128xf32> to vector<1x1x2x128xf32>
    tpu.vector_store %arg9[%c0_19, %c0_20, %c0_21, %c0_22], %33 {strides = array<i32>} : memref<1x1x2x128xf32, #tpu.memory_space<vmem>>, vector<1x1x2x128xf32>,
    %34 = vector.shape_cast %25 : vector<128x128xf32> to vector<8x16x128xf32>
    %35 = arith.truncf %34 : vector<8x16x128xf32> to vector<8x16x128xbf16>
    %c0_23 = arith.constant 0 : index
    %c0_24 = arith.constant 0 : index
    %c0_25 = arith.constant 0 : index
    %c0_26 = arith.constant 0 : index
    %36 = vector.load %arg8[%c0_23, %c0_24, %c0_25, %c0_26] : memref<1x8x16x128xbf16, #tpu.memory_space<vmem>>, vector<1x8x16x128xbf16>
    %37 = vector.shape_cast %36 : vector<1x8x16x128xbf16> to vector<8x16x128xbf16>
    %38 = vector.shape_cast %35 : vector<8x16x128xbf16> to vector<1x8x16x128xbf16>
    tpu.vector_store %arg8[%c0_23, %c0_24, %c0_25, %c0_26], %38 {strides = array<i32>} : memref<1x8x16x128xbf16, #tpu.memory_space<vmem>>, vector<1x8x16x128xbf16>,
    return
  }
  func.func @transform_0(%arg0: i32, %arg1: i32) -> (i32, i32, i32, i32) {
    %c0_i32 = arith.constant 0 : i32
    %c0_i32_0 = arith.constant 0 : i32
    %c0_i32_1 = arith.constant 0 : i32
    return %arg0, %arg1, %c0_i32, %c0_i32_0 : i32, i32, i32, i32
  }
  func.func @transform_1(%arg0: i32, %arg1: i32) -> (i32, i32, i32, i32) {
    %c8_i32 = arith.constant 8 : i32
    %0 = arith.muli %arg1, %c8_i32 : i32
    %c1_i32 = arith.constant 1 : i32
    %1 = arith.subi %0, %c1_i32 : i32
    %c0_i32 = arith.constant 0 : i32
    %2 = arith.maxsi %1, %c0_i32 : i32
    %c0_i32_0 = arith.constant 0 : i32
    %c0_i32_1 = arith.constant 0 : i32
    %c0_i32_2 = arith.constant 0 : i32
    return %arg0, %2, %c0_i32_0, %c0_i32_1 : i32, i32, i32, i32
  }
  func.func @transform_2(%arg0: i32, %arg1: i32) -> (i32, i32, i32, i32) {
    %c1_i32 = arith.constant 1 : i32
    %0 = arith.addi %arg1, %c1_i32 : i32
    %c8_i32 = arith.constant 8 : i32
    %1 = arith.muli %0, %c8_i32 : i32
    %c15_i32 = arith.constant 15 : i32
    %2 = arith.minsi %1, %c15_i32 : i32
    %c0_i32 = arith.constant 0 : i32
    %c0_i32_0 = arith.constant 0 : i32
    %c0_i32_1 = arith.constant 0 : i32
    return %arg0, %2, %c0_i32, %c0_i32_0 : i32, i32, i32, i32
  }
  func.func @transform_3(%arg0: i32, %arg1: i32) -> (i32, i32) {
    %c0_i32 = arith.constant 0 : i32
    %c0_i32_0 = arith.constant 0 : i32
    %c0_i32_1 = arith.constant 0 : i32
    return %c0_i32, %c0_i32_0 : i32, i32
  }
  func.func @transform_4(%arg0: i32, %arg1: i32) -> (i32, i32) {
    %c0_i32 = arith.constant 0 : i32
    %c0_i32_0 = arith.constant 0 : i32
    %c0_i32_1 = arith.constant 0 : i32
    return %c0_i32, %c0_i32_0 : i32, i32
  }
  func.func @transform_5(%arg0: i32, %arg1: i32) -> (i32, i32, i32) {
    %c0_i32 = arith.constant 0 : i32
    %c0_i32_0 = arith.constant 0 : i32
    %c0_i32_1 = arith.constant 0 : i32
    %c0_i32_2 = arith.constant 0 : i32
    return %c0_i32, %c0_i32_0, %c0_i32_1 : i32, i32, i32
  }
  func.func @transform_6(%arg0: i32, %arg1: i32) -> (i32, i32, i32, i32) {
    %c0_i32 = arith.constant 0 : i32
    %c0_i32_0 = arith.constant 0 : i32
    %c0_i32_1 = arith.constant 0 : i32
    return %arg0, %arg1, %c0_i32, %c0_i32_0 : i32, i32, i32, i32
  }
  func.func @transform_7(%arg0: i32, %arg1: i32) -> (i32, i32, i32, i32) {
    %c0_i32 = arith.constant 0 : i32
    %c0_i32_0 = arith.constant 0 : i32
    %c0_i32_1 = arith.constant 0 : i32
    return %arg0, %arg1, %c0_i32, %c0_i32_0 : i32, i32, i32, i32
  }
}

module attributes {stable_mosaic.version = 11 : i64} {
  func.func @_conv3x3_stats_kernel(%arg0: i32, %arg1: i32, %arg2: memref<1x8x16x128xbf16, #tpu.memory_space<vmem>>, %arg3: memref<1x1x16x128xbf16, #tpu.memory_space<vmem>>, %arg4: memref<1x1x16x128xbf16, #tpu.memory_space<vmem>>, %arg5: memref<1x128xf32, #tpu.memory_space<vmem>>, %arg6: memref<1x128xf32, #tpu.memory_space<vmem>>, %arg7: memref<3x384x128xbf16, #tpu.memory_space<vmem>>, %arg8: memref<1x8x16x128xbf16, #tpu.memory_space<vmem>>, %arg9: memref<1x1x2x128xf32, #tpu.memory_space<vmem>>) attributes {dimension_semantics = [#tpu.dimension_semantics<parallel>, #tpu.dimension_semantics<parallel>], iteration_bounds = array<i64: 2, 2>, scalar_prefetch = 0 : i64, scratch_operands = 0 : i64, tpu.core_type = #tpu.core_type<tc>, window_params = [{transform_indices = @transform_0, window_bounds = array<i64: 1, 8, 16, 128>}, {transform_indices = @transform_1, window_bounds = array<i64: 1, 1, 16, 128>}, {transform_indices = @transform_2, window_bounds = array<i64: 1, 1, 16, 128>}, {pipeline_mode = #tpu.pipeline_mode<synchronous>, transform_indices = @transform_3, window_bounds = array<i64: 1, 128>}, {pipeline_mode = #tpu.pipeline_mode<synchronous>, transform_indices = @transform_4, window_bounds = array<i64: 1, 128>}, {pipeline_mode = #tpu.pipeline_mode<synchronous>, transform_indices = @transform_5, window_bounds = array<i64: 3, 384, 128>}, {transform_indices = @transform_6, window_bounds = array<i64: 1, 8, 16, 128>}, {transform_indices = @transform_7, window_bounds = array<i64: 1, 1, 2, 128>}]} {
    %c0 = arith.constant 0 : index
    %c0_0 = arith.constant 0 : index
    %0 = vector.load %arg5[%c0, %c0_0] : memref<1x128xf32, #tpu.memory_space<vmem>>, vector<1x128xf32>
    %1 = vector.shape_cast %0 : vector<1x128xf32> to vector<1x1x128xf32>
    %c0_1 = arith.constant 0 : index
    %c0_2 = arith.constant 0 : index
    %2 = vector.load %arg6[%c0_1, %c0_2] : memref<1x128xf32, #tpu.memory_space<vmem>>, vector<1x128xf32>
    %3 = vector.shape_cast %2 : vector<1x128xf32> to vector<1x1x128xf32>
    %c0_3 = arith.constant 0 : index
    %c0_4 = arith.constant 0 : index
    %c0_5 = arith.constant 0 : index
    %c0_6 = arith.constant 0 : index
    %4 = vector.load %arg2[%c0_3, %c0_4, %c0_5, %c0_6] : memref<1x8x16x128xbf16, #tpu.memory_space<vmem>>, vector<1x8x16x128xbf16>
    %5 = vector.shape_cast %4 : vector<1x8x16x128xbf16> to vector<8x16x128xbf16>
    %6 = arith.extf %5 : vector<8x16x128xbf16> to vector<8x16x128xf32>
    %7 = vector.broadcast %1 : vector<1x1x128xf32> to vector<8x16x128xf32>
    %8 = arith.mulf %6, %7 : vector<8x16x128xf32>
    %9 = vector.broadcast %3 : vector<1x1x128xf32> to vector<8x16x128xf32>
    %10 = arith.addf %8, %9 : vector<8x16x128xf32>
    %cst = arith.constant 0.000000e+00 : f32
    %11 = vector.broadcast %cst : f32 to vector<8x16x128xf32>
    %12 = arith.maximumf %10, %11 : vector<8x16x128xf32>
    %13 = arith.truncf %12 : vector<8x16x128xf32> to vector<8x16x128xbf16>
    %c0_7 = arith.constant 0 : index
    %c0_8 = arith.constant 0 : index
    %c0_9 = arith.constant 0 : index
    %c0_10 = arith.constant 0 : index
    %14 = vector.load %arg3[%c0_7, %c0_8, %c0_9, %c0_10] : memref<1x1x16x128xbf16, #tpu.memory_space<vmem>>, vector<1x1x16x128xbf16>
    %15 = vector.shape_cast %14 : vector<1x1x16x128xbf16> to vector<1x16x128xbf16>
    %16 = arith.extf %15 : vector<1x16x128xbf16> to vector<1x16x128xf32>
    %17 = vector.broadcast %1 : vector<1x1x128xf32> to vector<1x16x128xf32>
    %18 = arith.mulf %16, %17 : vector<1x16x128xf32>
    %19 = vector.broadcast %3 : vector<1x1x128xf32> to vector<1x16x128xf32>
    %20 = arith.addf %18, %19 : vector<1x16x128xf32>
    %cst_11 = arith.constant 0.000000e+00 : f32
    %21 = vector.broadcast %cst_11 : f32 to vector<1x16x128xf32>
    %22 = arith.maximumf %20, %21 : vector<1x16x128xf32>
    %23 = arith.truncf %22 : vector<1x16x128xf32> to vector<1x16x128xbf16>
    %c0_12 = arith.constant 0 : index
    %c0_13 = arith.constant 0 : index
    %c0_14 = arith.constant 0 : index
    %c0_15 = arith.constant 0 : index
    %24 = vector.load %arg4[%c0_12, %c0_13, %c0_14, %c0_15] : memref<1x1x16x128xbf16, #tpu.memory_space<vmem>>, vector<1x1x16x128xbf16>
    %25 = vector.shape_cast %24 : vector<1x1x16x128xbf16> to vector<1x16x128xbf16>
    %26 = arith.extf %25 : vector<1x16x128xbf16> to vector<1x16x128xf32>
    %27 = vector.broadcast %1 : vector<1x1x128xf32> to vector<1x16x128xf32>
    %28 = arith.mulf %26, %27 : vector<1x16x128xf32>
    %29 = vector.broadcast %3 : vector<1x1x128xf32> to vector<1x16x128xf32>
    %30 = arith.addf %28, %29 : vector<1x16x128xf32>
    %cst_16 = arith.constant 0.000000e+00 : f32
    %31 = vector.broadcast %cst_16 : f32 to vector<1x16x128xf32>
    %32 = arith.maximumf %30, %31 : vector<1x16x128xf32>
    %33 = arith.truncf %32 : vector<1x16x128xf32> to vector<1x16x128xbf16>
    %cst_17 = arith.constant 0.000000e+00 : bf16
    %34 = vector.broadcast %cst_17 : bf16 to vector<1x16x128xbf16>
    %c0_i32 = arith.constant 0 : i32
    %35 = arith.cmpi eq, %arg1, %c0_i32 : i32
    %36 = arith.select %35, %34, %23 : vector<1x16x128xbf16>
    %c1_i32 = arith.constant 1 : i32
    %37 = arith.cmpi eq, %arg1, %c1_i32 : i32
    %38 = arith.select %37, %34, %33 : vector<1x16x128xbf16>
    %39 = tpu.concatenate %36, %13, %38 in 0 : vector<1x16x128xbf16>, vector<8x16x128xbf16>, vector<1x16x128xbf16> -> vector<10x16x128xbf16>
    %cst_18 = arith.constant 0.000000e+00 : bf16
    %40 = vector.broadcast %cst_18 : bf16 to vector<10x1x128xbf16>
    %41 = tpu.concatenate %40, %39, %40 in 1 : vector<10x1x128xbf16>, vector<10x16x128xbf16>, vector<10x1x128xbf16> -> vector<10x18x128xbf16>
    %42 = vector.extract_strided_slice %41 {offsets = [0, 0, 0], sizes = [10, 16, 128], strides = [1, 1, 1]} : vector<10x18x128xbf16> to vector<10x16x128xbf16>
    %43 = vector.extract_strided_slice %41 {offsets = [0, 1, 0], sizes = [10, 16, 128], strides = [1, 1, 1]} : vector<10x18x128xbf16> to vector<10x16x128xbf16>
    %44 = vector.extract_strided_slice %41 {offsets = [0, 2, 0], sizes = [10, 16, 128], strides = [1, 1, 1]} : vector<10x18x128xbf16> to vector<10x16x128xbf16>
    %45 = tpu.concatenate %42, %43, %44 in 2 : vector<10x16x128xbf16>, vector<10x16x128xbf16>, vector<10x16x128xbf16> -> vector<10x16x384xbf16>
    %cst_19 = arith.constant 0.000000e+00 : f32
    %46 = vector.broadcast %cst_19 : f32 to vector<128x128xf32>
    %47 = vector.extract_strided_slice %45 {offsets = [0, 0, 0], sizes = [8, 16, 384], strides = [1, 1, 1]} : vector<10x16x384xbf16> to vector<8x16x384xbf16>
    %48 = vector.shape_cast %47 : vector<8x16x384xbf16> to vector<128x384xbf16>
    %c0_20 = arith.constant 0 : index
    %c0_21 = arith.constant 0 : index
    %c0_22 = arith.constant 0 : index
    %49 = vector.load %arg7[%c0_20, %c0_21, %c0_22] : memref<3x384x128xbf16, #tpu.memory_space<vmem>>, vector<1x384x128xbf16>
    %50 = vector.shape_cast %49 : vector<1x384x128xbf16> to vector<384x128xbf16>
    %cst_23 = arith.constant dense<0.000000e+00> : vector<128x128xf32>
    %51 = tpu.matmul %48, %50, %cst_23 {dimension_numbers = #tpu.dot_dimension_numbers<[1], [0], [0], [1], [0, 0, 1, 1], [], []>} : vector<128x384xbf16>, vector<384x128xbf16>, vector<128x128xf32> -> vector<128x128xf32>
    %52 = arith.addf %46, %51 : vector<128x128xf32>
    %53 = vector.extract_strided_slice %45 {offsets = [1, 0, 0], sizes = [8, 16, 384], strides = [1, 1, 1]} : vector<10x16x384xbf16> to vector<8x16x384xbf16>
    %54 = vector.shape_cast %53 : vector<8x16x384xbf16> to vector<128x384xbf16>
    %c1 = arith.constant 1 : index
    %c0_24 = arith.constant 0 : index
    %c0_25 = arith.constant 0 : index
    %55 = vector.load %arg7[%c1, %c0_24, %c0_25] : memref<3x384x128xbf16, #tpu.memory_space<vmem>>, vector<1x384x128xbf16>
    %56 = vector.shape_cast %55 : vector<1x384x128xbf16> to vector<384x128xbf16>
    %cst_26 = arith.constant dense<0.000000e+00> : vector<128x128xf32>
    %57 = tpu.matmul %54, %56, %cst_26 {dimension_numbers = #tpu.dot_dimension_numbers<[1], [0], [0], [1], [0, 0, 1, 1], [], []>} : vector<128x384xbf16>, vector<384x128xbf16>, vector<128x128xf32> -> vector<128x128xf32>
    %58 = arith.addf %52, %57 : vector<128x128xf32>
    %59 = vector.extract_strided_slice %45 {offsets = [2, 0, 0], sizes = [8, 16, 384], strides = [1, 1, 1]} : vector<10x16x384xbf16> to vector<8x16x384xbf16>
    %60 = vector.shape_cast %59 : vector<8x16x384xbf16> to vector<128x384xbf16>
    %c2 = arith.constant 2 : index
    %c0_27 = arith.constant 0 : index
    %c0_28 = arith.constant 0 : index
    %61 = vector.load %arg7[%c2, %c0_27, %c0_28] : memref<3x384x128xbf16, #tpu.memory_space<vmem>>, vector<1x384x128xbf16>
    %62 = vector.shape_cast %61 : vector<1x384x128xbf16> to vector<384x128xbf16>
    %cst_29 = arith.constant dense<0.000000e+00> : vector<128x128xf32>
    %63 = tpu.matmul %60, %62, %cst_29 {dimension_numbers = #tpu.dot_dimension_numbers<[1], [0], [0], [1], [0, 0, 1, 1], [], []>} : vector<128x384xbf16>, vector<384x128xbf16>, vector<128x128xf32> -> vector<128x128xf32>
    %64 = arith.addf %58, %63 : vector<128x128xf32>
    %cst_30 = arith.constant 1.000000e+00 : f32
    %65 = vector.broadcast %cst_30 : f32 to vector<1x128xf32>
    %cst_31 = arith.constant dense<0.000000e+00> : vector<1x128xf32>
    %66 = tpu.matmul %65, %64, %cst_31 {dimension_numbers = #tpu.dot_dimension_numbers<[1], [0], [0], [1], [0, 0, 1, 1], [], []>} : vector<1x128xf32>, vector<128x128xf32>, vector<1x128xf32> -> vector<1x128xf32>
    %67 = arith.mulf %64, %64 : vector<128x128xf32>
    %cst_32 = arith.constant dense<0.000000e+00> : vector<1x128xf32>
    %68 = tpu.matmul %65, %67, %cst_32 {dimension_numbers = #tpu.dot_dimension_numbers<[1], [0], [0], [1], [0, 0, 1, 1], [], []>} : vector<1x128xf32>, vector<128x128xf32>, vector<1x128xf32> -> vector<1x128xf32>
    %69 = tpu.concatenate %66, %68 in 0 : vector<1x128xf32>, vector<1x128xf32> -> vector<2x128xf32>
    %c0_33 = arith.constant 0 : index
    %c0_34 = arith.constant 0 : index
    %c0_35 = arith.constant 0 : index
    %c0_36 = arith.constant 0 : index
    %70 = vector.load %arg9[%c0_33, %c0_34, %c0_35, %c0_36] : memref<1x1x2x128xf32, #tpu.memory_space<vmem>>, vector<1x1x2x128xf32>
    %71 = vector.shape_cast %70 : vector<1x1x2x128xf32> to vector<2x128xf32>
    %72 = vector.shape_cast %69 : vector<2x128xf32> to vector<1x1x2x128xf32>
    tpu.vector_store %arg9[%c0_33, %c0_34, %c0_35, %c0_36], %72 {strides = array<i32>} : memref<1x1x2x128xf32, #tpu.memory_space<vmem>>, vector<1x1x2x128xf32>,
    %73 = vector.shape_cast %64 : vector<128x128xf32> to vector<8x16x128xf32>
    %74 = arith.truncf %73 : vector<8x16x128xf32> to vector<8x16x128xbf16>
    %c0_37 = arith.constant 0 : index
    %c0_38 = arith.constant 0 : index
    %c0_39 = arith.constant 0 : index
    %c0_40 = arith.constant 0 : index
    %75 = vector.load %arg8[%c0_37, %c0_38, %c0_39, %c0_40] : memref<1x8x16x128xbf16, #tpu.memory_space<vmem>>, vector<1x8x16x128xbf16>
    %76 = vector.shape_cast %75 : vector<1x8x16x128xbf16> to vector<8x16x128xbf16>
    %77 = vector.shape_cast %74 : vector<8x16x128xbf16> to vector<1x8x16x128xbf16>
    tpu.vector_store %arg8[%c0_37, %c0_38, %c0_39, %c0_40], %77 {strides = array<i32>} : memref<1x8x16x128xbf16, #tpu.memory_space<vmem>>, vector<1x8x16x128xbf16>,
    return
  }
  func.func @transform_0(%arg0: i32, %arg1: i32) -> (i32, i32, i32, i32) {
    %c0_i32 = arith.constant 0 : i32
    %c0_i32_0 = arith.constant 0 : i32
    %c0_i32_1 = arith.constant 0 : i32
    return %arg0, %arg1, %c0_i32, %c0_i32_0 : i32, i32, i32, i32
  }
  func.func @transform_1(%arg0: i32, %arg1: i32) -> (i32, i32, i32, i32) {
    %c8_i32 = arith.constant 8 : i32
    %0 = arith.muli %arg1, %c8_i32 : i32
    %c1_i32 = arith.constant 1 : i32
    %1 = arith.subi %0, %c1_i32 : i32
    %c0_i32 = arith.constant 0 : i32
    %2 = arith.maxsi %1, %c0_i32 : i32
    %c0_i32_0 = arith.constant 0 : i32
    %c0_i32_1 = arith.constant 0 : i32
    %c0_i32_2 = arith.constant 0 : i32
    return %arg0, %2, %c0_i32_0, %c0_i32_1 : i32, i32, i32, i32
  }
  func.func @transform_2(%arg0: i32, %arg1: i32) -> (i32, i32, i32, i32) {
    %c1_i32 = arith.constant 1 : i32
    %0 = arith.addi %arg1, %c1_i32 : i32
    %c8_i32 = arith.constant 8 : i32
    %1 = arith.muli %0, %c8_i32 : i32
    %c15_i32 = arith.constant 15 : i32
    %2 = arith.minsi %1, %c15_i32 : i32
    %c0_i32 = arith.constant 0 : i32
    %c0_i32_0 = arith.constant 0 : i32
    %c0_i32_1 = arith.constant 0 : i32
    return %arg0, %2, %c0_i32, %c0_i32_0 : i32, i32, i32, i32
  }
  func.func @transform_3(%arg0: i32, %arg1: i32) -> (i32, i32) {
    %c0_i32 = arith.constant 0 : i32
    %c0_i32_0 = arith.constant 0 : i32
    %c0_i32_1 = arith.constant 0 : i32
    return %c0_i32, %c0_i32_0 : i32, i32
  }
  func.func @transform_4(%arg0: i32, %arg1: i32) -> (i32, i32) {
    %c0_i32 = arith.constant 0 : i32
    %c0_i32_0 = arith.constant 0 : i32
    %c0_i32_1 = arith.constant 0 : i32
    return %c0_i32, %c0_i32_0 : i32, i32
  }
  func.func @transform_5(%arg0: i32, %arg1: i32) -> (i32, i32, i32) {
    %c0_i32 = arith.constant 0 : i32
    %c0_i32_0 = arith.constant 0 : i32
    %c0_i32_1 = arith.constant 0 : i32
    %c0_i32_2 = arith.constant 0 : i32
    return %c0_i32, %c0_i32_0, %c0_i32_1 : i32, i32, i32
  }
  func.func @transform_6(%arg0: i32, %arg1: i32) -> (i32, i32, i32, i32) {
    %c0_i32 = arith.constant 0 : i32
    %c0_i32_0 = arith.constant 0 : i32
    %c0_i32_1 = arith.constant 0 : i32
    return %arg0, %arg1, %c0_i32, %c0_i32_0 : i32, i32, i32, i32
  }
  func.func @transform_7(%arg0: i32, %arg1: i32) -> (i32, i32, i32, i32) {
    %c0_i32 = arith.constant 0 : i32
    %c0_i32_0 = arith.constant 0 : i32
    %c0_i32_1 = arith.constant 0 : i32
    return %arg0, %arg1, %c0_i32, %c0_i32_0 : i32, i32, i32, i32
  }
}

module attributes {stable_mosaic.version = 11 : i64} {
  func.func @_bn_relu_kernel(%arg0: i32, %arg1: i32, %arg2: memref<1x8x16x128xbf16, #tpu.memory_space<vmem>>, %arg3: memref<1x128xf32, #tpu.memory_space<vmem>>, %arg4: memref<1x128xf32, #tpu.memory_space<vmem>>, %arg5: memref<1x8x16x128xf32, #tpu.memory_space<vmem>>) attributes {dimension_semantics = [#tpu.dimension_semantics<parallel>, #tpu.dimension_semantics<parallel>], iteration_bounds = array<i64: 2, 2>, scalar_prefetch = 0 : i64, scratch_operands = 0 : i64, tpu.core_type = #tpu.core_type<tc>, window_params = [{transform_indices = @transform_0, window_bounds = array<i64: 1, 8, 16, 128>}, {pipeline_mode = #tpu.pipeline_mode<synchronous>, transform_indices = @transform_1, window_bounds = array<i64: 1, 128>}, {pipeline_mode = #tpu.pipeline_mode<synchronous>, transform_indices = @transform_2, window_bounds = array<i64: 1, 128>}, {transform_indices = @transform_3, window_bounds = array<i64: 1, 8, 16, 128>}]} {
    %c0 = arith.constant 0 : index
    %c0_0 = arith.constant 0 : index
    %0 = vector.load %arg3[%c0, %c0_0] : memref<1x128xf32, #tpu.memory_space<vmem>>, vector<1x128xf32>
    %1 = vector.shape_cast %0 : vector<1x128xf32> to vector<1x1x128xf32>
    %c0_1 = arith.constant 0 : index
    %c0_2 = arith.constant 0 : index
    %2 = vector.load %arg4[%c0_1, %c0_2] : memref<1x128xf32, #tpu.memory_space<vmem>>, vector<1x128xf32>
    %3 = vector.shape_cast %2 : vector<1x128xf32> to vector<1x1x128xf32>
    %c0_3 = arith.constant 0 : index
    %c0_4 = arith.constant 0 : index
    %c0_5 = arith.constant 0 : index
    %c0_6 = arith.constant 0 : index
    %4 = vector.load %arg2[%c0_3, %c0_4, %c0_5, %c0_6] : memref<1x8x16x128xbf16, #tpu.memory_space<vmem>>, vector<1x8x16x128xbf16>
    %5 = vector.shape_cast %4 : vector<1x8x16x128xbf16> to vector<8x16x128xbf16>
    %6 = arith.extf %5 : vector<8x16x128xbf16> to vector<8x16x128xf32>
    %7 = vector.broadcast %1 : vector<1x1x128xf32> to vector<8x16x128xf32>
    %8 = arith.mulf %6, %7 : vector<8x16x128xf32>
    %9 = vector.broadcast %3 : vector<1x1x128xf32> to vector<8x16x128xf32>
    %10 = arith.addf %8, %9 : vector<8x16x128xf32>
    %cst = arith.constant 0.000000e+00 : f32
    %11 = vector.broadcast %cst : f32 to vector<8x16x128xf32>
    %12 = arith.maximumf %10, %11 : vector<8x16x128xf32>
    %c0_7 = arith.constant 0 : index
    %c0_8 = arith.constant 0 : index
    %c0_9 = arith.constant 0 : index
    %c0_10 = arith.constant 0 : index
    %13 = vector.load %arg5[%c0_7, %c0_8, %c0_9, %c0_10] : memref<1x8x16x128xf32, #tpu.memory_space<vmem>>, vector<1x8x16x128xf32>
    %14 = vector.shape_cast %13 : vector<1x8x16x128xf32> to vector<8x16x128xf32>
    %15 = vector.shape_cast %12 : vector<8x16x128xf32> to vector<1x8x16x128xf32>
    tpu.vector_store %arg5[%c0_7, %c0_8, %c0_9, %c0_10], %15 {strides = array<i32>} : memref<1x8x16x128xf32, #tpu.memory_space<vmem>>, vector<1x8x16x128xf32>,
    return
  }
  func.func @transform_0(%arg0: i32, %arg1: i32) -> (i32, i32, i32, i32) {
    %c0_i32 = arith.constant 0 : i32
    %c0_i32_0 = arith.constant 0 : i32
    %c0_i32_1 = arith.constant 0 : i32
    return %arg0, %arg1, %c0_i32, %c0_i32_0 : i32, i32, i32, i32
  }
  func.func @transform_1(%arg0: i32, %arg1: i32) -> (i32, i32) {
    %c0_i32 = arith.constant 0 : i32
    %c0_i32_0 = arith.constant 0 : i32
    %c0_i32_1 = arith.constant 0 : i32
    return %c0_i32, %c0_i32_0 : i32, i32
  }
  func.func @transform_2(%arg0: i32, %arg1: i32) -> (i32, i32) {
    %c0_i32 = arith.constant 0 : i32
    %c0_i32_0 = arith.constant 0 : i32
    %c0_i32_1 = arith.constant 0 : i32
    return %c0_i32, %c0_i32_0 : i32, i32
  }
  func.func @transform_3(%arg0: i32, %arg1: i32) -> (i32, i32, i32, i32) {
    %c0_i32 = arith.constant 0 : i32
    %c0_i32_0 = arith.constant 0 : i32
    %c0_i32_1 = arith.constant 0 : i32
    return %arg0, %arg1, %c0_i32, %c0_i32_0 : i32, i32, i32, i32
  }
}

</mosaic_0001>

<llo_original>
// kernel: double_conv.5
$region0: #{double_conv.5}
  #allocation0 [shape = 'u32[]', space=smem, size = 0x4, offset = 0x4, fixed_abs, tag = 'smem constant byte address 0x4 - core index']
  #allocation1 [shape = 'u32[72,128]{1,0:T(1,128)}', space=vmem, size = 0x9000, scoped, tag = 'internal scratch']
  %s0 = inlined_call_operand.vmem [shape: bf16[2,16,16,128], index: 0, kind: input, shape index: {}]
  %s1 = inlined_call_operand.vmem [shape: f32[1,128], index: 1, kind: input, shape index: {}]
  %s2 = inlined_call_operand.vmem [shape: f32[1,128], index: 2, kind: input, shape index: {}]
  %s3 = inlined_call_operand.vmem [shape: f32[2,16,16,128], index: 3, kind: output, shape index: {}]
  %s4 = sld [smem:[#allocation0]]
  $region45: #{double_conv.5} parent=0
    _
  %s6 = ssub.s32 1, %s4
  %s7 = scalar_select 0, %s6, %s4
  loop: start=0, step=1, limit=6
  $region2: #{double_conv.5} parent=0 // loop_pre_header
    _
  $region3: #{double_conv.5} parent=0 // loop_header
    %s9 = sphi 0, %s13
    %p10 = scmp.ge.s32.totalorder %s9, 6
    %s16 = sphi 0, %s28
    %s17 = sphi 0, %s24
    %s18 = sphi 0, %s16
    %s19 = sphi 0, %s17
    %s20 = sphi 0, %s18
    %s21 = sphi 0, %s19
    %s33 = sphi 0, %s35
    %s36 = sphi 0, %s33
    %s37 = sphi 0, %s36
    %s53 = sphi 0, %s37
    %s57 = sphi 0, %s57
    %s59 = sphi 0, %s57
    %s60 = sphi 0, %s59
    %s74 = sphi 0, %s60
    %s78 = sphi 0, %s78
    %s80 = sphi 0, %s78
    %s81 = sphi 0, %s80
    %s95 = sphi 0, %s81
    %s103 = sphi 0, %s105
    %s106 = sphi 0, %s103
    %s107 = sphi 0, %s106
    %s123 = sphi 0, %s107
  $region4: #{double_conv.5} parent=0 // loop_header_branch
    %12 = sbr.rel (%p10) target = $region8
  $region5: #{double_conv.5} parent=0 // loop_body
    %s14 = ssub.s32 %s9, 1
    %s15 = ssub.s32 %s9, 2
    %s22 = sadd.s32 1, %s17
    %p23 = scmp.ge.s32.totalorder %s22, 2
    %s24 = scalar_select %p23, 0, %s22
    %s25 = sadd.s32 1, %s16
    %s26 = scalar_select %p23, %s25, %s16
    %p27 = scmp.ge.s32.totalorder %s26, 2
    %s28 = scalar_select %p27, 0, %s26
    %s29 = ssub.s32 %s16, %s28
    %s30 = ssub.s32 %s17, %s24
    %s31 = sor.u32 %s29, %s30
    %p32 = scmp.eq.s32.totalorder %s31, 0
    %s34 = sadd.s32 %s33, 1
    %s35 = scalar_select %p32, %s33, %s34
    %p38 = pneg %p32
    %p39 = scmp.eq.s32.totalorder %s9, 3
    %p40 = por %p38, %p39
    %p41 = scmp.ne.s32.totalorder %s33, %s36
    %p42 = scmp.eq.s32.totalorder %s9, 0
    %p43 = por %p41, %p42
    %p44 = scmp.ne.s32.totalorder %s33, %s36
    %p45 = scmp.eq.s32.totalorder %s14, 3
    %p46 = por %p44, %p45
    %p47 = scmp.ne.s32.totalorder %s36, %s37
    %p48 = scmp.eq.s32.totalorder %s14, 0
    %p49 = por %p47, %p48
    %p50 = scmp.ne.s32.totalorder %s36, %s37
    %p51 = scmp.eq.s32.totalorder %s15, 3
    %p52 = por %p50, %p51
    %p54 = scmp.ne.s32.totalorder %s37, %s53
    %p55 = scmp.eq.s32.totalorder %s15, 0
    %p56 = por %p54, %p55
    %s58 = sadd.s32 %s57, 1
    %p61 = scmp.eq.s32.totalorder %s9, 3
    %p62 = scmp.ne.s32.totalorder %s57, %s59
    %p63 = scmp.eq.s32.totalorder %s9, 0
    %p64 = por %p62, %p63
    %p65 = scmp.ne.s32.totalorder %s57, %s59
    %p66 = scmp.eq.s32.totalorder %s14, 3
    %p67 = por %p65, %p66
    %p68 = scmp.ne.s32.totalorder %s59, %s60
    %p69 = scmp.eq.s32.totalorder %s14, 0
    %p70 = por %p68, %p69
    %p71 = scmp.ne.s32.totalorder %s59, %s60
    %p72 = scmp.eq.s32.totalorder %s15, 3
    %p73 = por %p71, %p72
    %p75 = scmp.ne.s32.totalorder %s60, %s74
    %p76 = scmp.eq.s32.totalorder %s15, 0
    %p77 = por %p75, %p76
    %s79 = sadd.s32 %s78, 1
    %p82 = scmp.eq.s32.totalorder %s9, 3
    %p83 = scmp.ne.s32.totalorder %s78, %s80
    %p84 = scmp.eq.s32.totalorder %s9, 0
    %p85 = por %p83, %p84
    %p86 = scmp.ne.s32.totalorder %s78, %s80
    %p87 = scmp.eq.s32.totalorder %s14, 3
    %p88 = por %p86, %p87
    %p89 = scmp.ne.s32.totalorder %s80, %s81
    %p90 = scmp.eq.s32.totalorder %s14, 0
    %p91 = por %p89, %p90
    %p92 = scmp.ne.s32.totalorder %s80, %s81
    %p93 = scmp.eq.s32.totalorder %s15, 3
    %p94 = por %p92, %p93
    %p96 = scmp.ne.s32.totalorder %s81, %s95
    %p97 = scmp.eq.s32.totalorder %s15, 0
    %p98 = por %p96, %p97
    %s99 = ssub.s32 %s16, %s28
    %s100 = ssub.s32 %s17, %s24
    %s101 = sor.u32 %s99, %s100
    %p102 = scmp.eq.s32.totalorder %s101, 0
    %s104 = sadd.s32 %s103, 1
    %s105 = scalar_select %p102, %s103, %s104
    %p108 = pneg %p102
    %p109 = scmp.eq.s32.totalorder %s9, 3
    %p110 = por %p108, %p109
    %p111 = scmp.ne.s32.totalorder %s103, %s106
    %p112 = scmp.eq.s32.totalorder %s9, 0
    %p113 = por %p111, %p112
    %p114 = scmp.ne.s32.totalorder %s103, %s106
    %p115 = scmp.eq.s32.totalorder %s14, 3
    %p116 = por %p114, %p115
    %p117 = scmp.ne.s32.totalorder %s106, %s107
    %p118 = scmp.eq.s32.totalorder %s14, 0
    %p119 = por %p117, %p118
    %p120 = scmp.ne.s32.totalorder %s106, %s107
    %p121 = scmp.eq.s32.totalorder %s15, 3
    %p122 = por %p120, %p121
    %p124 = scmp.ne.s32.totalorder %s107, %s123
    %p125 = scmp.eq.s32.totalorder %s15, 0
    %p126 = por %p124, %p125
    %p127 = scmp.le.s32.totalorder 1, %s9
    %p128 = scmp.lt.s32.totalorder %s9, 5
    %p129 = pnand %p127, %p128
    %p130 = pneg %p129
    // Predicated region
    $region9: #{double_conv.5} parent=5 // pred_check
      _
    $region10: #{double_conv.5} parent=5 // pred_check_branch
      %132 = sbr.rel (%p129) target = $region12
    $region11: #{double_conv.5} parent=5 // pred_region
      %s133 = ssub.s32 %s9, 1
      // Predicated region
      $region13: #{double_conv.5} parent=11 // pred_check
        %p134 = pneg %p70
      $region14: #{double_conv.5} parent=11 // pred_check_branch
        %136 = sbr.rel (%p134) target = $region16
      $region15: #{double_conv.5} parent=11 // pred_region
        _
      $region16: #{double_conv.5} parent=11 // pred_fallthru
        _
      // Predicated region
      $region17: #{double_conv.5} parent=11 // pred_check
        %p137 = pneg %p91
      $region18: #{double_conv.5} parent=11 // pred_check_branch
        %139 = sbr.rel (%p137) target = $region20
      $region19: #{double_conv.5} parent=11 // pred_region
        _
      $region20: #{double_conv.5} parent=11 // pred_fallthru
        _
    $region12: #{double_conv.5} parent=5 // pred_fallthru
      _
    %p140 = scmp.lt.s32.totalorder %s9, 4
    // Predicated region
    $region21: #{double_conv.5} parent=5 // pred_check
      %p141 = pneg %p140
    $region22: #{double_conv.5} parent=5 // pred_check_branch
      %143 = sbr.rel (%p141) target = $region24
    $region23: #{double_conv.5} parent=5 // pred_region
      // Predicated region
      $region25: #{double_conv.5} parent=23 // pred_check
        %p144 = pneg %p43
      $region26: #{double_conv.5} parent=23 // pred_check_branch
        %146 = sbr.rel (%p144) target = $region28
      $region27: #{double_conv.5} parent=23 // pred_region
        %s147 = smul.u32 8, %s17
        %p148 = scmp.lt.s32.totalorder %s16, 1
        %s149 = scalar_select %p148, %s16, 1
        %p150 = scmp.lt.s32.totalorder %s147, 15
        %s151 = scalar_select %p150, %s147, 15
        %s152 = smul.addr %s151, 2
        %s153 = smul.addr %s149, 32
        %s154 = sadd.s32 %s152, %s153
        %s155 = smul.addr %s154, 4
        %s156 = scalar_lea.vmem %s0, %s155
        %s157 = smul.u32 8, %s17
      $region28: #{double_conv.5} parent=23 // pred_fallthru
        _
    $region24: #{double_conv.5} parent=5 // pred_fallthru
      _
    %p158 = scmp.le.s32.totalorder 1, %s9
    %p159 = scmp.lt.s32.totalorder %s9, 5
    %p160 = pnand %p158, %p159
    %p161 = pneg %p160
    // Predicated region
    $region29: #{double_conv.5} parent=5 // pred_check
      _
    $region30: #{double_conv.5} parent=5 // pred_check_branch
      %163 = sbr.rel (%p160) target = $region32
    $region31: #{double_conv.5} parent=5 // pred_region
      %s164 = ssub.s32 %s9, 1
      %s165 = smul.u32 8, %s19
      %p166 = scmp.lt.s32.totalorder %s18, 1
      %s167 = scalar_select %p166, %s18, 1
      %p168 = scmp.lt.s32.totalorder %s165, 15
      %s169 = scalar_select %p168, %s165, 15
      %s170 = smul.addr %s169, 2
      %s171 = smul.addr %s167, 32
      %s172 = sadd.s32 %s170, %s171
      %s173 = smul.addr %s172, 4
      %s174 = scalar_lea.vmem %s0, %s173
      %p175 = pneg %p49
      %p176 = pneg %p46
      %p177 = pneg %p70
      %p178 = pneg %p67
      %p179 = pneg %p91
      %p180 = pneg %p88
      %p181 = pneg %p119
      %p182 = pneg %p116
      %s183 = smul.u32 8, %s19
      %p184 = scmp.lt.s32.totalorder %s18, 1
      %s185 = scalar_select %p184, %s18, 1
      %p186 = scmp.lt.s32.totalorder %s183, 15
      %s187 = scalar_select %p186, %s183, 15
      %s188 = smul.addr %s187, 2
      %s189 = smul.addr %s185, 32
      %s190 = sadd.s32 %s188, %s189
      %s191 = smul.addr %s190, 8
      %s192 = scalar_lea.vmem %s3, %s191
      %s193 = smul.u32 8, %s19
      %p194 = scmp.lt.s32.totalorder %s18, 1
      %s195 = scalar_select %p194, %s18, 1
      %p196 = scmp.lt.s32.totalorder %s193, 15
      %s197 = scalar_select %p196, %s193, 15
      %s198 = smul.addr %s197, 2
      %s199 = smul.addr %s195, 32
      %s200 = sadd.s32 %s198, %s199
      %s201 = smul.addr %s200, 4
      %s202 = scalar_lea.vmem %s0, %s201
      %s203 = smul.u32 8, %s19
      %s204 = smul.u32 8, %s19
      %p205 = scmp.lt.s32.totalorder %s18, 1
      %s206 = scalar_select %p205, %s18, 1
      %p207 = scmp.lt.s32.totalorder %s204, 15
      %s208 = scalar_select %p207, %s204, 15
      %s209 = smul.addr %s208, 2
      %s210 = smul.addr %s206, 32
      %s211 = sadd.s32 %s209, %s210
      %s212 = smul.addr %s211, 8
      %s213 = scalar_lea.vmem %s3, %s212
      %s214 = smul.u32 8, %s19
      %v215 = vld [vmem:[%s1] sm:$0x1]
      %v216 = vld [vmem:[%s2] sm:$0x1]
      %v217 = vld [vmem:[%s202] sm:$0xf]
      %v218 = vld [vmem:[%s202 + $0x4] sm:$0xf]
      %v219 = vld [vmem:[%s202 + $0x8] sm:$0xf]
      %v220 = vld [vmem:[%s202 + $0xc] sm:$0xf]
      %v221 = vld [vmem:[%s202 + $0x10] sm:$0xf]
      %v222 = vld [vmem:[%s202 + $0x14] sm:$0xf]
      %v223 = vld [vmem:[%s202 + $0x18] sm:$0xf]
      %v224 = vld [vmem:[%s202 + $0x1c] sm:$0xf]
      %v225 = vld [vmem:[%s202 + $0x20] sm:$0xf]
      %v226 = vld [vmem:[%s202 + $0x24] sm:$0xf]
      %v227 = vld [vmem:[%s202 + $0x28] sm:$0xf]
      %v228 = vld [vmem:[%s202 + $0x2c] sm:$0xf]
      %v229 = vld [vmem:[%s202 + $0x30] sm:$0xf]
      %v230 = vld [vmem:[%s202 + $0x34] sm:$0xf]
      %v231 = vld [vmem:[%s202 + $0x38] sm:$0xf]
      %v232 = vld [vmem:[%s202 + $0x3c] sm:$0xf]
      %v233 = vunpack.c.l.bf16 %v217
      %v234 = vunpack.c.l.bf16 %v218
      %v235 = vunpack.c.l.bf16 %v219
      %v236 = vunpack.c.l.bf16 %v220
      %v237 = vunpack.c.l.bf16 %v221
      %v238 = vunpack.c.l.bf16 %v222
      %v239 = vunpack.c.l.bf16 %v223
      %v240 = vunpack.c.l.bf16 %v224
      %v241 = vunpack.c.l.bf16 %v225
      %v242 = vunpack.c.l.bf16 %v226
      %v243 = vunpack.c.l.bf16 %v227
      %v244 = vunpack.c.l.bf16 %v228
      %v245 = vunpack.c.l.bf16 %v229
      %v246 = vunpack.c.l.bf16 %v230
      %v247 = vunpack.c.l.bf16 %v231
      %v248 = vunpack.c.l.bf16 %v232
      %v250 = vperm.slane %v215, 0
      %v252 = vmul.f32 %v233, %v250
      %v253 = vmul.f32 %v234, %v250
      %v254 = vmul.f32 %v235, %v250
      %v255 = vmul.f32 %v236, %v250
      %v256 = vmul.f32 %v237, %v250
      %v257 = vmul.f32 %v238, %v250
      %v258 = vmul.f32 %v239, %v250
      %v259 = vmul.f32 %v240, %v250
      %v260 = vmul.f32 %v241, %v250
      %v261 = vmul.f32 %v242, %v250
      %v262 = vmul.f32 %v243, %v250
      %v263 = vmul.f32 %v244, %v250
      %v264 = vmul.f32 %v245, %v250
      %v265 = vmul.f32 %v246, %v250
      %v266 = vmul.f32 %v247, %v250
      %v267 = vmul.f32 %v248, %v250
      %v269 = vperm.slane %v216, 0
      %v271 = vadd.f32 %v252, %v269
      %v272 = vadd.f32 %v253, %v269
      %v273 = vadd.f32 %v254, %v269
      %v274 = vadd.f32 %v255, %v269
      %v275 = vadd.f32 %v256, %v269
      %v276 = vadd.f32 %v257, %v269
      %v277 = vadd.f32 %v258, %v269
      %v278 = vadd.f32 %v259, %v269
      %v279 = vadd.f32 %v260, %v269
      %v280 = vadd.f32 %v261, %v269
      %v281 = vadd.f32 %v262, %v269
      %v282 = vadd.f32 %v263, %v269
      %v283 = vadd.f32 %v264, %v269
      %v284 = vadd.f32 %v265, %v269
      %v285 = vadd.f32 %v266, %v269
      %v286 = vadd.f32 %v267, %v269
      %v287 = vmax.f32 %v271, 0.0
      %v288 = vmax.f32 %v272, 0.0
      %v289 = vmax.f32 %v273, 0.0
      %v290 = vmax.f32 %v274, 0.0
      %v291 = vmax.f32 %v275, 0.0
      %v292 = vmax.f32 %v276, 0.0
      %v293 = vmax.f32 %v277, 0.0
      %v294 = vmax.f32 %v278, 0.0
      %v295 = vmax.f32 %v279, 0.0
      %v296 = vmax.f32 %v280, 0.0
      %v297 = vmax.f32 %v281, 0.0
      %v298 = vmax.f32 %v282, 0.0
      %v299 = vmax.f32 %v283, 0.0
      %v300 = vmax.f32 %v284, 0.0
      %v301 = vmax.f32 %v285, 0.0
      %v302 = vmax.f32 %v286, 0.0
      %303 = vst [vmem:[%s213] sm:$0xff] %v287
      %304 = vst [vmem:[%s213 + $0x8] sm:$0xff] %v288
      %305 = vst [vmem:[%s213 + $0x10] sm:$0xff] %v289
      %306 = vst [vmem:[%s213 + $0x18] sm:$0xff] %v290
      %307 = vst [vmem:[%s213 + $0x20] sm:$0xff] %v291
      %308 = vst [vmem:[%s213 + $0x28] sm:$0xff] %v292
      %309 = vst [vmem:[%s213 + $0x30] sm:$0xff] %v293
      %310 = vst [vmem:[%s213 + $0x38] sm:$0xff] %v294
      %311 = vst [vmem:[%s213 + $0x40] sm:$0xff] %v295
      %312 = vst [vmem:[%s213 + $0x48] sm:$0xff] %v296
      %313 = vst [vmem:[%s213 + $0x50] sm:$0xff] %v297
      %314 = vst [vmem:[%s213 + $0x58] sm:$0xff] %v298
      %315 = vst [vmem:[%s213 + $0x60] sm:$0xff] %v299
      %316 = vst [vmem:[%s213 + $0x68] sm:$0xff] %v300
      %317 = vst [vmem:[%s213 + $0x70] sm:$0xff] %v301
      %318 = vst [vmem:[%s213 + $0x78] sm:$0xff] %v302
      %s319 = smul.u32 8, %s19
      %p320 = scmp.lt.s32.totalorder %s18, 1
      %s321 = scalar_select %p320, %s18, 1
      %p322 = scmp.lt.s32.totalorder %s319, 15
      %s323 = scalar_select %p322, %s319, 15
      %s324 = smul.addr %s323, 2
      %s325 = smul.addr %s321, 32
      %s326 = sadd.s32 %s324, %s325
      %s327 = smul.addr %s326, 8
      %s328 = scalar_lea.vmem %s3, %s327
      // Predicated region
      $region33: #{double_conv.5} parent=31 // pred_check
        %p329 = pneg %p116
      $region34: #{double_conv.5} parent=31 // pred_check_branch
        %331 = sbr.rel (%p329) target = $region36
      $region35: #{double_conv.5} parent=31 // pred_region
        %s332 = smul.u32 8, %s19
      $region36: #{double_conv.5} parent=31 // pred_fallthru
        _
    $region32: #{double_conv.5} parent=5 // pred_fallthru
      _
    %p333 = scmp.le.s32.totalorder 2, %s9
    // Predicated region
    $region37: #{double_conv.5} parent=5 // pred_check
      %p334 = pneg %p333
    $region38: #{double_conv.5} parent=5 // pred_check_branch
      %336 = sbr.rel (%p334) target = $region40
    $region39: #{double_conv.5} parent=5 // pred_region
      %s337 = ssub.s32 %s9, 2
      // Predicated region
      $region41: #{double_conv.5} parent=39 // pred_check
        %p338 = pneg %p122
      $region42: #{double_conv.5} parent=39 // pred_check_branch
        %340 = sbr.rel (%p338) target = $region44
      $region43: #{double_conv.5} parent=39 // pred_region
        %s341 = smul.u32 8, %s21
        %p342 = scmp.lt.s32.totalorder %s20, 1
        %s343 = scalar_select %p342, %s20, 1
        %p344 = scmp.lt.s32.totalorder %s341, 15
        %s345 = scalar_select %p344, %s341, 15
        %s346 = smul.addr %s345, 2
        %s347 = smul.addr %s343, 32
        %s348 = sadd.s32 %s346, %s347
        %s349 = smul.addr %s348, 8
        %s350 = scalar_lea.vmem %s3, %s349
      $region44: #{double_conv.5} parent=39 // pred_fallthru
        _
    $region40: #{double_conv.5} parent=5 // pred_fallthru
      _
  $region6: #{double_conv.5} parent=0 // loop_footer
    %s13 = sadd.s32 1, %s9
  $region7: #{double_conv.5} parent=0 // loop_footer_branch
    %8 = sbr.rel target = $region3
  $region8: #{double_conv.5} parent=0 // loop_exit
    _

// kernel: double_conv.3
$region0: #{double_conv.3}
  #allocation0 [shape = 'u32[]', space=smem, size = 0x4, offset = 0x4, fixed_abs, tag = 'smem constant byte address 0x4 - core index']
  #allocation1 [shape = 'u32[72,128]{1,0:T(1,128)}', space=vmem, size = 0x9000, scoped, tag = 'internal scratch']
  %s0 = inlined_call_operand.vmem [shape: bf16[2,16,16,4], index: 0, kind: input, shape index: {}, may-alias: {0,1,2}]
  %s1 = inlined_call_operand.vmem [shape: bf16[2,16,16,4], index: 1, kind: input, shape index: {}, may-alias: {0,1,2}]
  %s2 = inlined_call_operand.vmem [shape: bf16[2,16,16,4], index: 2, kind: input, shape index: {}, may-alias: {0,1,2}]
  %s3 = inlined_call_operand.vmem [shape: f32[1,4], index: 3, kind: input, shape index: {}, may-alias: {3,4}]
  %s4 = inlined_call_operand.vmem [shape: f32[1,4], index: 4, kind: input, shape index: {}, may-alias: {3,4}]
  %s5 = inlined_call_operand.vmem [shape: bf16[1,36,128], index: 5, kind: input, shape index: {}]
  %s6 = inlined_call_operand.vmem [shape: bf16[2,16,16,128], index: 6, kind: output, shape index: {0}]
  %s7 = inlined_call_operand.vmem [shape: f32[2,2,2,128], index: 7, kind: output, shape index: {1}]
  %8 = xla_tuple %s6, %s7
  %s9 = sld [smem:[#allocation0]]
  $region65: #{double_conv.3} parent=0
    _
  %s11 = ssub.s32 1, %s9
  %s12 = scalar_select 0, %s11, %s9
  loop: start=0, step=1, limit=6
  $region2: #{double_conv.3} parent=0 // loop_pre_header
    _
  $region3: #{double_conv.3} parent=0 // loop_header
    %s14 = sphi 0, %s18
    %p15 = scmp.ge.s32.totalorder %s14, 6
    %s21 = sphi 0, %s33
    %s22 = sphi 0, %s29
    %s23 = sphi 0, %s21
    %s24 = sphi 0, %s22
    %s25 = sphi 0, %s23
    %s26 = sphi 0, %s24
    %s38 = sphi 0, %s40
    %s41 = sphi 0, %s38
    %s42 = sphi 0, %s41
    %s58 = sphi 0, %s42
    %s74 = sphi 0, %s76
    %s77 = sphi 0, %s74
    %s78 = sphi 0, %s77
    %s94 = sphi 0, %s78
    %s110 = sphi 0, %s112
    %s113 = sphi 0, %s110
    %s114 = sphi 0, %s113
    %s130 = sphi 0, %s114
    %s134 = sphi 0, %s134
    %s136 = sphi 0, %s134
    %s137 = sphi 0, %s136
    %s151 = sphi 0, %s137
    %s155 = sphi 0, %s155
    %s157 = sphi 0, %s155
    %s158 = sphi 0, %s157
    %s172 = sphi 0, %s158
    %s176 = sphi 0, %s176
    %s178 = sphi 0, %s176
    %s179 = sphi 0, %s178
    %s193 = sphi 0, %s179
    %s201 = sphi 0, %s203
    %s204 = sphi 0, %s201
    %s205 = sphi 0, %s204
    %s221 = sphi 0, %s205
    %s229 = sphi 0, %s231
    %s232 = sphi 0, %s229
    %s233 = sphi 0, %s232
    %s249 = sphi 0, %s233
  $region4: #{double_conv.3} parent=0 // loop_header_branch
    %17 = sbr.rel (%p15) target = $region8
  $region5: #{double_conv.3} parent=0 // loop_body
    %s19 = ssub.s32 %s14, 1
    %s20 = ssub.s32 %s14, 2
    %s27 = sadd.s32 1, %s22
    %p28 = scmp.ge.s32.totalorder %s27, 2
    %s29 = scalar_select %p28, 0, %s27
    %s30 = sadd.s32 1, %s21
    %s31 = scalar_select %p28, %s30, %s21
    %p32 = scmp.ge.s32.totalorder %s31, 2
    %s33 = scalar_select %p32, 0, %s31
    %s34 = ssub.s32 %s21, %s33
    %s35 = ssub.s32 %s22, %s29
    %s36 = sor.u32 %s34, %s35
    %p37 = scmp.eq.s32.totalorder %s36, 0
    %s39 = sadd.s32 %s38, 1
    %s40 = scalar_select %p37, %s38, %s39
    %p43 = pneg %p37
    %p44 = scmp.eq.s32.totalorder %s14, 3
    %p45 = por %p43, %p44
    %p46 = scmp.ne.s32.totalorder %s38, %s41
    %p47 = scmp.eq.s32.totalorder %s14, 0
    %p48 = por %p46, %p47
    %p49 = scmp.ne.s32.totalorder %s38, %s41
    %p50 = scmp.eq.s32.totalorder %s19, 3
    %p51 = por %p49, %p50
    %p52 = scmp.ne.s32.totalorder %s41, %s42
    %p53 = scmp.eq.s32.totalorder %s19, 0
    %p54 = por %p52, %p53
    %p55 = scmp.ne.s32.totalorder %s41, %s42
    %p56 = scmp.eq.s32.totalorder %s20, 3
    %p57 = por %p55, %p56
    %p59 = scmp.ne.s32.totalorder %s42, %s58
    %p60 = scmp.eq.s32.totalorder %s20, 0
    %p61 = por %p59, %p60
    %s62 = smul.u32 %s22, 8
    %s63 = ssub.s32 %s62, 1
    %p64 = scmp.gt.s32.totalorder %s63, 0
    %s65 = scalar_select %p64, %s63, 0
    %s66 = smul.u32 %s29, 8
    %s67 = ssub.s32 %s66, 1
    %p68 = scmp.gt.s32.totalorder %s67, 0
    %s69 = scalar_select %p68, %s67, 0
    %s70 = ssub.s32 %s21, %s33
    %s71 = ssub.s32 %s65, %s69
    %s72 = sor.u32 %s70, %s71
    %p73 = scmp.eq.s32.totalorder %s72, 0
    %s75 = sadd.s32 %s74, 1
    %s76 = scalar_select %p73, %s74, %s75
    %p79 = pneg %p73
    %p80 = scmp.eq.s32.totalorder %s14, 3
    %p81 = por %p79, %p80
    %p82 = scmp.ne.s32.totalorder %s74, %s77
    %p83 = scmp.eq.s32.totalorder %s14, 0
    %p84 = por %p82, %p83
    %p85 = scmp.ne.s32.totalorder %s74, %s77
    %p86 = scmp.eq.s32.totalorder %s19, 3
    %p87 = por %p85, %p86
    %p88 = scmp.ne.s32.totalorder %s77, %s78
    %p89 = scmp.eq.s32.totalorder %s19, 0
    %p90 = por %p88, %p89
    %p91 = scmp.ne.s32.totalorder %s77, %s78
    %p92 = scmp.eq.s32.totalorder %s20, 3
    %p93 = por %p91, %p92
    %p95 = scmp.ne.s32.totalorder %s78, %s94
    %p96 = scmp.eq.s32.totalorder %s20, 0
    %p97 = por %p95, %p96
    %s98 = sadd.s32 %s22, 1
    %s99 = smul.u32 %s98, 8
    %p100 = scmp.lt.s32.totalorder %s99, 15
    %s101 = scalar_select %p100, %s99, 15
    %s102 = sadd.s32 %s29, 1
    %s103 = smul.u32 %s102, 8
    %p104 = scmp.lt.s32.totalorder %s103, 15
    %s105 = scalar_select %p104, %s103, 15
    %s106 = ssub.s32 %s21, %s33
    %s107 = ssub.s32 %s101, %s105
    %s108 = sor.u32 %s106, %s107
    %p109 = scmp.eq.s32.totalorder %s108, 0
    %s111 = sadd.s32 %s110, 1
    %s112 = scalar_select %p109, %s110, %s111
    %p115 = pneg %p109
    %p116 = scmp.eq.s32.totalorder %s14, 3
    %p117 = por %p115, %p116
    %p118 = scmp.ne.s32.totalorder %s110, %s113
    %p119 = scmp.eq.s32.totalorder %s14, 0
    %p120 = por %p118, %p119
    %p121 = scmp.ne.s32.totalorder %s110, %s113
    %p122 = scmp.eq.s32.totalorder %s19, 3
    %p123 = por %p121, %p122
    %p124 = scmp.ne.s32.totalorder %s113, %s114
    %p125 = scmp.eq.s32.totalorder %s19, 0
    %p126 = por %p124, %p125
    %p127 = scmp.ne.s32.totalorder %s113, %s114
    %p128 = scmp.eq.s32.totalorder %s20, 3
    %p129 = por %p127, %p128
    %p131 = scmp.ne.s32.totalorder %s114, %s130
    %p132 = scmp.eq.s32.totalorder %s20, 0
    %p133 = por %p131, %p132
    %s135 = sadd.s32 %s134, 1
    %p138 = scmp.eq.s32.totalorder %s14, 3
    %p139 = scmp.ne.s32.totalorder %s134, %s136
    %p140 = scmp.eq.s32.totalorder %s14, 0
    %p141 = por %p139, %p140
    %p142 = scmp.ne.s32.totalorder %s134, %s136
    %p143 = scmp.eq.s32.totalorder %s19, 3
    %p144 = por %p142, %p143
    %p145 = scmp.ne.s32.totalorder %s136, %s137
    %p146 = scmp.eq.s32.totalorder %s19, 0
    %p147 = por %p145, %p146
    %p148 = scmp.ne.s32.totalorder %s136, %s137
    %p149 = scmp.eq.s32.totalorder %s20, 3
    %p150 = por %p148, %p149
    %p152 = scmp.ne.s32.totalorder %s137, %s151
    %p153 = scmp.eq.s32.totalorder %s20, 0
    %p154 = por %p152, %p153
    %s156 = sadd.s32 %s155, 1
    %p159 = scmp.eq.s32.totalorder %s14, 3
    %p160 = scmp.ne.s32.totalorder %s155, %s157
    %p161 = scmp.eq.s32.totalorder %s14, 0
    %p162 = por %p160, %p161
    %p163 = scmp.ne.s32.totalorder %s155, %s157
    %p164 = scmp.eq.s32.totalorder %s19, 3
    %p165 = por %p163, %p164
    %p166 = scmp.ne.s32.totalorder %s157, %s158
    %p167 = scmp.eq.s32.totalorder %s19, 0
    %p168 = por %p166, %p167
    %p169 = scmp.ne.s32.totalorder %s157, %s158
    %p170 = scmp.eq.s32.totalorder %s20, 3
    %p171 = por %p169, %p170
    %p173 = scmp.ne.s32.totalorder %s158, %s172
    %p174 = scmp.eq.s32.totalorder %s20, 0
    %p175 = por %p173, %p174
    %s177 = sadd.s32 %s176, 1
    %p180 = scmp.eq.s32.totalorder %s14, 3
    %p181 = scmp.ne.s32.totalorder %s176, %s178
    %p182 = scmp.eq.s32.totalorder %s14, 0
    %p183 = por %p181, %p182
    %p184 = scmp.ne.s32.totalorder %s176, %s178
    %p185 = scmp.eq.s32.totalorder %s19, 3
    %p186 = por %p184, %p185
    %p187 = scmp.ne.s32.totalorder %s178, %s179
    %p188 = scmp.eq.s32.totalorder %s19, 0
    %p189 = por %p187, %p188
    %p190 = scmp.ne.s32.totalorder %s178, %s179
    %p191 = scmp.eq.s32.totalorder %s20, 3
    %p192 = por %p190, %p191
    %p194 = scmp.ne.s32.totalorder %s179, %s193
    %p195 = scmp.eq.s32.totalorder %s20, 0
    %p196 = por %p194, %p195
    %s197 = ssub.s32 %s21, %s33
    %s198 = ssub.s32 %s22, %s29
    %s199 = sor.u32 %s197, %s198
    %p200 = scmp.eq.s32.totalorder %s199, 0
    %s202 = sadd.s32 %s201, 1
    %s203 = scalar_select %p200, %s201, %s202
    %p206 = pneg %p200
    %p207 = scmp.eq.s32.totalorder %s14, 3
    %p208 = por %p206, %p207
    %p209 = scmp.ne.s32.totalorder %s201, %s204
    %p210 = scmp.eq.s32.totalorder %s14, 0
    %p211 = por %p209, %p210
    %p212 = scmp.ne.s32.totalorder %s201, %s204
    %p213 = scmp.eq.s32.totalorder %s19, 3
    %p214 = por %p212, %p213
    %p215 = scmp.ne.s32.totalorder %s204, %s205
    %p216 = scmp.eq.s32.totalorder %s19, 0
    %p217 = por %p215, %p216
    %p218 = scmp.ne.s32.totalorder %s204, %s205
    %p219 = scmp.eq.s32.totalorder %s20, 3
    %p220 = por %p218, %p219
    %p222 = scmp.ne.s32.totalorder %s205, %s221
    %p223 = scmp.eq.s32.totalorder %s20, 0
    %p224 = por %p222, %p223
    %s225 = ssub.s32 %s21, %s33
    %s226 = ssub.s32 %s22, %s29
    %s227 = sor.u32 %s225, %s226
    %p228 = scmp.eq.s32.totalorder %s227, 0
    %s230 = sadd.s32 %s229, 1
    %s231 = scalar_select %p228, %s229, %s230
    %p234 = pneg %p228
    %p235 = scmp.eq.s32.totalorder %s14, 3
    %p236 = por %p234, %p235
    %p237 = scmp.ne.s32.totalorder %s229, %s232
    %p238 = scmp.eq.s32.totalorder %s14, 0
    %p239 = por %p237, %p238
    %p240 = scmp.ne.s32.totalorder %s229, %s232
    %p241 = scmp.eq.s32.totalorder %s19, 3
    %p242 = por %p240, %p241
    %p243 = scmp.ne.s32.totalorder %s232, %s233
    %p244 = scmp.eq.s32.totalorder %s19, 0
    %p245 = por %p243, %p244
    %p246 = scmp.ne.s32.totalorder %s232, %s233
    %p247 = scmp.eq.s32.totalorder %s20, 3
    %p248 = por %p246, %p247
    %p250 = scmp.ne.s32.totalorder %s233, %s249
    %p251 = scmp.eq.s32.totalorder %s20, 0
    %p252 = por %p250, %p251
    %p253 = scmp.le.s32.totalorder 1, %s14
    %p254 = scmp.lt.s32.totalorder %s14, 5
    %p255 = pnand %p253, %p254
    %p256 = pneg %p255
    // Predicated region
    $region9: #{double_conv.3} parent=5 // pred_check
      _
    $region10: #{double_conv.3} parent=5 // pred_check_branch
      %258 = sbr.rel (%p255) target = $region12
    $region11: #{double_conv.3} parent=5 // pred_region
      %s259 = ssub.s32 %s14, 1
      // Predicated region
      $region13: #{double_conv.3} parent=11 // pred_check
        %p260 = pneg %p147
      $region14: #{double_conv.3} parent=11 // pred_check_branch
        %262 = sbr.rel (%p260) target = $region16
      $region15: #{double_conv.3} parent=11 // pred_region
        _
      $region16: #{double_conv.3} parent=11 // pred_fallthru
        _
      // Predicated region
      $region17: #{double_conv.3} parent=11 // pred_check
        %p263 = pneg %p168
      $region18: #{double_conv.3} parent=11 // pred_check_branch
        %265 = sbr.rel (%p263) target = $region20
      $region19: #{double_conv.3} parent=11 // pred_region
        _
      $region20: #{double_conv.3} parent=11 // pred_fallthru
        _
      // Predicated region
      $region21: #{double_conv.3} parent=11 // pred_check
        %p266 = pneg %p189
      $region22: #{double_conv.3} parent=11 // pred_check_branch
        %268 = sbr.rel (%p266) target = $region24
      $region23: #{double_conv.3} parent=11 // pred_region
        _
      $region24: #{double_conv.3} parent=11 // pred_fallthru
        _
    $region12: #{double_conv.3} parent=5 // pred_fallthru
      _
    %p269 = scmp.lt.s32.totalorder %s14, 4
    // Predicated region
    $region25: #{double_conv.3} parent=5 // pred_check
      %p270 = pneg %p269
    $region26: #{double_conv.3} parent=5 // pred_check_branch
      %272 = sbr.rel (%p270) target = $region28
    $region27: #{double_conv.3} parent=5 // pred_region
      // Predicated region
      $region29: #{double_conv.3} parent=27 // pred_check
        %p273 = pneg %p48
      $region30: #{double_conv.3} parent=27 // pred_check_branch
        %275 = sbr.rel (%p273) target = $region32
      $region31: #{double_conv.3} parent=27 // pred_region
        %s276 = smul.u32 8, %s22
        %p277 = scmp.lt.s32.totalorder %s21, 1
        %s278 = scalar_select %p277, %s21, 1
        %p279 = scmp.lt.s32.totalorder %s276, 15
        %s280 = scalar_select %p279, %s276, 15
        %s281 = smul.addr %s280, 2
        %s282 = smul.addr %s278, 32
        %s283 = sadd.s32 %s281, %s282
        %s284 = smul.addr %s283, 4
        %s285 = scalar_lea.vmem %s0, %s284
        %s286 = smul.u32 8, %s22
      $region32: #{double_conv.3} parent=27 // pred_fallthru
        _
      // Predicated region
      $region33: #{double_conv.3} parent=27 // pred_check
        %p287 = pneg %p84
      $region34: #{double_conv.3} parent=27 // pred_check_branch
        %289 = sbr.rel (%p287) target = $region36
      $region35: #{double_conv.3} parent=27 // pred_region
        %s290 = smul.u32 %s22, 8
        %s291 = ssub.s32 %s290, 1
        %p292 = scmp.gt.s32.totalorder %s291, 0
        %s293 = scalar_select %p292, %s291, 0
        %p294 = scmp.lt.s32.totalorder %s21, 1
        %s295 = scalar_select %p294, %s21, 1
        %p296 = scmp.lt.s32.totalorder %s293, 15
        %s297 = scalar_select %p296, %s293, 15
        %s298 = smul.addr %s297, 2
        %s299 = smul.addr %s295, 32
        %s300 = sadd.s32 %s298, %s299
        %s301 = smul.addr %s300, 4
        %s302 = scalar_lea.vmem %s1, %s301
        %s303 = smul.u32 %s22, 8
        %s304 = ssub.s32 %s303, 1
        %p305 = scmp.gt.s32.totalorder %s304, 0
        %s306 = scalar_select %p305, %s304, 0
      $region36: #{double_conv.3} parent=27 // pred_fallthru
        _
      // Predicated region
      $region37: #{double_conv.3} parent=27 // pred_check
        %p307 = pneg %p120
      $region38: #{double_conv.3} parent=27 // pred_check_branch
        %309 = sbr.rel (%p307) target = $region40
      $region39: #{double_conv.3} parent=27 // pred_region
        %s310 = sadd.s32 %s22, 1
        %s311 = smul.u32 %s310, 8
        %p312 = scmp.lt.s32.totalorder %s311, 15
        %s313 = scalar_select %p312, %s311, 15
        %p314 = scmp.lt.s32.totalorder %s21, 1
        %s315 = scalar_select %p314, %s21, 1
        %p316 = scmp.lt.s32.totalorder %s313, 15
        %s317 = scalar_select %p316, %s313, 15
        %s318 = smul.addr %s317, 2
        %s319 = smul.addr %s315, 32
        %s320 = sadd.s32 %s318, %s319
        %s321 = smul.addr %s320, 4
        %s322 = scalar_lea.vmem %s2, %s321
        %s323 = sadd.s32 %s22, 1
        %s324 = smul.u32 %s323, 8
        %p325 = scmp.lt.s32.totalorder %s324, 15
        %s326 = scalar_select %p325, %s324, 15
      $region40: #{double_conv.3} parent=27 // pred_fallthru
        _
    $region28: #{double_conv.3} parent=5 // pred_fallthru
      _
    %p327 = scmp.le.s32.totalorder 1, %s14
    %p328 = scmp.lt.s32.totalorder %s14, 5
    %p329 = pnand %p327, %p328
    %p330 = pneg %p329
    // Predicated region
    $region41: #{double_conv.3} parent=5 // pred_check
      _
    $region42: #{double_conv.3} parent=5 // pred_check_branch
      %332 = sbr.rel (%p329) target = $region44
    $region43: #{double_conv.3} parent=5 // pred_region
      %s333 = ssub.s32 %s14, 1
      %s334 = smul.u32 8, %s24
      %p335 = scmp.lt.s32.totalorder %s23, 1
      %s336 = scalar_select %p335, %s23, 1
      %p337 = scmp.lt.s32.totalorder %s334, 15
      %s338 = scalar_select %p337, %s334, 15
      %s339 = smul.addr %s338, 2
      %s340 = smul.addr %s336, 32
      %s341 = sadd.s32 %s339, %s340
      %s342 = smul.addr %s341, 4
      %s343 = scalar_lea.vmem %s0, %s342
      %p344 = pneg %p54
      %p345 = pneg %p51
      %s346 = smul.u32 %s24, 8
      %s347 = ssub.s32 %s346, 1
      %p348 = scmp.gt.s32.totalorder %s347, 0
      %s349 = scalar_select %p348, %s347, 0
      %p350 = scmp.lt.s32.totalorder %s23, 1
      %s351 = scalar_select %p350, %s23, 1
      %p352 = scmp.lt.s32.totalorder %s349, 15
      %s353 = scalar_select %p352, %s349, 15
      %s354 = smul.addr %s353, 2
      %s355 = smul.addr %s351, 32
      %s356 = sadd.s32 %s354, %s355
      %s357 = smul.addr %s356, 4
      %s358 = scalar_lea.vmem %s1, %s357
      %p359 = pneg %p90
      %p360 = pneg %p87
      %s361 = sadd.s32 %s24, 1
      %s362 = smul.u32 %s361, 8
      %p363 = scmp.lt.s32.totalorder %s362, 15
      %s364 = scalar_select %p363, %s362, 15
      %p365 = scmp.lt.s32.totalorder %s23, 1
      %s366 = scalar_select %p365, %s23, 1
      %p367 = scmp.lt.s32.totalorder %s364, 15
      %s368 = scalar_select %p367, %s364, 15
      %s369 = smul.addr %s368, 2
      %s370 = smul.addr %s366, 32
      %s371 = sadd.s32 %s369, %s370
      %s372 = smul.addr %s371, 4
      %s373 = scalar_lea.vmem %s2, %s372
      %p374 = pneg %p126
      %p375 = pneg %p123
      %p376 = pneg %p147
      %p377 = pneg %p144
      %p378 = pneg %p168
      %p379 = pneg %p165
      %p380 = pneg %p189
      %p381 = pneg %p186
      %p382 = pneg %p217
      %p383 = pneg %p214
      %s384 = smul.u32 8, %s24
      %p385 = scmp.lt.s32.totalorder %s23, 1
      %s386 = scalar_select %p385, %s23, 1
      %p387 = scmp.lt.s32.totalorder %s384, 15
      %s388 = scalar_select %p387, %s384, 15
      %s389 = smul.addr %s388, 2
      %s390 = smul.addr %s386, 32
      %s391 = sadd.s32 %s389, %s390
      %s392 = smul.addr %s391, 4
      %s393 = scalar_lea.vmem %s6, %s392
      %p394 = pneg %p245
      %p395 = pneg %p242
      %p396 = scmp.lt.s32.totalorder %s23, 1
      %s397 = scalar_select %p396, %s23, 1
      %p398 = scmp.lt.s32.totalorder %s24, 1
      %s399 = scalar_select %p398, %s24, 1
      %s400 = smul.addr %s397, 2
      %s401 = sadd.s32 %s399, %s400
      %s402 = smul.addr %s401, 2
      %s403 = scalar_lea.vmem %s7, %s402
      %s404 = smul.u32 8, %s24
      %p405 = scmp.lt.s32.totalorder %s23, 1
      %s406 = scalar_select %p405, %s23, 1
      %p407 = scmp.lt.s32.totalorder %s404, 15
      %s408 = scalar_select %p407, %s404, 15
      %s409 = smul.addr %s408, 2
      %s410 = smul.addr %s406, 32
      %s411 = sadd.s32 %s409, %s410
      %s412 = smul.addr %s411, 4
      %s413 = scalar_lea.vmem %s0, %s412
      %s414 = smul.u32 8, %s24
      %s415 = smul.u32 %s24, 8
      %s416 = ssub.s32 %s415, 1
      %p417 = scmp.gt.s32.totalorder %s416, 0
      %s418 = scalar_select %p417, %s416, 0
      %p419 = scmp.lt.s32.totalorder %s23, 1
      %s420 = scalar_select %p419, %s23, 1
      %p421 = scmp.lt.s32.totalorder %s418, 15
      %s422 = scalar_select %p421, %s418, 15
      %s423 = smul.addr %s422, 2
      %s424 = smul.addr %s420, 32
      %s425 = sadd.s32 %s423, %s424
      %s426 = smul.addr %s425, 4
      %s427 = scalar_lea.vmem %s1, %s426
      %s428 = smul.u32 %s24, 8
      %s429 = ssub.s32 %s428, 1
      %p430 = scmp.gt.s32.totalorder %s429, 0
      %s431 = scalar_select %p430, %s429, 0
      %s432 = sadd.s32 %s24, 1
      %s433 = smul.u32 %s432, 8
      %p434 = scmp.lt.s32.totalorder %s433, 15
      %s435 = scalar_select %p434, %s433, 15
      %p436 = scmp.lt.s32.totalorder %s23, 1
      %s437 = scalar_select %p436, %s23, 1
      %p438 = scmp.lt.s32.totalorder %s435, 15
      %s439 = scalar_select %p438, %s435, 15
      %s440 = smul.addr %s439, 2
      %s441 = smul.addr %s437, 32
      %s442 = sadd.s32 %s440, %s441
      %s443 = smul.addr %s442, 4
      %s444 = scalar_lea.vmem %s2, %s443
      %s445 = sadd.s32 %s24, 1
      %s446 = smul.u32 %s445, 8
      %p447 = scmp.lt.s32.totalorder %s446, 15
      %s448 = scalar_select %p447, %s446, 15
      %s449 = smul.u32 8, %s24
      %p450 = scmp.lt.s32.totalorder %s23, 1
      %s451 = scalar_select %p450, %s23, 1
      %p452 = scmp.lt.s32.totalorder %s449, 15
      %s453 = scalar_select %p452, %s449, 15
      %s454 = smul.addr %s453, 2
      %s455 = smul.addr %s451, 32
      %s456 = sadd.s32 %s454, %s455
      %s457 = smul.addr %s456, 4
      %s458 = scalar_lea.vmem %s6, %s457
      %s459 = smul.u32 8, %s24
      %p460 = scmp.lt.s32.totalorder %s23, 1
      %s461 = scalar_select %p460, %s23, 1
      %p462 = scmp.lt.s32.totalorder %s24, 1
      %s463 = scalar_select %p462, %s24, 1
      %s464 = smul.addr %s461, 2
      %s465 = sadd.s32 %s463, %s464
      %s466 = smul.addr %s465, 2
      %s467 = scalar_lea.vmem %s7, %s466
      %v469 = vld [vmem:[%s413] sm:$0xf]
      %v470 = vld [vmem:[%s413 + $0x4] sm:$0xf]
      %v471 = vld [vmem:[%s413 + $0x8] sm:$0xf]
      %v472 = vld [vmem:[%s413 + $0xc] sm:$0xf]
      %v473 = vld [vmem:[%s413 + $0x10] sm:$0xf]
      %v474 = vld [vmem:[%s413 + $0x14] sm:$0xf]
      %v475 = vld [vmem:[%s413 + $0x18] sm:$0xf]
      %v476 = vld [vmem:[%s413 + $0x1c] sm:$0xf]
      %v477 = vld [vmem:[%s413 + $0x20] sm:$0xf]
      %v478 = vld [vmem:[%s413 + $0x24] sm:$0xf]
      %v479 = vld [vmem:[%s413 + $0x28] sm:$0xf]
      %v480 = vld [vmem:[%s413 + $0x2c] sm:$0xf]
      %v481 = vld [vmem:[%s413 + $0x30] sm:$0xf]
      %v482 = vld [vmem:[%s413 + $0x34] sm:$0xf]
      %v483 = vld [vmem:[%s413 + $0x38] sm:$0xf]
      %v484 = vld [vmem:[%s413 + $0x3c] sm:$0xf]
      %v485 = vld [vmem:[%s427] sm:$0xf]
      %v486 = vld [vmem:[%s427 + $0x4] sm:$0xf]
      %v487 = vld [vmem:[%s444] sm:$0xf]
      %v488 = vld [vmem:[%s444 + $0x4] sm:$0xf]
      %p489 = scmp.eq.s32.totalorder %s24, 0
      %s490 = scalar_select %p489, 1, 0
      %v491 = vstv %s490
      %vm492 = vcmp.eq.s32.totalorder %v491, 1
      %v493 = vsel %vm492, 0, %v485
      %v494 = vsel %vm492, 0, %v486
      %p495 = scmp.eq.s32.totalorder %s24, 1
      %s496 = scalar_select %p495, 1, 0
      %v497 = vstv %s496
      %vm498 = vcmp.eq.s32.totalorder %v497, 1
      %v499 = vsel %vm498, 0, %v487
      %v500 = vsel %vm498, 0, %v488
      %v521 = vunpack.c.l.b16 %v493
      %v522 = vunpack.c.l.b16 %v494
      %v523 = vunpack.c.l.b16 %v469
      %v524 = vunpack.c.l.b16 %v470
      %v525 = vunpack.c.l.b16 %v471
      %v526 = vunpack.c.l.b16 %v472
      %v527 = vunpack.c.l.b16 %v473
      %v528 = vunpack.c.l.b16 %v474
      %v529 = vunpack.c.l.b16 %v475
      %v530 = vunpack.c.l.b16 %v476
      %v531 = vunpack.c.l.b16 %v477
      %v532 = vunpack.c.l.b16 %v478
      %v533 = vunpack.c.l.b16 %v479
      %v534 = vunpack.c.l.b16 %v480
      %v535 = vunpack.c.l.b16 %v481
      %v536 = vunpack.c.l.b16 %v482
      %v537 = vunpack.c.l.b16 %v483
      %v538 = vunpack.c.l.b16 %v484
      %v539 = vunpack.c.l.b16 %v499
      %v540 = vunpack.c.l.b16 %v500
      %v541 = vpack.c.b16 %v522, %v521
      %v542 = vpack.c.b16 %v524, %v523
      %v543 = vpack.c.b16 %v526, %v525
      %v544 = vpack.c.b16 %v528, %v527
      %v545 = vpack.c.b16 %v530, %v529
      %v546 = vpack.c.b16 %v532, %v531
      %v547 = vpack.c.b16 %v534, %v533
      %v548 = vpack.c.b16 %v536, %v535
      %v549 = vpack.c.b16 %v538, %v537
      %v550 = vpack.c.b16 %v540, %v539
      %v552 = vshrl.u32 %v541, 16
      %v554 = vrot.slane %v552, 7
      %v555 = vshll.u32 %v541, 16
      %v557 = vor.u32 %v554, %v555
      %v559 = vshrl.u32 %v542, 16
      %v561 = vrot.slane %v559, 7
      %v562 = vshll.u32 %v542, 16
      %v564 = vor.u32 %v561, %v562
      %v566 = vshrl.u32 %v543, 16
      %v568 = vrot.slane %v566, 7
      %v569 = vshll.u32 %v543, 16
      %v571 = vor.u32 %v568, %v569
      %v573 = vshrl.u32 %v544, 16
      %v575 = vrot.slane %v573, 7
      %v576 = vshll.u32 %v544, 16
      %v578 = vor.u32 %v575, %v576
      %v580 = vshrl.u32 %v545, 16
      %v582 = vrot.slane %v580, 7
      %v583 = vshll.u32 %v545, 16
      %v585 = vor.u32 %v582, %v583
      %v587 = vshrl.u32 %v546, 16
      %v589 = vrot.slane %v587, 7
      %v590 = vshll.u32 %v546, 16
      %v592 = vor.u32 %v589, %v590
      %v594 = vshrl.u32 %v547, 16
      %v596 = vrot.slane %v594, 7
      %v597 = vshll.u32 %v547, 16
      %v599 = vor.u32 %v596, %v597
      %v601 = vshrl.u32 %v548, 16
      %v603 = vrot.slane %v601, 7
      %v604 = vshll.u32 %v548, 16
      %v606 = vor.u32 %v603, %v604
      %v608 = vshrl.u32 %v549, 16
      %v610 = vrot.slane %v608, 7
      %v611 = vshll.u32 %v549, 16
      %v613 = vor.u32 %v610, %v611
      %v615 = vshrl.u32 %v550, 16
      %v617 = vrot.slane %v615, 7
      %v618 = vshll.u32 %v550, 16
      %v620 = vor.u32 %v617, %v618
      %vm641 = vcmask 1040384
      %vm642 = vsmask.f32 256
      %vm643 = vmand %vm641, %vm642
      %v644 = vsel %vm643, 0, %v557
      %v645 = vsel %vm643, 0, %v564
      %v646 = vsel %vm643, 0, %v571
      %v647 = vsel %vm643, 0, %v578
      %v648 = vsel %vm643, 0, %v585
      %v649 = vsel %vm643, 0, %v592
      %v650 = vsel %vm643, 0, %v599
      %v651 = vsel %vm643, 0, %v606
      %v652 = vsel %vm643, 0, %v613
      %v653 = vsel %vm643, 0, %v620
      %v654 = vsel %vm643, %v554, 0
      %v655 = vsel %vm643, %v561, 0
      %v656 = vsel %vm643, %v568, 0
      %v657 = vsel %vm643, %v575, 0
      %v658 = vsel %vm643, %v582, 0
      %v659 = vsel %vm643, %v589, 0
      %v660 = vsel %vm643, %v596, 0
      %v661 = vsel %vm643, %v603, 0
      %v662 = vsel %vm643, %v610, 0
      %v663 = vsel %vm643, %v617, 0
      %vm664 = vsmask.f32 7424
      %v666 = vshrl.u32 %v644, 16
      %v668 = vshll.u32 %v644, 16
      %v670 = vrot.slane %v668, 1
      %v671 = vor.u32 %v666, %v670
      %v673 = vshll.u32 %v654, 16
      %v675 = vrot.slane %v673, 1
      %v676 = vsel %vm664, %v671, %v675
      %v678 = vshrl.u32 %v645, 16
      %v680 = vshll.u32 %v645, 16
      %v682 = vrot.slane %v680, 1
      %v683 = vor.u32 %v678, %v682
      %v685 = vshll.u32 %v655, 16
      %v687 = vrot.slane %v685, 1
      %v688 = vsel %vm664, %v683, %v687
      %v690 = vshrl.u32 %v646, 16
      %v692 = vshll.u32 %v646, 16
      %v694 = vrot.slane %v692, 1
      %v695 = vor.u32 %v690, %v694
      %v697 = vshll.u32 %v656, 16
      %v699 = vrot.slane %v697, 1
      %v700 = vsel %vm664, %v695, %v699
      %v702 = vshrl.u32 %v647, 16
      %v704 = vshll.u32 %v647, 16
      %v706 = vrot.slane %v704, 1
      %v707 = vor.u32 %v702, %v706
      %v709 = vshll.u32 %v657, 16
      %v711 = vrot.slane %v709, 1
      %v712 = vsel %vm664, %v707, %v711
      %v714 = vshrl.u32 %v648, 16
      %v716 = vshll.u32 %v648, 16
      %v718 = vrot.slane %v716, 1
      %v719 = vor.u32 %v714, %v718
      %v721 = vshll.u32 %v658, 16
      %v723 = vrot.slane %v721, 1
      %v724 = vsel %vm664, %v719, %v723
      %v726 = vshrl.u32 %v649, 16
      %v728 = vshll.u32 %v649, 16
      %v730 = vrot.slane %v728, 1
      %v731 = vor.u32 %v726, %v730
      %v733 = vshll.u32 %v659, 16
      %v735 = vrot.slane %v733, 1
      %v736 = vsel %vm664, %v731, %v735
      %v738 = vshrl.u32 %v650, 16
      %v740 = vshll.u32 %v650, 16
      %v742 = vrot.slane %v740, 1
      %v743 = vor.u32 %v738, %v742
      %v745 = vshll.u32 %v660, 16
      %v747 = vrot.slane %v745, 1
      %v748 = vsel %vm664, %v743, %v747
      %v750 = vshrl.u32 %v651, 16
      %v752 = vshll.u32 %v651, 16
      %v754 = vrot.slane %v752, 1
      %v755 = vor.u32 %v750, %v754
      %v757 = vshll.u32 %v661, 16
      %v759 = vrot.slane %v757, 1
      %v760 = vsel %vm664, %v755, %v759
      %v762 = vshrl.u32 %v652, 16
      %v764 = vshll.u32 %v652, 16
      %v766 = vrot.slane %v764, 1
      %v767 = vor.u32 %v762, %v766
      %v769 = vshll.u32 %v662, 16
      %v771 = vrot.slane %v769, 1
      %v772 = vsel %vm664, %v767, %v771
      %v774 = vshrl.u32 %v653, 16
      %v776 = vshll.u32 %v653, 16
      %v778 = vrot.slane %v776, 1
      %v779 = vor.u32 %v774, %v778
      %v781 = vshll.u32 %v663, 16
      %v783 = vrot.slane %v781, 1
      %v784 = vsel %vm664, %v779, %v783
      %785 = vrot.lane.b32.xlu0 %v676, 4
      %v786 = vpop.permute.xlu0 %785
      %787 = vrot.lane.b32.xlu0 %v688, 4
      %v788 = vpop.permute.xlu0 %787
      %789 = vrot.lane.b32.xlu0 %v700, 4
      %v790 = vpop.permute.xlu0 %789
      %791 = vrot.lane.b32.xlu0 %v712, 4
      %v792 = vpop.permute.xlu0 %791
      %793 = vrot.lane.b32.xlu0 %v724, 4
      %v794 = vpop.permute.xlu0 %793
      %795 = vrot.lane.b32.xlu0 %v736, 4
      %v796 = vpop.permute.xlu0 %795
      %797 = vrot.lane.b32.xlu0 %v748, 4
      %v798 = vpop.permute.xlu0 %797
      %799 = vrot.lane.b32.xlu0 %v760, 4
      %v800 = vpop.permute.xlu0 %799
      %801 = vrot.lane.b32.xlu0 %v772, 4
      %v802 = vpop.permute.xlu0 %801
      %803 = vrot.lane.b32.xlu0 %v784, 4
      %v804 = vpop.permute.xlu0 %803
      %vm825 = vcmask 1046528
      %v826 = vrot.slane %v644, 1
      %v827 = vrot.slane %v654, 1
      %v828 = vsel %vm825, %v826, %v827
      %v829 = vrot.slane %v645, 1
      %v830 = vrot.slane %v655, 1
      %v831 = vsel %vm825, %v829, %v830
      %v832 = vrot.slane %v646, 1
      %v833 = vrot.slane %v656, 1
      %v834 = vsel %vm825, %v832, %v833
      %v835 = vrot.slane %v647, 1
      %v836 = vrot.slane %v657, 1
      %v837 = vsel %vm825, %v835, %v836
      %v838 = vrot.slane %v648, 1
      %v839 = vrot.slane %v658, 1
      %v840 = vsel %vm825, %v838, %v839
      %v841 = vrot.slane %v649, 1
      %v842 = vrot.slane %v659, 1
      %v843 = vsel %vm825, %v841, %v842
      %v844 = vrot.slane %v650, 1
      %v845 = vrot.slane %v660, 1
      %v846 = vsel %vm825, %v844, %v845
      %v847 = vrot.slane %v651, 1
      %v848 = vrot.slane %v661, 1
      %v849 = vsel %vm825, %v847, %v848
      %v850 = vrot.slane %v652, 1
      %v851 = vrot.slane %v662, 1
      %v852 = vsel %vm825, %v850, %v851
      %v853 = vrot.slane %v653, 1
      %v854 = vrot.slane %v663, 1
      %v855 = vsel %vm825, %v853, %v854
      %856 = vrot.lane.b32.xlu0 %v828, 8
      %v857 = vpop.permute.xlu0 %856
      %858 = vrot.lane.b32.xlu0 %v831, 8
      %v859 = vpop.permute.xlu0 %858
      %860 = vrot.lane.b32.xlu0 %v834, 8
      %v861 = vpop.permute.xlu0 %860
      %862 = vrot.lane.b32.xlu0 %v837, 8
      %v863 = vpop.permute.xlu0 %862
      %864 = vrot.lane.b32.xlu0 %v840, 8
      %v865 = vpop.permute.xlu0 %864
      %866 = vrot.lane.b32.xlu0 %v843, 8
      %v867 = vpop.permute.xlu0 %866
      %868 = vrot.lane.b32.xlu0 %v846, 8
      %v869 = vpop.permute.xlu0 %868
      %870 = vrot.lane.b32.xlu0 %v849, 8
      %v871 = vpop.permute.xlu0 %870
      %872 = vrot.lane.b32.xlu0 %v852, 8
      %v873 = vpop.permute.xlu0 %872
      %874 = vrot.lane.b32.xlu0 %v855, 8
      %v875 = vpop.permute.xlu0 %874
      %vm876 = vcmask 31744
      %v878 = vsel %vm876, %v644, %v786
      %v880 = vsel %vm876, %v645, %v788
      %v882 = vsel %vm876, %v646, %v790
      %v884 = vsel %vm876, %v647, %v792
      %v886 = vsel %vm876, %v648, %v794
      %v888 = vsel %vm876, %v649, %v796
      %v890 = vsel %vm876, %v650, %v798
      %v892 = vsel %vm876, %v651, %v800
      %v894 = vsel %vm876, %v652, %v802
      %v896 = vsel %vm876, %v653, %v804
      %vm897 = vcmask 64512
      %v899 = vsel %vm897, %v878, %v857
      %v901 = vsel %vm897, %v880, %v859
      %v903 = vsel %vm897, %v882, %v861
      %v905 = vsel %vm897, %v884, %v863
      %v907 = vsel %vm897, %v886, %v865
      %v909 = vsel %vm897, %v888, %v867
      %v911 = vsel %vm897, %v890, %v869
      %v913 = vsel %vm897, %v892, %v871
      %v915 = vsel %vm897, %v894, %v873
      %v917 = vsel %vm897, %v896, %v875
      %926 = vrot.lane.b32.xlu0 %v901, 12
      %v927 = vpop.permute.xlu0 %926
      %928 = vrot.lane.b32.xlu0 %v903, 12
      %v929 = vpop.permute.xlu0 %928
      %930 = vrot.lane.b32.xlu0 %v905, 12
      %v931 = vpop.permute.xlu0 %930
      %932 = vrot.lane.b32.xlu0 %v907, 12
      %v933 = vpop.permute.xlu0 %932
      %934 = vrot.lane.b32.xlu0 %v909, 12
      %v935 = vpop.permute.xlu0 %934
      %936 = vrot.lane.b32.xlu0 %v911, 12
      %v937 = vpop.permute.xlu0 %936
      %938 = vrot.lane.b32.xlu0 %v913, 12
      %v939 = vpop.permute.xlu0 %938
      %940 = vrot.lane.b32.xlu0 %v915, 12
      %v941 = vpop.permute.xlu0 %940
      %943 = vrot.lane.b32.xlu0 %v903, 24
      %v944 = vpop.permute.xlu0 %943
      %945 = vrot.lane.b32.xlu0 %v905, 24
      %v946 = vpop.permute.xlu0 %945
      %947 = vrot.lane.b32.xlu0 %v907, 24
      %v948 = vpop.permute.xlu0 %947
      %949 = vrot.lane.b32.xlu0 %v909, 24
      %v950 = vpop.permute.xlu0 %949
      %951 = vrot.lane.b32.xlu0 %v911, 24
      %v952 = vpop.permute.xlu0 %951
      %953 = vrot.lane.b32.xlu0 %v913, 24
      %v954 = vpop.permute.xlu0 %953
      %955 = vrot.lane.b32.xlu0 %v915, 24
      %v956 = vpop.permute.xlu0 %955
      %957 = vrot.lane.b32.xlu0 %v917, 24
      %v958 = vpop.permute.xlu0 %957
      %vm959 = vcmask 97280
      %v961 = vsel %vm959, %v899, %v927
      %v963 = vsel %vm959, %v901, %v929
      %v965 = vsel %vm959, %v903, %v931
      %v967 = vsel %vm959, %v905, %v933
      %v969 = vsel %vm959, %v907, %v935
      %v971 = vsel %vm959, %v909, %v937
      %v973 = vsel %vm959, %v911, %v939
      %v975 = vsel %vm959, %v913, %v941
      %vm976 = vcmask 195584
      %v978 = vsel %vm976, %v961, %v944
      %v980 = vsel %vm976, %v963, %v946
      %v982 = vsel %vm976, %v965, %v948
      %v984 = vsel %vm976, %v967, %v950
      %v986 = vsel %vm976, %v969, %v952
      %v988 = vsel %vm976, %v971, %v954
      %v990 = vsel %vm976, %v973, %v956
      %v992 = vsel %vm976, %v975, %v958
      %v993 = vld [vmem:[%s5] sm:$0xf]
      %v994 = vld [vmem:[%s5 + $0x4] sm:$0xf]
      %v995 = vld [vmem:[%s5 + $0x8] sm:$0xf]
      %v996 = vld [vmem:[%s5 + $0xc] sm:$0xf]
      %v997 = vld [vmem:[%s5 + $0x10] sm:$0x3]
      %v1003 = vunpack.c.l.b16 %v993
      %v1004 = vunpack.c.l.b16 %v994
      %v1005 = vunpack.c.l.b16 %v995
      %v1006 = vunpack.c.l.b16 %v996
      %v1007 = vunpack.c.l.b16 %v997
      %v1008 = vpack.c.b16 %v1004, %v1003
      %v1009 = vpack.c.b16 %v1006, %v1005
      %v1010 = vpack.c.b16 %v1007, %v1007
      %vm1013 = vcmask 293888
      %v1014 = vsel %vm1013, %v978, 0
      %v1016 = vsel %vm1013, %v980, 0
      %v1018 = vsel %vm1013, %v982, 0
      %v1020 = vsel %vm1013, %v984, 0
      %v1022 = vsel %vm1013, %v986, 0
      %v1024 = vsel %vm1013, %v988, 0
      %v1026 = vsel %vm1013, %v990, 0
      %v1028 = vsel %vm1013, %v992, 0
      %vm1030 = vcmask 1041408
      %v1032 = vsel %vm1030, %v1010, 0
      %1034 = vmatpush.bf16.msra.mxu0 0
      %1035 = vmatpush.bf16.msra.mxu0 0
      %1036 = vmatpush.bf16.msra.mxu0 0
      %1037 = vmatpush.bf16.msra.mxu0 0
      %1038 = vmatpush.bf16.msra.mxu0 0
      %1039 = vmatpush.bf16.msra.mxu0 %v1032
      %1040 = vmatpush.bf16.msra.mxu0 %v1009
      %1041 = vmatpush.bf16.msra.mxu0 %v1008
      %1042 = vmatmul.bf16.gmra.mxu0 %v1014
      %v1043 = vpop.f32.mrf.mxu0
      %v1044 = vadd.f32 0.0, %v1043
      %v1045 = vpop.f32.mrf.mxu0
      %v1046 = vadd.f32 0.0, %v1045
      %1047 = vmatmul.bf16.gmra.mxu0 %v1016
      %v1048 = vpop.f32.mrf.mxu0
      %v1049 = vadd.f32 0.0, %v1048
      %v1050 = vpop.f32.mrf.mxu0
      %v1051 = vadd.f32 0.0, %v1050
      %1052 = vmatmul.bf16.gmra.mxu0 %v1018
      %v1053 = vpop.f32.mrf.mxu0
      %v1054 = vadd.f32 0.0, %v1053
      %v1055 = vpop.f32.mrf.mxu0
      %v1056 = vadd.f32 0.0, %v1055
      %1057 = vmatmul.bf16.gmra.mxu0 %v1020
      %v1058 = vpop.f32.mrf.mxu0
      %v1059 = vadd.f32 0.0, %v1058
      %v1060 = vpop.f32.mrf.mxu0
      %v1061 = vadd.f32 0.0, %v1060
      %1062 = vmatmul.bf16.gmra.mxu0 %v1022
      %v1063 = vpop.f32.mrf.mxu0
      %v1064 = vadd.f32 0.0, %v1063
      %v1065 = vpop.f32.mrf.mxu0
      %v1066 = vadd.f32 0.0, %v1065
      %1067 = vmatmul.bf16.gmra.mxu0 %v1024
      %v1068 = vpop.f32.mrf.mxu0
      %v1069 = vadd.f32 0.0, %v1068
      %v1070 = vpop.f32.mrf.mxu0
      %v1071 = vadd.f32 0.0, %v1070
      %1072 = vmatmul.bf16.gmra.mxu0 %v1026
      %v1073 = vpop.f32.mrf.mxu0
      %v1074 = vadd.f32 0.0, %v1073
      %v1075 = vpop.f32.mrf.mxu0
      %v1076 = vadd.f32 0.0, %v1075
      %1077 = vmatmul.bf16.gmra.mxu0 %v1028
      %v1078 = vpop.f32.mrf.mxu0
      %v1079 = vadd.f32 0.0, %v1078
      %v1080 = vpop.f32.mrf.mxu0
      %v1081 = vadd.f32 0.0, %v1080
      %1082 = vdwg.mxu0
      %1083 = vmatpush.msra.mxu0 %v1081
      %1084 = vmatpush.msra.mxu0 %v1079
      %1085 = vmatpush.msra.mxu0 %v1076
      %1086 = vmatpush.msra.mxu0 %v1074
      %1087 = vmatpush.msra.mxu0 %v1071
      %1088 = vmatpush.msra.mxu0 %v1069
      %1089 = vmatpush.msra.mxu0 %v1066
      %1090 = vmatpush.msra.mxu0 %v1064
      %1091 = vmatpush.msra.mxu0 %v1061
      %1092 = vmatpush.msra.mxu0 %v1059
      %1093 = vmatpush.msra.mxu0 %v1056
      %1094 = vmatpush.msra.mxu0 %v1054
      %1095 = vmatpush.msra.mxu0 %v1051
      %1096 = vmatpush.msra.mxu0 %v1049
      %1097 = vmatpush.msra.mxu0 %v1046
      %1098 = vmatpush.msra.mxu0 %v1044
      %1099 = vmatmul.f32.gmra.mxu0 1.0
      %v1100 = vpop.f32.mrf.mxu0
      %v1101 = vadd.f32 0.0, %v1100
      %1102 = vdwg.mxu0
      %v1103 = vmul.f32 %v1044, %v1044
      %v1104 = vmul.f32 %v1046, %v1046
      %v1105 = vmul.f32 %v1049, %v1049
      %v1106 = vmul.f32 %v1051, %v1051
      %v1107 = vmul.f32 %v1054, %v1054
      %v1108 = vmul.f32 %v1056, %v1056
      %v1109 = vmul.f32 %v1059, %v1059
      %v1110 = vmul.f32 %v1061, %v1061
      %v1111 = vmul.f32 %v1064, %v1064
      %v1112 = vmul.f32 %v1066, %v1066
      %v1113 = vmul.f32 %v1069, %v1069
      %v1114 = vmul.f32 %v1071, %v1071
      %v1115 = vmul.f32 %v1074, %v1074
      %v1116 = vmul.f32 %v1076, %v1076
      %v1117 = vmul.f32 %v1079, %v1079
      %v1118 = vmul.f32 %v1081, %v1081
      %1119 = vmatpush.msra.mxu0 %v1118
      %1120 = vmatpush.msra.mxu0 %v1117
      %1121 = vmatpush.msra.mxu0 %v1116
      %1122 = vmatpush.msra.mxu0 %v1115
      %1123 = vmatpush.msra.mxu0 %v1114
      %1124 = vmatpush.msra.mxu0 %v1113
      %1125 = vmatpush.msra.mxu0 %v1112
      %1126 = vmatpush.msra.mxu0 %v1111
      %1127 = vmatpush.msra.mxu0 %v1110
      %1128 = vmatpush.msra.mxu0 %v1109
      %1129 = vmatpush.msra.mxu0 %v1108
      %1130 = vmatpush.msra.mxu0 %v1107
      %1131 = vmatpush.msra.mxu0 %v1106
      %1132 = vmatpush.msra.mxu0 %v1105
      %1133 = vmatpush.msra.mxu0 %v1104
      %1134 = vmatpush.msra.mxu0 %v1103
      %1135 = vmatmul.f32.gmra.mxu0 1.0
      %v1136 = vpop.f32.mrf.mxu0
      %v1137 = vadd.f32 0.0, %v1136
      %1138 = vdwg.mxu0
      %v1140 = vrot.slane %v1137, 7
      %vm1142 = vcmask 1040384
      %v1143 = vsel %vm1142, %v1101, %v1140
      %1144 = vst [vmem:[%s467] sm:$0x3] %v1143
      %v1145 = vpack.c.bf16 %v1044, %v1044
      %v1146 = vpack.c.bf16 %v1046, %v1046
      %v1147 = vpack.c.bf16 %v1049, %v1049
      %v1148 = vpack.c.bf16 %v1051, %v1051
      %v1149 = vpack.c.bf16 %v1054, %v1054
      %v1150 = vpack.c.bf16 %v1056, %v1056
      %v1151 = vpack.c.bf16 %v1059, %v1059
      %v1152 = vpack.c.bf16 %v1061, %v1061
      %v1153 = vpack.c.bf16 %v1064, %v1064
      %v1154 = vpack.c.bf16 %v1066, %v1066
      %v1155 = vpack.c.bf16 %v1069, %v1069
      %v1156 = vpack.c.bf16 %v1071, %v1071
      %v1157 = vpack.c.bf16 %v1074, %v1074
      %v1158 = vpack.c.bf16 %v1076, %v1076
      %v1159 = vpack.c.bf16 %v1079, %v1079
      %v1160 = vpack.c.bf16 %v1081, %v1081
      %1161 = vst [vmem:[%s458] sm:$0xf] %v1145
      %1162 = vst [vmem:[%s458 + $0x4] sm:$0xf] %v1146
      %1163 = vst [vmem:[%s458 + $0x8] sm:$0xf] %v1147
      %1164 = vst [vmem:[%s458 + $0xc] sm:$0xf] %v1148
      %1165 = vst [vmem:[%s458 + $0x10] sm:$0xf] %v1149
      %1166 = vst [vmem:[%s458 + $0x14] sm:$0xf] %v1150
      %1167 = vst [vmem:[%s458 + $0x18] sm:$0xf] %v1151
      %1168 = vst [vmem:[%s458 + $0x1c] sm:$0xf] %v1152
      %1169 = vst [vmem:[%s458 + $0x20] sm:$0xf] %v1153
      %1170 = vst [vmem:[%s458 + $0x24] sm:$0xf] %v1154
      %1171 = vst [vmem:[%s458 + $0x28] sm:$0xf] %v1155
      %1172 = vst [vmem:[%s458 + $0x2c] sm:$0xf] %v1156
      %1173 = vst [vmem:[%s458 + $0x30] sm:$0xf] %v1157
      %1174 = vst [vmem:[%s458 + $0x34] sm:$0xf] %v1158
      %1175 = vst [vmem:[%s458 + $0x38] sm:$0xf] %v1159
      %1176 = vst [vmem:[%s458 + $0x3c] sm:$0xf] %v1160
      %s1177 = smul.u32 8, %s24
      %p1178 = scmp.lt.s32.totalorder %s23, 1
      %s1179 = scalar_select %p1178, %s23, 1
      %p1180 = scmp.lt.s32.totalorder %s1177, 15
      %s1181 = scalar_select %p1180, %s1177, 15
      %s1182 = smul.addr %s1181, 2
      %s1183 = smul.addr %s1179, 32
      %s1184 = sadd.s32 %s1182, %s1183
      %s1185 = smul.addr %s1184, 4
      %s1186 = scalar_lea.vmem %s6, %s1185
      %p1187 = scmp.lt.s32.totalorder %s23, 1
      %s1188 = scalar_select %p1187, %s23, 1
      %p1189 = scmp.lt.s32.totalorder %s24, 1
      %s1190 = scalar_select %p1189, %s24, 1
      %s1191 = smul.addr %s1188, 2
      %s1192 = sadd.s32 %s1190, %s1191
      %s1193 = smul.addr %s1192, 2
      %s1194 = scalar_lea.vmem %s7, %s1193
      // Predicated region
      $region45: #{double_conv.3} parent=43 // pred_check
        %p1195 = pneg %p214
      $region46: #{double_conv.3} parent=43 // pred_check_branch
        %1197 = sbr.rel (%p1195) target = $region48
      $region47: #{double_conv.3} parent=43 // pred_region
        %s1198 = smul.u32 8, %s24
      $region48: #{double_conv.3} parent=43 // pred_fallthru
        _
      // Predicated region
      $region49: #{double_conv.3} parent=43 // pred_check
        %p1199 = pneg %p242
      $region50: #{double_conv.3} parent=43 // pred_check_branch
        %1201 = sbr.rel (%p1199) target = $region52
      $region51: #{double_conv.3} parent=43 // pred_region
        _
      $region52: #{double_conv.3} parent=43 // pred_fallthru
        _
    $region44: #{double_conv.3} parent=5 // pred_fallthru
      _
    %p1202 = scmp.le.s32.totalorder 2, %s14
    // Predicated region
    $region53: #{double_conv.3} parent=5 // pred_check
      %p1203 = pneg %p1202
    $region54: #{double_conv.3} parent=5 // pred_check_branch
      %1205 = sbr.rel (%p1203) target = $region56
    $region55: #{double_conv.3} parent=5 // pred_region
      %s1206 = ssub.s32 %s14, 2
      // Predicated region
      $region57: #{double_conv.3} parent=55 // pred_check
        %p1207 = pneg %p220
      $region58: #{double_conv.3} parent=55 // pred_check_branch
        %1209 = sbr.rel (%p1207) target = $region60
      $region59: #{double_conv.3} parent=55 // pred_region
        %s1210 = smul.u32 8, %s26
        %p1211 = scmp.lt.s32.totalorder %s25, 1
        %s1212 = scalar_select %p1211, %s25, 1
        %p1213 = scmp.lt.s32.totalorder %s1210, 15
        %s1214 = scalar_select %p1213, %s1210, 15
        %s1215 = smul.addr %s1214, 2
        %s1216 = smul.addr %s1212, 32
        %s1217 = sadd.s32 %s1215, %s1216
        %s1218 = smul.addr %s1217, 4
        %s1219 = scalar_lea.vmem %s6, %s1218
      $region60: #{double_conv.3} parent=55 // pred_fallthru
        _
      // Predicated region
      $region61: #{double_conv.3} parent=55 // pred_check
        %p1220 = pneg %p248
      $region62: #{double_conv.3} parent=55 // pred_check_branch
        %1222 = sbr.rel (%p1220) target = $region64
      $region63: #{double_conv.3} parent=55 // pred_region
        %p1223 = scmp.lt.s32.totalorder %s25, 1
        %s1224 = scalar_select %p1223, %s25, 1
        %p1225 = scmp.lt.s32.totalorder %s26, 1
        %s1226 = scalar_select %p1225, %s26, 1
        %s1227 = smul.addr %s1224, 2
        %s1228 = sadd.s32 %s1226, %s1227
        %s1229 = smul.addr %s1228, 2
        %s1230 = scalar_lea.vmem %s7, %s1229
      $region64: #{double_conv.3} parent=55 // pred_fallthru
        _
    $region56: #{double_conv.3} parent=5 // pred_fallthru
      _
  $region6: #{double_conv.3} parent=0 // loop_footer
    %s18 = sadd.s32 1, %s14
  $region7: #{double_conv.3} parent=0 // loop_footer_branch
    %13 = sbr.rel target = $region3
  $region8: #{double_conv.3} parent=0 // loop_exit
    _

// kernel: double_conv.4
$region0: #{double_conv.4}
  #allocation0 [shape = 'u32[]', space=smem, size = 0x4, offset = 0x4, fixed_abs, tag = 'smem constant byte address 0x4 - core index']
  #allocation1 [shape = 'u32[72,128]{1,0:T(1,128)}', space=vmem, size = 0x9000, scoped, tag = 'internal scratch']
  %s0 = inlined_call_operand.vmem [shape: bf16[2,16,16,128], index: 0, kind: input, shape index: {}, may-alias: {0,1,2}]
  %s1 = inlined_call_operand.vmem [shape: bf16[2,16,16,128], index: 1, kind: input, shape index: {}, may-alias: {0,1,2}]
  %s2 = inlined_call_operand.vmem [shape: bf16[2,16,16,128], index: 2, kind: input, shape index: {}, may-alias: {0,1,2}]
  %s3 = inlined_call_operand.vmem [shape: f32[1,128], index: 3, kind: input, shape index: {}]
  %s4 = inlined_call_operand.vmem [shape: f32[1,128], index: 4, kind: input, shape index: {}]
  %s5 = inlined_call_operand.vmem [shape: bf16[3,384,128], index: 5, kind: input, shape index: {}]
  %s6 = inlined_call_operand.vmem [shape: bf16[2,16,16,128], index: 6, kind: output, shape index: {0}]
  %s7 = inlined_call_operand.vmem [shape: f32[2,2,2,128], index: 7, kind: output, shape index: {1}]
  %8 = xla_tuple %s6, %s7
  %s9 = sld [smem:[#allocation0]]
  $region65: #{double_conv.4} parent=0
    _
  %s11 = ssub.s32 1, %s9
  %s12 = scalar_select 0, %s11, %s9
  loop: start=0, step=1, limit=6
  $region2: #{double_conv.4} parent=0 // loop_pre_header
    _
  $region3: #{double_conv.4} parent=0 // loop_header
    %s14 = sphi 0, %s18
    %p15 = scmp.ge.s32.totalorder %s14, 6
    %s21 = sphi 0, %s33
    %s22 = sphi 0, %s29
    %s23 = sphi 0, %s21
    %s24 = sphi 0, %s22
    %s25 = sphi 0, %s23
    %s26 = sphi 0, %s24
    %s38 = sphi 0, %s40
    %s41 = sphi 0, %s38
    %s42 = sphi 0, %s41
    %s58 = sphi 0, %s42
    %s74 = sphi 0, %s76
    %s77 = sphi 0, %s74
    %s78 = sphi 0, %s77
    %s94 = sphi 0, %s78
    %s110 = sphi 0, %s112
    %s113 = sphi 0, %s110
    %s114 = sphi 0, %s113
    %s130 = sphi 0, %s114
    %s134 = sphi 0, %s134
    %s136 = sphi 0, %s134
    %s137 = sphi 0, %s136
    %s151 = sphi 0, %s137
    %s155 = sphi 0, %s155
    %s157 = sphi 0, %s155
    %s158 = sphi 0, %s157
    %s172 = sphi 0, %s158
    %s176 = sphi 0, %s176
    %s178 = sphi 0, %s176
    %s179 = sphi 0, %s178
    %s193 = sphi 0, %s179
    %s201 = sphi 0, %s203
    %s204 = sphi 0, %s201
    %s205 = sphi 0, %s204
    %s221 = sphi 0, %s205
    %s229 = sphi 0, %s231
    %s232 = sphi 0, %s229
    %s233 = sphi 0, %s232
    %s249 = sphi 0, %s233
  $region4: #{double_conv.4} parent=0 // loop_header_branch
    %17 = sbr.rel (%p15) target = $region8
  $region5: #{double_conv.4} parent=0 // loop_body
    %s19 = ssub.s32 %s14, 1
    %s20 = ssub.s32 %s14, 2
    %s27 = sadd.s32 1, %s22
    %p28 = scmp.ge.s32.totalorder %s27, 2
    %s29 = scalar_select %p28, 0, %s27
    %s30 = sadd.s32 1, %s21
    %s31 = scalar_select %p28, %s30, %s21
    %p32 = scmp.ge.s32.totalorder %s31, 2
    %s33 = scalar_select %p32, 0, %s31
    %s34 = ssub.s32 %s21, %s33
    %s35 = ssub.s32 %s22, %s29
    %s36 = sor.u32 %s34, %s35
    %p37 = scmp.eq.s32.totalorder %s36, 0
    %s39 = sadd.s32 %s38, 1
    %s40 = scalar_select %p37, %s38, %s39
    %p43 = pneg %p37
    %p44 = scmp.eq.s32.totalorder %s14, 3
    %p45 = por %p43, %p44
    %p46 = scmp.ne.s32.totalorder %s38, %s41
    %p47 = scmp.eq.s32.totalorder %s14, 0
    %p48 = por %p46, %p47
    %p49 = scmp.ne.s32.totalorder %s38, %s41
    %p50 = scmp.eq.s32.totalorder %s19, 3
    %p51 = por %p49, %p50
    %p52 = scmp.ne.s32.totalorder %s41, %s42
    %p53 = scmp.eq.s32.totalorder %s19, 0
    %p54 = por %p52, %p53
    %p55 = scmp.ne.s32.totalorder %s41, %s42
    %p56 = scmp.eq.s32.totalorder %s20, 3
    %p57 = por %p55, %p56
    %p59 = scmp.ne.s32.totalorder %s42, %s58
    %p60 = scmp.eq.s32.totalorder %s20, 0
    %p61 = por %p59, %p60
    %s62 = smul.u32 %s22, 8
    %s63 = ssub.s32 %s62, 1
    %p64 = scmp.gt.s32.totalorder %s63, 0
    %s65 = scalar_select %p64, %s63, 0
    %s66 = smul.u32 %s29, 8
    %s67 = ssub.s32 %s66, 1
    %p68 = scmp.gt.s32.totalorder %s67, 0
    %s69 = scalar_select %p68, %s67, 0
    %s70 = ssub.s32 %s21, %s33
    %s71 = ssub.s32 %s65, %s69
    %s72 = sor.u32 %s70, %s71
    %p73 = scmp.eq.s32.totalorder %s72, 0
    %s75 = sadd.s32 %s74, 1
    %s76 = scalar_select %p73, %s74, %s75
    %p79 = pneg %p73
    %p80 = scmp.eq.s32.totalorder %s14, 3
    %p81 = por %p79, %p80
    %p82 = scmp.ne.s32.totalorder %s74, %s77
    %p83 = scmp.eq.s32.totalorder %s14, 0
    %p84 = por %p82, %p83
    %p85 = scmp.ne.s32.totalorder %s74, %s77
    %p86 = scmp.eq.s32.totalorder %s19, 3
    %p87 = por %p85, %p86
    %p88 = scmp.ne.s32.totalorder %s77, %s78
    %p89 = scmp.eq.s32.totalorder %s19, 0
    %p90 = por %p88, %p89
    %p91 = scmp.ne.s32.totalorder %s77, %s78
    %p92 = scmp.eq.s32.totalorder %s20, 3
    %p93 = por %p91, %p92
    %p95 = scmp.ne.s32.totalorder %s78, %s94
    %p96 = scmp.eq.s32.totalorder %s20, 0
    %p97 = por %p95, %p96
    %s98 = sadd.s32 %s22, 1
    %s99 = smul.u32 %s98, 8
    %p100 = scmp.lt.s32.totalorder %s99, 15
    %s101 = scalar_select %p100, %s99, 15
    %s102 = sadd.s32 %s29, 1
    %s103 = smul.u32 %s102, 8
    %p104 = scmp.lt.s32.totalorder %s103, 15
    %s105 = scalar_select %p104, %s103, 15
    %s106 = ssub.s32 %s21, %s33
    %s107 = ssub.s32 %s101, %s105
    %s108 = sor.u32 %s106, %s107
    %p109 = scmp.eq.s32.totalorder %s108, 0
    %s111 = sadd.s32 %s110, 1
    %s112 = scalar_select %p109, %s110, %s111
    %p115 = pneg %p109
    %p116 = scmp.eq.s32.totalorder %s14, 3
    %p117 = por %p115, %p116
    %p118 = scmp.ne.s32.totalorder %s110, %s113
    %p119 = scmp.eq.s32.totalorder %s14, 0
    %p120 = por %p118, %p119
    %p121 = scmp.ne.s32.totalorder %s110, %s113
    %p122 = scmp.eq.s32.totalorder %s19, 3
    %p123 = por %p121, %p122
    %p124 = scmp.ne.s32.totalorder %s113, %s114
    %p125 = scmp.eq.s32.totalorder %s19, 0
    %p126 = por %p124, %p125
    %p127 = scmp.ne.s32.totalorder %s113, %s114
    %p128 = scmp.eq.s32.totalorder %s20, 3
    %p129 = por %p127, %p128
    %p131 = scmp.ne.s32.totalorder %s114, %s130
    %p132 = scmp.eq.s32.totalorder %s20, 0
    %p133 = por %p131, %p132
    %s135 = sadd.s32 %s134, 1
    %p138 = scmp.eq.s32.totalorder %s14, 3
    %p139 = scmp.ne.s32.totalorder %s134, %s136
    %p140 = scmp.eq.s32.totalorder %s14, 0
    %p141 = por %p139, %p140
    %p142 = scmp.ne.s32.totalorder %s134, %s136
    %p143 = scmp.eq.s32.totalorder %s19, 3
    %p144 = por %p142, %p143
    %p145 = scmp.ne.s32.totalorder %s136, %s137
    %p146 = scmp.eq.s32.totalorder %s19, 0
    %p147 = por %p145, %p146
    %p148 = scmp.ne.s32.totalorder %s136, %s137
    %p149 = scmp.eq.s32.totalorder %s20, 3
    %p150 = por %p148, %p149
    %p152 = scmp.ne.s32.totalorder %s137, %s151
    %p153 = scmp.eq.s32.totalorder %s20, 0
    %p154 = por %p152, %p153
    %s156 = sadd.s32 %s155, 1
    %p159 = scmp.eq.s32.totalorder %s14, 3
    %p160 = scmp.ne.s32.totalorder %s155, %s157
    %p161 = scmp.eq.s32.totalorder %s14, 0
    %p162 = por %p160, %p161
    %p163 = scmp.ne.s32.totalorder %s155, %s157
    %p164 = scmp.eq.s32.totalorder %s19, 3
    %p165 = por %p163, %p164
    %p166 = scmp.ne.s32.totalorder %s157, %s158
    %p167 = scmp.eq.s32.totalorder %s19, 0
    %p168 = por %p166, %p167
    %p169 = scmp.ne.s32.totalorder %s157, %s158
    %p170 = scmp.eq.s32.totalorder %s20, 3
    %p171 = por %p169, %p170
    %p173 = scmp.ne.s32.totalorder %s158, %s172
    %p174 = scmp.eq.s32.totalorder %s20, 0
    %p175 = por %p173, %p174
    %s177 = sadd.s32 %s176, 1
    %p180 = scmp.eq.s32.totalorder %s14, 3
    %p181 = scmp.ne.s32.totalorder %s176, %s178
    %p182 = scmp.eq.s32.totalorder %s14, 0
    %p183 = por %p181, %p182
    %p184 = scmp.ne.s32.totalorder %s176, %s178
    %p185 = scmp.eq.s32.totalorder %s19, 3
    %p186 = por %p184, %p185
    %p187 = scmp.ne.s32.totalorder %s178, %s179
    %p188 = scmp.eq.s32.totalorder %s19, 0
    %p189 = por %p187, %p188
    %p190 = scmp.ne.s32.totalorder %s178, %s179
    %p191 = scmp.eq.s32.totalorder %s20, 3
    %p192 = por %p190, %p191
    %p194 = scmp.ne.s32.totalorder %s179, %s193
    %p195 = scmp.eq.s32.totalorder %s20, 0
    %p196 = por %p194, %p195
    %s197 = ssub.s32 %s21, %s33
    %s198 = ssub.s32 %s22, %s29
    %s199 = sor.u32 %s197, %s198
    %p200 = scmp.eq.s32.totalorder %s199, 0
    %s202 = sadd.s32 %s201, 1
    %s203 = scalar_select %p200, %s201, %s202
    %p206 = pneg %p200
    %p207 = scmp.eq.s32.totalorder %s14, 3
    %p208 = por %p206, %p207
    %p209 = scmp.ne.s32.totalorder %s201, %s204
    %p210 = scmp.eq.s32.totalorder %s14, 0
    %p211 = por %p209, %p210
    %p212 = scmp.ne.s32.totalorder %s201, %s204
    %p213 = scmp.eq.s32.totalorder %s19, 3
    %p214 = por %p212, %p213
    %p215 = scmp.ne.s32.totalorder %s204, %s205
    %p216 = scmp.eq.s32.totalorder %s19, 0
    %p217 = por %p215, %p216
    %p218 = scmp.ne.s32.totalorder %s204, %s205
    %p219 = scmp.eq.s32.totalorder %s20, 3
    %p220 = por %p218, %p219
    %p222 = scmp.ne.s32.totalorder %s205, %s221
    %p223 = scmp.eq.s32.totalorder %s20, 0
    %p224 = por %p222, %p223
    %s225 = ssub.s32 %s21, %s33
    %s226 = ssub.s32 %s22, %s29
    %s227 = sor.u32 %s225, %s226
    %p228 = scmp.eq.s32.totalorder %s227, 0
    %s230 = sadd.s32 %s229, 1
    %s231 = scalar_select %p228, %s229, %s230
    %p234 = pneg %p228
    %p235 = scmp.eq.s32.totalorder %s14, 3
    %p236 = por %p234, %p235
    %p237 = scmp.ne.s32.totalorder %s229, %s232
    %p238 = scmp.eq.s32.totalorder %s14, 0
    %p239 = por %p237, %p238
    %p240 = scmp.ne.s32.totalorder %s229, %s232
    %p241 = scmp.eq.s32.totalorder %s19, 3
    %p242 = por %p240, %p241
    %p243 = scmp.ne.s32.totalorder %s232, %s233
    %p244 = scmp.eq.s32.totalorder %s19, 0
    %p245 = por %p243, %p244
    %p246 = scmp.ne.s32.totalorder %s232, %s233
    %p247 = scmp.eq.s32.totalorder %s20, 3
    %p248 = por %p246, %p247
    %p250 = scmp.ne.s32.totalorder %s233, %s249
    %p251 = scmp.eq.s32.totalorder %s20, 0
    %p252 = por %p250, %p251
    %p253 = scmp.le.s32.totalorder 1, %s14
    %p254 = scmp.lt.s32.totalorder %s14, 5
    %p255 = pnand %p253, %p254
    %p256 = pneg %p255
    // Predicated region
    $region9: #{double_conv.4} parent=5 // pred_check
      _
    $region10: #{double_conv.4} parent=5 // pred_check_branch
      %258 = sbr.rel (%p255) target = $region12
    $region11: #{double_conv.4} parent=5 // pred_region
      %s259 = ssub.s32 %s14, 1
      // Predicated region
      $region13: #{double_conv.4} parent=11 // pred_check
        %p260 = pneg %p147
      $region14: #{double_conv.4} parent=11 // pred_check_branch
        %262 = sbr.rel (%p260) target = $region16
      $region15: #{double_conv.4} parent=11 // pred_region
        _
      $region16: #{double_conv.4} parent=11 // pred_fallthru
        _
      // Predicated region
      $region17: #{double_conv.4} parent=11 // pred_check
        %p263 = pneg %p168
      $region18: #{double_conv.4} parent=11 // pred_check_branch
        %265 = sbr.rel (%p263) target = $region20
      $region19: #{double_conv.4} parent=11 // pred_region
        _
      $region20: #{double_conv.4} parent=11 // pred_fallthru
        _
      // Predicated region
      $region21: #{double_conv.4} parent=11 // pred_check
        %p266 = pneg %p189
      $region22: #{double_conv.4} parent=11 // pred_check_branch
        %268 = sbr.rel (%p266) target = $region24
      $region23: #{double_conv.4} parent=11 // pred_region
        _
      $region24: #{double_conv.4} parent=11 // pred_fallthru
        _
    $region12: #{double_conv.4} parent=5 // pred_fallthru
      _
    %p269 = scmp.lt.s32.totalorder %s14, 4
    // Predicated region
    $region25: #{double_conv.4} parent=5 // pred_check
      %p270 = pneg %p269
    $region26: #{double_conv.4} parent=5 // pred_check_branch
      %272 = sbr.rel (%p270) target = $region28
    $region27: #{double_conv.4} parent=5 // pred_region
      // Predicated region
      $region29: #{double_conv.4} parent=27 // pred_check
        %p273 = pneg %p48
      $region30: #{double_conv.4} parent=27 // pred_check_branch
        %275 = sbr.rel (%p273) target = $region32
      $region31: #{double_conv.4} parent=27 // pred_region
        %s276 = smul.u32 8, %s22
        %p277 = scmp.lt.s32.totalorder %s21, 1
        %s278 = scalar_select %p277, %s21, 1
        %p279 = scmp.lt.s32.totalorder %s276, 15
        %s280 = scalar_select %p279, %s276, 15
        %s281 = smul.addr %s280, 2
        %s282 = smul.addr %s278, 32
        %s283 = sadd.s32 %s281, %s282
        %s284 = smul.addr %s283, 4
        %s285 = scalar_lea.vmem %s0, %s284
        %s286 = smul.u32 8, %s22
      $region32: #{double_conv.4} parent=27 // pred_fallthru
        _
      // Predicated region
      $region33: #{double_conv.4} parent=27 // pred_check
        %p287 = pneg %p84
      $region34: #{double_conv.4} parent=27 // pred_check_branch
        %289 = sbr.rel (%p287) target = $region36
      $region35: #{double_conv.4} parent=27 // pred_region
        %s290 = smul.u32 %s22, 8
        %s291 = ssub.s32 %s290, 1
        %p292 = scmp.gt.s32.totalorder %s291, 0
        %s293 = scalar_select %p292, %s291, 0
        %p294 = scmp.lt.s32.totalorder %s21, 1
        %s295 = scalar_select %p294, %s21, 1
        %p296 = scmp.lt.s32.totalorder %s293, 15
        %s297 = scalar_select %p296, %s293, 15
        %s298 = smul.addr %s297, 2
        %s299 = smul.addr %s295, 32
        %s300 = sadd.s32 %s298, %s299
        %s301 = smul.addr %s300, 4
        %s302 = scalar_lea.vmem %s1, %s301
        %s303 = smul.u32 %s22, 8
        %s304 = ssub.s32 %s303, 1
        %p305 = scmp.gt.s32.totalorder %s304, 0
        %s306 = scalar_select %p305, %s304, 0
      $region36: #{double_conv.4} parent=27 // pred_fallthru
        _
      // Predicated region
      $region37: #{double_conv.4} parent=27 // pred_check
        %p307 = pneg %p120
      $region38: #{double_conv.4} parent=27 // pred_check_branch
        %309 = sbr.rel (%p307) target = $region40
      $region39: #{double_conv.4} parent=27 // pred_region
        %s310 = sadd.s32 %s22, 1
        %s311 = smul.u32 %s310, 8
        %p312 = scmp.lt.s32.totalorder %s311, 15
        %s313 = scalar_select %p312, %s311, 15
        %p314 = scmp.lt.s32.totalorder %s21, 1
        %s315 = scalar_select %p314, %s21, 1
        %p316 = scmp.lt.s32.totalorder %s313, 15
        %s317 = scalar_select %p316, %s313, 15
        %s318 = smul.addr %s317, 2
        %s319 = smul.addr %s315, 32
        %s320 = sadd.s32 %s318, %s319
        %s321 = smul.addr %s320, 4
        %s322 = scalar_lea.vmem %s2, %s321
        %s323 = sadd.s32 %s22, 1
        %s324 = smul.u32 %s323, 8
        %p325 = scmp.lt.s32.totalorder %s324, 15
        %s326 = scalar_select %p325, %s324, 15
      $region40: #{double_conv.4} parent=27 // pred_fallthru
        _
    $region28: #{double_conv.4} parent=5 // pred_fallthru
      _
    %p327 = scmp.le.s32.totalorder 1, %s14
    %p328 = scmp.lt.s32.totalorder %s14, 5
    %p329 = pnand %p327, %p328
    %p330 = pneg %p329
    // Predicated region
    $region41: #{double_conv.4} parent=5 // pred_check
      _
    $region42: #{double_conv.4} parent=5 // pred_check_branch
      %332 = sbr.rel (%p329) target = $region44
    $region43: #{double_conv.4} parent=5 // pred_region
      %s333 = ssub.s32 %s14, 1
      %s334 = smul.u32 8, %s24
      %p335 = scmp.lt.s32.totalorder %s23, 1
      %s336 = scalar_select %p335, %s23, 1
      %p337 = scmp.lt.s32.totalorder %s334, 15
      %s338 = scalar_select %p337, %s334, 15
      %s339 = smul.addr %s338, 2
      %s340 = smul.addr %s336, 32
      %s341 = sadd.s32 %s339, %s340
      %s342 = smul.addr %s341, 4
      %s343 = scalar_lea.vmem %s0, %s342
      %p344 = pneg %p54
      %p345 = pneg %p51
      %s346 = smul.u32 %s24, 8
      %s347 = ssub.s32 %s346, 1
      %p348 = scmp.gt.s32.totalorder %s347, 0
      %s349 = scalar_select %p348, %s347, 0
      %p350 = scmp.lt.s32.totalorder %s23, 1
      %s351 = scalar_select %p350, %s23, 1
      %p352 = scmp.lt.s32.totalorder %s349, 15
      %s353 = scalar_select %p352, %s349, 15
      %s354 = smul.addr %s353, 2
      %s355 = smul.addr %s351, 32
      %s356 = sadd.s32 %s354, %s355
      %s357 = smul.addr %s356, 4
      %s358 = scalar_lea.vmem %s1, %s357
      %p359 = pneg %p90
      %p360 = pneg %p87
      %s361 = sadd.s32 %s24, 1
      %s362 = smul.u32 %s361, 8
      %p363 = scmp.lt.s32.totalorder %s362, 15
      %s364 = scalar_select %p363, %s362, 15
      %p365 = scmp.lt.s32.totalorder %s23, 1
      %s366 = scalar_select %p365, %s23, 1
      %p367 = scmp.lt.s32.totalorder %s364, 15
      %s368 = scalar_select %p367, %s364, 15
      %s369 = smul.addr %s368, 2
      %s370 = smul.addr %s366, 32
      %s371 = sadd.s32 %s369, %s370
      %s372 = smul.addr %s371, 4
      %s373 = scalar_lea.vmem %s2, %s372
      %p374 = pneg %p126
      %p375 = pneg %p123
      %p376 = pneg %p147
      %p377 = pneg %p144
      %p378 = pneg %p168
      %p379 = pneg %p165
      %p380 = pneg %p189
      %p381 = pneg %p186
      %p382 = pneg %p217
      %p383 = pneg %p214
      %s384 = smul.u32 8, %s24
      %p385 = scmp.lt.s32.totalorder %s23, 1
      %s386 = scalar_select %p385, %s23, 1
      %p387 = scmp.lt.s32.totalorder %s384, 15
      %s388 = scalar_select %p387, %s384, 15
      %s389 = smul.addr %s388, 2
      %s390 = smul.addr %s386, 32
      %s391 = sadd.s32 %s389, %s390
      %s392 = smul.addr %s391, 4
      %s393 = scalar_lea.vmem %s6, %s392
      %p394 = pneg %p245
      %p395 = pneg %p242
      %p396 = scmp.lt.s32.totalorder %s23, 1
      %s397 = scalar_select %p396, %s23, 1
      %p398 = scmp.lt.s32.totalorder %s24, 1
      %s399 = scalar_select %p398, %s24, 1
      %s400 = smul.addr %s397, 2
      %s401 = sadd.s32 %s399, %s400
      %s402 = smul.addr %s401, 2
      %s403 = scalar_lea.vmem %s7, %s402
      %s404 = smul.u32 8, %s24
      %p405 = scmp.lt.s32.totalorder %s23, 1
      %s406 = scalar_select %p405, %s23, 1
      %p407 = scmp.lt.s32.totalorder %s404, 15
      %s408 = scalar_select %p407, %s404, 15
      %s409 = smul.addr %s408, 2
      %s410 = smul.addr %s406, 32
      %s411 = sadd.s32 %s409, %s410
      %s412 = smul.addr %s411, 4
      %s413 = scalar_lea.vmem %s0, %s412
      %s414 = smul.u32 8, %s24
      %s415 = smul.u32 %s24, 8
      %s416 = ssub.s32 %s415, 1
      %p417 = scmp.gt.s32.totalorder %s416, 0
      %s418 = scalar_select %p417, %s416, 0
      %p419 = scmp.lt.s32.totalorder %s23, 1
      %s420 = scalar_select %p419, %s23, 1
      %p421 = scmp.lt.s32.totalorder %s418, 15
      %s422 = scalar_select %p421, %s418, 15
      %s423 = smul.addr %s422, 2
      %s424 = smul.addr %s420, 32
      %s425 = sadd.s32 %s423, %s424
      %s426 = smul.addr %s425, 4
      %s427 = scalar_lea.vmem %s1, %s426
      %s428 = smul.u32 %s24, 8
      %s429 = ssub.s32 %s428, 1
      %p430 = scmp.gt.s32.totalorder %s429, 0
      %s431 = scalar_select %p430, %s429, 0
      %s432 = sadd.s32 %s24, 1
      %s433 = smul.u32 %s432, 8
      %p434 = scmp.lt.s32.totalorder %s433, 15
      %s435 = scalar_select %p434, %s433, 15
      %p436 = scmp.lt.s32.totalorder %s23, 1
      %s437 = scalar_select %p436, %s23, 1
      %p438 = scmp.lt.s32.totalorder %s435, 15
      %s439 = scalar_select %p438, %s435, 15
      %s440 = smul.addr %s439, 2
      %s441 = smul.addr %s437, 32
      %s442 = sadd.s32 %s440, %s441
      %s443 = smul.addr %s442, 4
      %s444 = scalar_lea.vmem %s2, %s443
      %s445 = sadd.s32 %s24, 1
      %s446 = smul.u32 %s445, 8
      %p447 = scmp.lt.s32.totalorder %s446, 15
      %s448 = scalar_select %p447, %s446, 15
      %s449 = smul.u32 8, %s24
      %p450 = scmp.lt.s32.totalorder %s23, 1
      %s451 = scalar_select %p450, %s23, 1
      %p452 = scmp.lt.s32.totalorder %s449, 15
      %s453 = scalar_select %p452, %s449, 15
      %s454 = smul.addr %s453, 2
      %s455 = smul.addr %s451, 32
      %s456 = sadd.s32 %s454, %s455
      %s457 = smul.addr %s456, 4
      %s458 = scalar_lea.vmem %s6, %s457
      %s459 = smul.u32 8, %s24
      %p460 = scmp.lt.s32.totalorder %s23, 1
      %s461 = scalar_select %p460, %s23, 1
      %p462 = scmp.lt.s32.totalorder %s24, 1
      %s463 = scalar_select %p462, %s24, 1
      %s464 = smul.addr %s461, 2
      %s465 = sadd.s32 %s463, %s464
      %s466 = smul.addr %s465, 2
      %s467 = scalar_lea.vmem %s7, %s466
      %v469 = vld [vmem:[%s3] sm:$0x1]
      %v470 = vld [vmem:[%s4] sm:$0x1]
      %v471 = vld [vmem:[%s413] sm:$0xf]
      %v472 = vld [vmem:[%s413 + $0x4] sm:$0xf]
      %v473 = vld [vmem:[%s413 + $0x8] sm:$0xf]
      %v474 = vld [vmem:[%s413 + $0xc] sm:$0xf]
      %v475 = vld [vmem:[%s413 + $0x10] sm:$0xf]
      %v476 = vld [vmem:[%s413 + $0x14] sm:$0xf]
      %v477 = vld [vmem:[%s413 + $0x18] sm:$0xf]
      %v478 = vld [vmem:[%s413 + $0x1c] sm:$0xf]
      %v479 = vld [vmem:[%s413 + $0x20] sm:$0xf]
      %v480 = vld [vmem:[%s413 + $0x24] sm:$0xf]
      %v481 = vld [vmem:[%s413 + $0x28] sm:$0xf]
      %v482 = vld [vmem:[%s413 + $0x2c] sm:$0xf]
      %v483 = vld [vmem:[%s413 + $0x30] sm:$0xf]
      %v484 = vld [vmem:[%s413 + $0x34] sm:$0xf]
      %v485 = vld [vmem:[%s413 + $0x38] sm:$0xf]
      %v486 = vld [vmem:[%s413 + $0x3c] sm:$0xf]
      %v487 = vunpack.c.l.bf16 %v471
      %v488 = vunpack.c.l.bf16 %v472
      %v489 = vunpack.c.l.bf16 %v473
      %v490 = vunpack.c.l.bf16 %v474
      %v491 = vunpack.c.l.bf16 %v475
      %v492 = vunpack.c.l.bf16 %v476
      %v493 = vunpack.c.l.bf16 %v477
      %v494 = vunpack.c.l.bf16 %v478
      %v495 = vunpack.c.l.bf16 %v479
      %v496 = vunpack.c.l.bf16 %v480
      %v497 = vunpack.c.l.bf16 %v481
      %v498 = vunpack.c.l.bf16 %v482
      %v499 = vunpack.c.l.bf16 %v483
      %v500 = vunpack.c.l.bf16 %v484
      %v501 = vunpack.c.l.bf16 %v485
      %v502 = vunpack.c.l.bf16 %v486
      %v504 = vperm.slane %v469, 0
      %v506 = vmul.f32 %v487, %v504
      %v507 = vmul.f32 %v488, %v504
      %v508 = vmul.f32 %v489, %v504
      %v509 = vmul.f32 %v490, %v504
      %v510 = vmul.f32 %v491, %v504
      %v511 = vmul.f32 %v492, %v504
      %v512 = vmul.f32 %v493, %v504
      %v513 = vmul.f32 %v494, %v504
      %v514 = vmul.f32 %v495, %v504
      %v515 = vmul.f32 %v496, %v504
      %v516 = vmul.f32 %v497, %v504
      %v517 = vmul.f32 %v498, %v504
      %v518 = vmul.f32 %v499, %v504
      %v519 = vmul.f32 %v500, %v504
      %v520 = vmul.f32 %v501, %v504
      %v521 = vmul.f32 %v502, %v504
      %v523 = vperm.slane %v470, 0
      %v525 = vadd.f32 %v506, %v523
      %v526 = vadd.f32 %v507, %v523
      %v527 = vadd.f32 %v508, %v523
      %v528 = vadd.f32 %v509, %v523
      %v529 = vadd.f32 %v510, %v523
      %v530 = vadd.f32 %v511, %v523
      %v531 = vadd.f32 %v512, %v523
      %v532 = vadd.f32 %v513, %v523
      %v533 = vadd.f32 %v514, %v523
      %v534 = vadd.f32 %v515, %v523
      %v535 = vadd.f32 %v516, %v523
      %v536 = vadd.f32 %v517, %v523
      %v537 = vadd.f32 %v518, %v523
      %v538 = vadd.f32 %v519, %v523
      %v539 = vadd.f32 %v520, %v523
      %v540 = vadd.f32 %v521, %v523
      %v541 = vmax.f32 %v525, 0.0
      %v542 = vmax.f32 %v526, 0.0
      %v543 = vmax.f32 %v527, 0.0
      %v544 = vmax.f32 %v528, 0.0
      %v545 = vmax.f32 %v529, 0.0
      %v546 = vmax.f32 %v530, 0.0
      %v547 = vmax.f32 %v531, 0.0
      %v548 = vmax.f32 %v532, 0.0
      %v549 = vmax.f32 %v533, 0.0
      %v550 = vmax.f32 %v534, 0.0
      %v551 = vmax.f32 %v535, 0.0
      %v552 = vmax.f32 %v536, 0.0
      %v553 = vmax.f32 %v537, 0.0
      %v554 = vmax.f32 %v538, 0.0
      %v555 = vmax.f32 %v539, 0.0
      %v556 = vmax.f32 %v540, 0.0
      %v557 = vpack.c.bf16 %v541, %v541
      %v558 = vpack.c.bf16 %v542, %v542
      %v559 = vpack.c.bf16 %v543, %v543
      %v560 = vpack.c.bf16 %v544, %v544
      %v561 = vpack.c.bf16 %v545, %v545
      %v562 = vpack.c.bf16 %v546, %v546
      %v563 = vpack.c.bf16 %v547, %v547
      %v564 = vpack.c.bf16 %v548, %v548
      %v565 = vpack.c.bf16 %v549, %v549
      %v566 = vpack.c.bf16 %v550, %v550
      %v567 = vpack.c.bf16 %v551, %v551
      %v568 = vpack.c.bf16 %v552, %v552
      %v569 = vpack.c.bf16 %v553, %v553
      %v570 = vpack.c.bf16 %v554, %v554
      %v571 = vpack.c.bf16 %v555, %v555
      %v572 = vpack.c.bf16 %v556, %v556
      %v573 = vld [vmem:[%s427] sm:$0xf]
      %v574 = vld [vmem:[%s427 + $0x4] sm:$0xf]
      %v575 = vunpack.c.l.bf16 %v573
      %v576 = vunpack.c.l.bf16 %v574
      %v577 = vmul.f32 %v575, %v504
      %v578 = vmul.f32 %v576, %v504
      %v579 = vadd.f32 %v577, %v523
      %v580 = vadd.f32 %v578, %v523
      %v581 = vmax.f32 %v579, 0.0
      %v582 = vmax.f32 %v580, 0.0
      %v583 = vpack.c.bf16 %v581, %v581
      %v584 = vpack.c.bf16 %v582, %v582
      %v585 = vld [vmem:[%s444] sm:$0xf]
      %v586 = vld [vmem:[%s444 + $0x4] sm:$0xf]
      %v587 = vunpack.c.l.bf16 %v585
      %v588 = vunpack.c.l.bf16 %v586
      %v589 = vmul.f32 %v587, %v504
      %v590 = vmul.f32 %v588, %v504
      %v591 = vadd.f32 %v589, %v523
      %v592 = vadd.f32 %v590, %v523
      %v593 = vmax.f32 %v591, 0.0
      %v594 = vmax.f32 %v592, 0.0
      %v595 = vpack.c.bf16 %v593, %v593
      %v596 = vpack.c.bf16 %v594, %v594
      %p597 = scmp.eq.s32.totalorder %s24, 0
      %s598 = scalar_select %p597, 1, 0
      %v599 = vstv %s598
      %vm600 = vcmp.eq.s32.totalorder %v599, 1
      %v601 = vsel %vm600, 0, %v583
      %v602 = vsel %vm600, 0, %v584
      %p603 = scmp.eq.s32.totalorder %s24, 1
      %s604 = scalar_select %p603, 1, 0
      %v605 = vstv %s604
      %vm606 = vcmp.eq.s32.totalorder %v605, 1
      %v607 = vsel %vm606, 0, %v595
      %v608 = vsel %vm606, 0, %v596
      %v629 = vunpack.c.l.b16 %v601
      %v630 = vunpack.c.l.b16 %v602
      %v631 = vunpack.c.l.b16 %v557
      %v632 = vunpack.c.l.b16 %v558
      %v633 = vunpack.c.l.b16 %v559
      %v634 = vunpack.c.l.b16 %v560
      %v635 = vunpack.c.l.b16 %v561
      %v636 = vunpack.c.l.b16 %v562
      %v637 = vunpack.c.l.b16 %v563
      %v638 = vunpack.c.l.b16 %v564
      %v639 = vunpack.c.l.b16 %v565
      %v640 = vunpack.c.l.b16 %v566
      %v641 = vunpack.c.l.b16 %v567
      %v642 = vunpack.c.l.b16 %v568
      %v643 = vunpack.c.l.b16 %v569
      %v644 = vunpack.c.l.b16 %v570
      %v645 = vunpack.c.l.b16 %v571
      %v646 = vunpack.c.l.b16 %v572
      %v647 = vunpack.c.l.b16 %v607
      %v648 = vunpack.c.l.b16 %v608
      %v649 = vpack.c.b16 %v630, %v629
      %v650 = vpack.c.b16 %v632, %v631
      %v651 = vpack.c.b16 %v634, %v633
      %v652 = vpack.c.b16 %v636, %v635
      %v653 = vpack.c.b16 %v638, %v637
      %v654 = vpack.c.b16 %v640, %v639
      %v655 = vpack.c.b16 %v642, %v641
      %v656 = vpack.c.b16 %v644, %v643
      %v657 = vpack.c.b16 %v646, %v645
      %v658 = vpack.c.b16 %v648, %v647
      %v660 = vshrl.u32 %v649, 16
      %v662 = vrot.slane %v660, 7
      %v663 = vshll.u32 %v649, 16
      %v665 = vor.u32 %v662, %v663
      %v667 = vshrl.u32 %v650, 16
      %v669 = vrot.slane %v667, 7
      %v670 = vshll.u32 %v650, 16
      %v672 = vor.u32 %v669, %v670
      %v674 = vshrl.u32 %v651, 16
      %v676 = vrot.slane %v674, 7
      %v677 = vshll.u32 %v651, 16
      %v679 = vor.u32 %v676, %v677
      %v681 = vshrl.u32 %v652, 16
      %v683 = vrot.slane %v681, 7
      %v684 = vshll.u32 %v652, 16
      %v686 = vor.u32 %v683, %v684
      %v688 = vshrl.u32 %v653, 16
      %v690 = vrot.slane %v688, 7
      %v691 = vshll.u32 %v653, 16
      %v693 = vor.u32 %v690, %v691
      %v695 = vshrl.u32 %v654, 16
      %v697 = vrot.slane %v695, 7
      %v698 = vshll.u32 %v654, 16
      %v700 = vor.u32 %v697, %v698
      %v702 = vshrl.u32 %v655, 16
      %v704 = vrot.slane %v702, 7
      %v705 = vshll.u32 %v655, 16
      %v707 = vor.u32 %v704, %v705
      %v709 = vshrl.u32 %v656, 16
      %v711 = vrot.slane %v709, 7
      %v712 = vshll.u32 %v656, 16
      %v714 = vor.u32 %v711, %v712
      %v716 = vshrl.u32 %v657, 16
      %v718 = vrot.slane %v716, 7
      %v719 = vshll.u32 %v657, 16
      %v721 = vor.u32 %v718, %v719
      %v723 = vshrl.u32 %v658, 16
      %v725 = vrot.slane %v723, 7
      %v726 = vshll.u32 %v658, 16
      %v728 = vor.u32 %v725, %v726
      %vm749 = vcmask 1040384
      %vm750 = vsmask.f32 256
      %vm751 = vmand %vm749, %vm750
      %v752 = vsel %vm751, 0, %v665
      %v753 = vsel %vm751, 0, %v672
      %v754 = vsel %vm751, 0, %v679
      %v755 = vsel %vm751, 0, %v686
      %v756 = vsel %vm751, 0, %v693
      %v757 = vsel %vm751, 0, %v700
      %v758 = vsel %vm751, 0, %v707
      %v759 = vsel %vm751, 0, %v714
      %v760 = vsel %vm751, 0, %v721
      %v761 = vsel %vm751, 0, %v728
      %v762 = vsel %vm751, %v662, 0
      %v763 = vsel %vm751, %v669, 0
      %v764 = vsel %vm751, %v676, 0
      %v765 = vsel %vm751, %v683, 0
      %v766 = vsel %vm751, %v690, 0
      %v767 = vsel %vm751, %v697, 0
      %v768 = vsel %vm751, %v704, 0
      %v769 = vsel %vm751, %v711, 0
      %v770 = vsel %vm751, %v718, 0
      %v771 = vsel %vm751, %v725, 0
      %vm772 = vsmask.f32 7424
      %v774 = vshrl.u32 %v752, 16
      %v776 = vshll.u32 %v752, 16
      %v778 = vrot.slane %v776, 1
      %v779 = vor.u32 %v774, %v778
      %v781 = vshll.u32 %v762, 16
      %v783 = vrot.slane %v781, 1
      %v784 = vsel %vm772, %v779, %v783
      %v786 = vshrl.u32 %v753, 16
      %v788 = vshll.u32 %v753, 16
      %v790 = vrot.slane %v788, 1
      %v791 = vor.u32 %v786, %v790
      %v793 = vshll.u32 %v763, 16
      %v795 = vrot.slane %v793, 1
      %v796 = vsel %vm772, %v791, %v795
      %v798 = vshrl.u32 %v754, 16
      %v800 = vshll.u32 %v754, 16
      %v802 = vrot.slane %v800, 1
      %v803 = vor.u32 %v798, %v802
      %v805 = vshll.u32 %v764, 16
      %v807 = vrot.slane %v805, 1
      %v808 = vsel %vm772, %v803, %v807
      %v810 = vshrl.u32 %v755, 16
      %v812 = vshll.u32 %v755, 16
      %v814 = vrot.slane %v812, 1
      %v815 = vor.u32 %v810, %v814
      %v817 = vshll.u32 %v765, 16
      %v819 = vrot.slane %v817, 1
      %v820 = vsel %vm772, %v815, %v819
      %v822 = vshrl.u32 %v756, 16
      %v824 = vshll.u32 %v756, 16
      %v826 = vrot.slane %v824, 1
      %v827 = vor.u32 %v822, %v826
      %v829 = vshll.u32 %v766, 16
      %v831 = vrot.slane %v829, 1
      %v832 = vsel %vm772, %v827, %v831
      %v834 = vshrl.u32 %v757, 16
      %v836 = vshll.u32 %v757, 16
      %v838 = vrot.slane %v836, 1
      %v839 = vor.u32 %v834, %v838
      %v841 = vshll.u32 %v767, 16
      %v843 = vrot.slane %v841, 1
      %v844 = vsel %vm772, %v839, %v843
      %v846 = vshrl.u32 %v758, 16
      %v848 = vshll.u32 %v758, 16
      %v850 = vrot.slane %v848, 1
      %v851 = vor.u32 %v846, %v850
      %v853 = vshll.u32 %v768, 16
      %v855 = vrot.slane %v853, 1
      %v856 = vsel %vm772, %v851, %v855
      %v858 = vshrl.u32 %v759, 16
      %v860 = vshll.u32 %v759, 16
      %v862 = vrot.slane %v860, 1
      %v863 = vor.u32 %v858, %v862
      %v865 = vshll.u32 %v769, 16
      %v867 = vrot.slane %v865, 1
      %v868 = vsel %vm772, %v863, %v867
      %v870 = vshrl.u32 %v760, 16
      %v872 = vshll.u32 %v760, 16
      %v874 = vrot.slane %v872, 1
      %v875 = vor.u32 %v870, %v874
      %v877 = vshll.u32 %v770, 16
      %v879 = vrot.slane %v877, 1
      %v880 = vsel %vm772, %v875, %v879
      %v882 = vshrl.u32 %v761, 16
      %v884 = vshll.u32 %v761, 16
      %v886 = vrot.slane %v884, 1
      %v887 = vor.u32 %v882, %v886
      %v889 = vshll.u32 %v771, 16
      %v891 = vrot.slane %v889, 1
      %v892 = vsel %vm772, %v887, %v891
      %vm923 = vcmask 1046528
      %v924 = vrot.slane %v752, 1
      %v925 = vrot.slane %v762, 1
      %v926 = vsel %vm923, %v924, %v925
      %v927 = vrot.slane %v753, 1
      %v928 = vrot.slane %v763, 1
      %v929 = vsel %vm923, %v927, %v928
      %v930 = vrot.slane %v754, 1
      %v931 = vrot.slane %v764, 1
      %v932 = vsel %vm923, %v930, %v931
      %v933 = vrot.slane %v755, 1
      %v934 = vrot.slane %v765, 1
      %v935 = vsel %vm923, %v933, %v934
      %v936 = vrot.slane %v756, 1
      %v937 = vrot.slane %v766, 1
      %v938 = vsel %vm923, %v936, %v937
      %v939 = vrot.slane %v757, 1
      %v940 = vrot.slane %v767, 1
      %v941 = vsel %vm923, %v939, %v940
      %v942 = vrot.slane %v758, 1
      %v943 = vrot.slane %v768, 1
      %v944 = vsel %vm923, %v942, %v943
      %v945 = vrot.slane %v759, 1
      %v946 = vrot.slane %v769, 1
      %v947 = vsel %vm923, %v945, %v946
      %v948 = vrot.slane %v760, 1
      %v949 = vrot.slane %v770, 1
      %v950 = vsel %vm923, %v948, %v949
      %v951 = vrot.slane %v761, 1
      %v952 = vrot.slane %v771, 1
      %v953 = vsel %vm923, %v951, %v952
      %v964 = vld [vmem:[%s5] sm:$0xf]
      %v965 = vld [vmem:[%s5 + $0x4] sm:$0xf]
      %v966 = vld [vmem:[%s5 + $0x8] sm:$0xf]
      %v967 = vld [vmem:[%s5 + $0xc] sm:$0xf]
      %v968 = vld [vmem:[%s5 + $0x10] sm:$0xf]
      %v969 = vld [vmem:[%s5 + $0x14] sm:$0xf]
      %v970 = vld [vmem:[%s5 + $0x18] sm:$0xf]
      %v971 = vld [vmem:[%s5 + $0x1c] sm:$0xf]
      %v972 = vld [vmem:[%s5 + $0x20] sm:$0xf]
      %v973 = vld [vmem:[%s5 + $0x24] sm:$0xf]
      %v974 = vld [vmem:[%s5 + $0x28] sm:$0xf]
      %v975 = vld [vmem:[%s5 + $0x2c] sm:$0xf]
      %v976 = vld [vmem:[%s5 + $0x30] sm:$0xf]
      %v977 = vld [vmem:[%s5 + $0x34] sm:$0xf]
      %v978 = vld [vmem:[%s5 + $0x38] sm:$0xf]
      %v979 = vld [vmem:[%s5 + $0x3c] sm:$0xf]
      %v980 = vld [vmem:[%s5 + $0x40] sm:$0xf]
      %v981 = vld [vmem:[%s5 + $0x44] sm:$0xf]
      %v982 = vld [vmem:[%s5 + $0x48] sm:$0xf]
      %v983 = vld [vmem:[%s5 + $0x4c] sm:$0xf]
      %v984 = vld [vmem:[%s5 + $0x50] sm:$0xf]
      %v985 = vld [vmem:[%s5 + $0x54] sm:$0xf]
      %v986 = vld [vmem:[%s5 + $0x58] sm:$0xf]
      %v987 = vld [vmem:[%s5 + $0x5c] sm:$0xf]
      %v988 = vld [vmem:[%s5 + $0x60] sm:$0xf]
      %v989 = vld [vmem:[%s5 + $0x64] sm:$0xf]
      %v990 = vld [vmem:[%s5 + $0x68] sm:$0xf]
      %v991 = vld [vmem:[%s5 + $0x6c] sm:$0xf]
      %v992 = vld [vmem:[%s5 + $0x70] sm:$0xf]
      %v993 = vld [vmem:[%s5 + $0x74] sm:$0xf]
      %v994 = vld [vmem:[%s5 + $0x78] sm:$0xf]
      %v995 = vld [vmem:[%s5 + $0x7c] sm:$0xf]
      %v996 = vld [vmem:[%s5 + $0x80] sm:$0xf]
      %v997 = vld [vmem:[%s5 + $0x84] sm:$0xf]
      %v998 = vld [vmem:[%s5 + $0x88] sm:$0xf]
      %v999 = vld [vmem:[%s5 + $0x8c] sm:$0xf]
      %v1000 = vld [vmem:[%s5 + $0x90] sm:$0xf]
      %v1001 = vld [vmem:[%s5 + $0x94] sm:$0xf]
      %v1002 = vld [vmem:[%s5 + $0x98] sm:$0xf]
      %v1003 = vld [vmem:[%s5 + $0x9c] sm:$0xf]
      %v1004 = vld [vmem:[%s5 + $0xa0] sm:$0xf]
      %v1005 = vld [vmem:[%s5 + $0xa4] sm:$0xf]
      %v1006 = vld [vmem:[%s5 + $0xa8] sm:$0xf]
      %v1007 = vld [vmem:[%s5 + $0xac] sm:$0xf]
      %v1008 = vld [vmem:[%s5 + $0xb0] sm:$0xf]
      %v1009 = vld [vmem:[%s5 + $0xb4] sm:$0xf]
      %v1010 = vld [vmem:[%s5 + $0xb8] sm:$0xf]
      %v1011 = vld [vmem:[%s5 + $0xbc] sm:$0xf]
      %s1012 = scalar_lea.vmem %s5, 192
      %v1013 = vld [vmem:[%s1012] sm:$0xf]
      %v1014 = vld [vmem:[%s1012 + $0x4] sm:$0xf]
      %v1015 = vld [vmem:[%s1012 + $0x8] sm:$0xf]
      %v1016 = vld [vmem:[%s1012 + $0xc] sm:$0xf]
      %v1017 = vld [vmem:[%s1012 + $0x10] sm:$0xf]
      %v1018 = vld [vmem:[%s1012 + $0x14] sm:$0xf]
      %v1019 = vld [vmem:[%s1012 + $0x18] sm:$0xf]
      %v1020 = vld [vmem:[%s1012 + $0x1c] sm:$0xf]
      %v1021 = vld [vmem:[%s1012 + $0x20] sm:$0xf]
      %v1022 = vld [vmem:[%s1012 + $0x24] sm:$0xf]
      %v1023 = vld [vmem:[%s1012 + $0x28] sm:$0xf]
      %v1024 = vld [vmem:[%s1012 + $0x2c] sm:$0xf]
      %v1025 = vld [vmem:[%s1012 + $0x30] sm:$0xf]
      %v1026 = vld [vmem:[%s1012 + $0x34] sm:$0xf]
      %v1027 = vld [vmem:[%s1012 + $0x38] sm:$0xf]
      %v1028 = vld [vmem:[%s1012 + $0x3c] sm:$0xf]
      %v1029 = vld [vmem:[%s1012 + $0x40] sm:$0xf]
      %v1030 = vld [vmem:[%s1012 + $0x44] sm:$0xf]
      %v1031 = vld [vmem:[%s1012 + $0x48] sm:$0xf]
      %v1032 = vld [vmem:[%s1012 + $0x4c] sm:$0xf]
      %v1033 = vld [vmem:[%s1012 + $0x50] sm:$0xf]
      %v1034 = vld [vmem:[%s1012 + $0x54] sm:$0xf]
      %v1035 = vld [vmem:[%s1012 + $0x58] sm:$0xf]
      %v1036 = vld [vmem:[%s1012 + $0x5c] sm:$0xf]
      %v1037 = vld [vmem:[%s1012 + $0x60] sm:$0xf]
      %v1038 = vld [vmem:[%s1012 + $0x64] sm:$0xf]
      %v1039 = vld [vmem:[%s1012 + $0x68] sm:$0xf]
      %v1040 = vld [vmem:[%s1012 + $0x6c] sm:$0xf]
      %v1041 = vld [vmem:[%s1012 + $0x70] sm:$0xf]
      %v1042 = vld [vmem:[%s1012 + $0x74] sm:$0xf]
      %v1043 = vld [vmem:[%s1012 + $0x78] sm:$0xf]
      %v1044 = vld [vmem:[%s1012 + $0x7c] sm:$0xf]
      %v1045 = vld [vmem:[%s1012 + $0x80] sm:$0xf]
      %v1046 = vld [vmem:[%s1012 + $0x84] sm:$0xf]
      %v1047 = vld [vmem:[%s1012 + $0x88] sm:$0xf]
      %v1048 = vld [vmem:[%s1012 + $0x8c] sm:$0xf]
      %v1049 = vld [vmem:[%s1012 + $0x90] sm:$0xf]
      %v1050 = vld [vmem:[%s1012 + $0x94] sm:$0xf]
      %v1051 = vld [vmem:[%s1012 + $0x98] sm:$0xf]
      %v1052 = vld [vmem:[%s1012 + $0x9c] sm:$0xf]
      %v1053 = vld [vmem:[%s1012 + $0xa0] sm:$0xf]
      %v1054 = vld [vmem:[%s1012 + $0xa4] sm:$0xf]
      %v1055 = vld [vmem:[%s1012 + $0xa8] sm:$0xf]
      %v1056 = vld [vmem:[%s1012 + $0xac] sm:$0xf]
      %v1057 = vld [vmem:[%s1012 + $0xb0] sm:$0xf]
      %v1058 = vld [vmem:[%s1012 + $0xb4] sm:$0xf]
      %v1059 = vld [vmem:[%s1012 + $0xb8] sm:$0xf]
      %v1060 = vld [vmem:[%s1012 + $0xbc] sm:$0xf]
      %v1109 = vunpack.c.l.b16 %v1013
      %v1110 = vunpack.c.l.b16 %v1014
      %v1111 = vunpack.c.l.b16 %v1015
      %v1112 = vunpack.c.l.b16 %v1016
      %v1113 = vunpack.c.l.b16 %v1017
      %v1114 = vunpack.c.l.b16 %v1018
      %v1115 = vunpack.c.l.b16 %v1019
      %v1116 = vunpack.c.l.b16 %v1020
      %v1117 = vunpack.c.l.b16 %v1021
      %v1118 = vunpack.c.l.b16 %v1022
      %v1119 = vunpack.c.l.b16 %v1023
      %v1120 = vunpack.c.l.b16 %v1024
      %v1121 = vunpack.c.l.b16 %v1025
      %v1122 = vunpack.c.l.b16 %v1026
      %v1123 = vunpack.c.l.b16 %v1027
      %v1124 = vunpack.c.l.b16 %v1028
      %v1125 = vunpack.c.l.b16 %v1029
      %v1126 = vunpack.c.l.b16 %v1030
      %v1127 = vunpack.c.l.b16 %v1031
      %v1128 = vunpack.c.l.b16 %v1032
      %v1129 = vunpack.c.l.b16 %v1033
      %v1130 = vunpack.c.l.b16 %v1034
      %v1131 = vunpack.c.l.b16 %v1035
      %v1132 = vunpack.c.l.b16 %v1036
      %v1133 = vunpack.c.l.b16 %v1037
      %v1134 = vunpack.c.l.b16 %v1038
      %v1135 = vunpack.c.l.b16 %v1039
      %v1136 = vunpack.c.l.b16 %v1040
      %v1137 = vunpack.c.l.b16 %v1041
      %v1138 = vunpack.c.l.b16 %v1042
      %v1139 = vunpack.c.l.b16 %v1043
      %v1140 = vunpack.c.l.b16 %v1044
      %v1141 = vunpack.c.l.b16 %v1045
      %v1142 = vunpack.c.l.b16 %v1046
      %v1143 = vunpack.c.l.b16 %v1047
      %v1144 = vunpack.c.l.b16 %v1048
      %v1145 = vunpack.c.l.b16 %v1049
      %v1146 = vunpack.c.l.b16 %v1050
      %v1147 = vunpack.c.l.b16 %v1051
      %v1148 = vunpack.c.l.b16 %v1052
      %v1149 = vunpack.c.l.b16 %v1053
      %v1150 = vunpack.c.l.b16 %v1054
      %v1151 = vunpack.c.l.b16 %v1055
      %v1152 = vunpack.c.l.b16 %v1056
      %v1153 = vunpack.c.l.b16 %v1057
      %v1154 = vunpack.c.l.b16 %v1058
      %v1155 = vunpack.c.l.b16 %v1059
      %v1156 = vunpack.c.l.b16 %v1060
      %v1157 = vpack.c.b16 %v1110, %v1109
      %v1158 = vpack.c.b16 %v1112, %v1111
      %v1159 = vpack.c.b16 %v1114, %v1113
      %v1160 = vpack.c.b16 %v1116, %v1115
      %v1161 = vpack.c.b16 %v1118, %v1117
      %v1162 = vpack.c.b16 %v1120, %v1119
      %v1163 = vpack.c.b16 %v1122, %v1121
      %v1164 = vpack.c.b16 %v1124, %v1123
      %v1165 = vpack.c.b16 %v1126, %v1125
      %v1166 = vpack.c.b16 %v1128, %v1127
      %v1167 = vpack.c.b16 %v1130, %v1129
      %v1168 = vpack.c.b16 %v1132, %v1131
      %v1169 = vpack.c.b16 %v1134, %v1133
      %v1170 = vpack.c.b16 %v1136, %v1135
      %v1171 = vpack.c.b16 %v1138, %v1137
      %v1172 = vpack.c.b16 %v1140, %v1139
      %v1173 = vpack.c.b16 %v1142, %v1141
      %v1174 = vpack.c.b16 %v1144, %v1143
      %v1175 = vpack.c.b16 %v1146, %v1145
      %v1176 = vpack.c.b16 %v1148, %v1147
      %v1177 = vpack.c.b16 %v1150, %v1149
      %v1178 = vpack.c.b16 %v1152, %v1151
      %v1179 = vpack.c.b16 %v1154, %v1153
      %v1180 = vpack.c.b16 %v1156, %v1155
      %1205 = vmatpush.bf16.msra.mxu0 %v1164
      %1206 = vmatpush.bf16.msra.mxu0 %v1163
      %1207 = vmatpush.bf16.msra.mxu0 %v1162
      %1208 = vmatpush.bf16.msra.mxu0 %v1161
      %1209 = vmatpush.bf16.msra.mxu0 %v1160
      %1210 = vmatpush.bf16.msra.mxu0 %v1159
      %1211 = vmatpush.bf16.msra.mxu0 %v1158
      %1212 = vmatpush.bf16.msra.mxu0 %v1157
      %1213 = vmatmul.bf16.gmra.mxu0 %v753
      %v1214 = vpop.f32.mrf.mxu0
      %v1215 = vadd.f32 0.0, %v1214
      %v1216 = vpop.f32.mrf.mxu0
      %v1217 = vadd.f32 0.0, %v1216
      %1218 = vmatmul.bf16.gmra.mxu0 %v754
      %v1219 = vpop.f32.mrf.mxu0
      %v1220 = vadd.f32 0.0, %v1219
      %v1221 = vpop.f32.mrf.mxu0
      %v1222 = vadd.f32 0.0, %v1221
      %1223 = vmatmul.bf16.gmra.mxu0 %v755
      %v1224 = vpop.f32.mrf.mxu0
      %v1225 = vadd.f32 0.0, %v1224
      %v1226 = vpop.f32.mrf.mxu0
      %v1227 = vadd.f32 0.0, %v1226
      %1228 = vmatmul.bf16.gmra.mxu0 %v756
      %v1229 = vpop.f32.mrf.mxu0
      %v1230 = vadd.f32 0.0, %v1229
      %v1231 = vpop.f32.mrf.mxu0
      %v1232 = vadd.f32 0.0, %v1231
      %1233 = vmatmul.bf16.gmra.mxu0 %v757
      %v1234 = vpop.f32.mrf.mxu0
      %v1235 = vadd.f32 0.0, %v1234
      %v1236 = vpop.f32.mrf.mxu0
      %v1237 = vadd.f32 0.0, %v1236
      %1238 = vmatmul.bf16.gmra.mxu0 %v758
      %v1239 = vpop.f32.mrf.mxu0
      %v1240 = vadd.f32 0.0, %v1239
      %v1241 = vpop.f32.mrf.mxu0
      %v1242 = vadd.f32 0.0, %v1241
      %1243 = vmatmul.bf16.gmra.mxu0 %v759
      %v1244 = vpop.f32.mrf.mxu0
      %v1245 = vadd.f32 0.0, %v1244
      %v1246 = vpop.f32.mrf.mxu0
      %v1247 = vadd.f32 0.0, %v1246
      %1248 = vmatmul.bf16.gmra.mxu0 %v760
      %v1249 = vpop.f32.mrf.mxu0
      %v1250 = vadd.f32 0.0, %v1249
      %v1251 = vpop.f32.mrf.mxu0
      %v1252 = vadd.f32 0.0, %v1251
      %1253 = vdwg.mxu0
      %1254 = vmatpush.bf16.msra.mxu0 %v1172
      %1255 = vmatpush.bf16.msra.mxu0 %v1171
      %1256 = vmatpush.bf16.msra.mxu0 %v1170
      %1257 = vmatpush.bf16.msra.mxu0 %v1169
      %1258 = vmatpush.bf16.msra.mxu0 %v1168
      %1259 = vmatpush.bf16.msra.mxu0 %v1167
      %1260 = vmatpush.bf16.msra.mxu0 %v1166
      %1261 = vmatpush.bf16.msra.mxu0 %v1165
      %1262 = vmatmul.bf16.gmra.mxu0 %v796
      %v1263 = vpop.f32.mrf.mxu0
      %v1264 = vadd.f32 %v1215, %v1263
      %v1265 = vpop.f32.mrf.mxu0
      %v1266 = vadd.f32 %v1217, %v1265
      %1267 = vmatmul.bf16.gmra.mxu0 %v808
      %v1268 = vpop.f32.mrf.mxu0
      %v1269 = vadd.f32 %v1220, %v1268
      %v1270 = vpop.f32.mrf.mxu0
      %v1271 = vadd.f32 %v1222, %v1270
      %1272 = vmatmul.bf16.gmra.mxu0 %v820
      %v1273 = vpop.f32.mrf.mxu0
      %v1274 = vadd.f32 %v1225, %v1273
      %v1275 = vpop.f32.mrf.mxu0
      %v1276 = vadd.f32 %v1227, %v1275
      %1277 = vmatmul.bf16.gmra.mxu0 %v832
      %v1278 = vpop.f32.mrf.mxu0
      %v1279 = vadd.f32 %v1230, %v1278
      %v1280 = vpop.f32.mrf.mxu0
      %v1281 = vadd.f32 %v1232, %v1280
      %1282 = vmatmul.bf16.gmra.mxu0 %v844
      %v1283 = vpop.f32.mrf.mxu0
      %v1284 = vadd.f32 %v1235, %v1283
      %v1285 = vpop.f32.mrf.mxu0
      %v1286 = vadd.f32 %v1237, %v1285
      %1287 = vmatmul.bf16.gmra.mxu0 %v856
      %v1288 = vpop.f32.mrf.mxu0
      %v1289 = vadd.f32 %v1240, %v1288
      %v1290 = vpop.f32.mrf.mxu0
      %v1291 = vadd.f32 %v1242, %v1290
      %1292 = vmatmul.bf16.gmra.mxu0 %v868
      %v1293 = vpop.f32.mrf.mxu0
      %v1294 = vadd.f32 %v1245, %v1293
      %v1295 = vpop.f32.mrf.mxu0
      %v1296 = vadd.f32 %v1247, %v1295
      %1297 = vmatmul.bf16.gmra.mxu0 %v880
      %v1298 = vpop.f32.mrf.mxu0
      %v1299 = vadd.f32 %v1250, %v1298
      %v1300 = vpop.f32.mrf.mxu0
      %v1301 = vadd.f32 %v1252, %v1300
      %1302 = vdwg.mxu0
      %1303 = vmatpush.bf16.msra.mxu0 %v1180
      %1304 = vmatpush.bf16.msra.mxu0 %v1179
      %1305 = vmatpush.bf16.msra.mxu0 %v1178
      %1306 = vmatpush.bf16.msra.mxu0 %v1177
      %1307 = vmatpush.bf16.msra.mxu0 %v1176
      %1308 = vmatpush.bf16.msra.mxu0 %v1175
      %1309 = vmatpush.bf16.msra.mxu0 %v1174
      %1310 = vmatpush.bf16.msra.mxu0 %v1173
      %1311 = vmatmul.bf16.gmra.mxu0 %v929
      %v1312 = vpop.f32.mrf.mxu0
      %v1313 = vadd.f32 %v1264, %v1312
      %v1314 = vpop.f32.mrf.mxu0
      %v1315 = vadd.f32 %v1266, %v1314
      %1316 = vmatmul.bf16.gmra.mxu0 %v932
      %v1317 = vpop.f32.mrf.mxu0
      %v1318 = vadd.f32 %v1269, %v1317
      %v1319 = vpop.f32.mrf.mxu0
      %v1320 = vadd.f32 %v1271, %v1319
      %1321 = vmatmul.bf16.gmra.mxu0 %v935
      %v1322 = vpop.f32.mrf.mxu0
      %v1323 = vadd.f32 %v1274, %v1322
      %v1324 = vpop.f32.mrf.mxu0
      %v1325 = vadd.f32 %v1276, %v1324
      %1326 = vmatmul.bf16.gmra.mxu0 %v938
      %v1327 = vpop.f32.mrf.mxu0
      %v1328 = vadd.f32 %v1279, %v1327
      %v1329 = vpop.f32.mrf.mxu0
      %v1330 = vadd.f32 %v1281, %v1329
      %1331 = vmatmul.bf16.gmra.mxu0 %v941
      %v1332 = vpop.f32.mrf.mxu0
      %v1333 = vadd.f32 %v1284, %v1332
      %v1334 = vpop.f32.mrf.mxu0
      %v1335 = vadd.f32 %v1286, %v1334
      %1336 = vmatmul.bf16.gmra.mxu0 %v944
      %v1337 = vpop.f32.mrf.mxu0
      %v1338 = vadd.f32 %v1289, %v1337
      %v1339 = vpop.f32.mrf.mxu0
      %v1340 = vadd.f32 %v1291, %v1339
      %1341 = vmatmul.bf16.gmra.mxu0 %v947
      %v1342 = vpop.f32.mrf.mxu0
      %v1343 = vadd.f32 %v1294, %v1342
      %v1344 = vpop.f32.mrf.mxu0
      %v1345 = vadd.f32 %v1296, %v1344
      %1346 = vmatmul.bf16.gmra.mxu0 %v950
      %v1347 = vpop.f32.mrf.mxu0
      %v1348 = vadd.f32 %v1299, %v1347
      %v1349 = vpop.f32.mrf.mxu0
      %v1350 = vadd.f32 %v1301, %v1349
      %1351 = vdwg.mxu0
      %v1400 = vunpack.c.l.b16 %v964
      %v1401 = vunpack.c.l.b16 %v965
      %v1402 = vunpack.c.l.b16 %v966
      %v1403 = vunpack.c.l.b16 %v967
      %v1404 = vunpack.c.l.b16 %v968
      %v1405 = vunpack.c.l.b16 %v969
      %v1406 = vunpack.c.l.b16 %v970
      %v1407 = vunpack.c.l.b16 %v971
      %v1408 = vunpack.c.l.b16 %v972
      %v1409 = vunpack.c.l.b16 %v973
      %v1410 = vunpack.c.l.b16 %v974
      %v1411 = vunpack.c.l.b16 %v975
      %v1412 = vunpack.c.l.b16 %v976
      %v1413 = vunpack.c.l.b16 %v977
      %v1414 = vunpack.c.l.b16 %v978
      %v1415 = vunpack.c.l.b16 %v979
      %v1416 = vunpack.c.l.b16 %v980
      %v1417 = vunpack.c.l.b16 %v981
      %v1418 = vunpack.c.l.b16 %v982
      %v1419 = vunpack.c.l.b16 %v983
      %v1420 = vunpack.c.l.b16 %v984
      %v1421 = vunpack.c.l.b16 %v985
      %v1422 = vunpack.c.l.b16 %v986
      %v1423 = vunpack.c.l.b16 %v987
      %v1424 = vunpack.c.l.b16 %v988
      %v1425 = vunpack.c.l.b16 %v989
      %v1426 = vunpack.c.l.b16 %v990
      %v1427 = vunpack.c.l.b16 %v991
      %v1428 = vunpack.c.l.b16 %v992
      %v1429 = vunpack.c.l.b16 %v993
      %v1430 = vunpack.c.l.b16 %v994
      %v1431 = vunpack.c.l.b16 %v995
      %v1432 = vunpack.c.l.b16 %v996
      %v1433 = vunpack.c.l.b16 %v997
      %v1434 = vunpack.c.l.b16 %v998
      %v1435 = vunpack.c.l.b16 %v999
      %v1436 = vunpack.c.l.b16 %v1000
      %v1437 = vunpack.c.l.b16 %v1001
      %v1438 = vunpack.c.l.b16 %v1002
      %v1439 = vunpack.c.l.b16 %v1003
      %v1440 = vunpack.c.l.b16 %v1004
      %v1441 = vunpack.c.l.b16 %v1005
      %v1442 = vunpack.c.l.b16 %v1006
      %v1443 = vunpack.c.l.b16 %v1007
      %v1444 = vunpack.c.l.b16 %v1008
      %v1445 = vunpack.c.l.b16 %v1009
      %v1446 = vunpack.c.l.b16 %v1010
      %v1447 = vunpack.c.l.b16 %v1011
      %v1448 = vpack.c.b16 %v1401, %v1400
      %v1449 = vpack.c.b16 %v1403, %v1402
      %v1450 = vpack.c.b16 %v1405, %v1404
      %v1451 = vpack.c.b16 %v1407, %v1406
      %v1452 = vpack.c.b16 %v1409, %v1408
      %v1453 = vpack.c.b16 %v1411, %v1410
      %v1454 = vpack.c.b16 %v1413, %v1412
      %v1455 = vpack.c.b16 %v1415, %v1414
      %v1456 = vpack.c.b16 %v1417, %v1416
      %v1457 = vpack.c.b16 %v1419, %v1418
      %v1458 = vpack.c.b16 %v1421, %v1420
      %v1459 = vpack.c.b16 %v1423, %v1422
      %v1460 = vpack.c.b16 %v1425, %v1424
      %v1461 = vpack.c.b16 %v1427, %v1426
      %v1462 = vpack.c.b16 %v1429, %v1428
      %v1463 = vpack.c.b16 %v1431, %v1430
      %v1464 = vpack.c.b16 %v1433, %v1432
      %v1465 = vpack.c.b16 %v1435, %v1434
      %v1466 = vpack.c.b16 %v1437, %v1436
      %v1467 = vpack.c.b16 %v1439, %v1438
      %v1468 = vpack.c.b16 %v1441, %v1440
      %v1469 = vpack.c.b16 %v1443, %v1442
      %v1470 = vpack.c.b16 %v1445, %v1444
      %v1471 = vpack.c.b16 %v1447, %v1446
      %1496 = vmatpush.bf16.msra.mxu0 %v1455
      %1497 = vmatpush.bf16.msra.mxu0 %v1454
      %1498 = vmatpush.bf16.msra.mxu0 %v1453
      %1499 = vmatpush.bf16.msra.mxu0 %v1452
      %1500 = vmatpush.bf16.msra.mxu0 %v1451
      %1501 = vmatpush.bf16.msra.mxu0 %v1450
      %1502 = vmatpush.bf16.msra.mxu0 %v1449
      %1503 = vmatpush.bf16.msra.mxu0 %v1448
      %1504 = vmatmul.bf16.gmra.mxu0 %v752
      %v1505 = vpop.f32.mrf.mxu0
      %v1506 = vadd.f32 %v1313, %v1505
      %v1507 = vpop.f32.mrf.mxu0
      %v1508 = vadd.f32 %v1315, %v1507
      %1509 = vmatmul.bf16.gmra.mxu0 %v753
      %v1510 = vpop.f32.mrf.mxu0
      %v1511 = vadd.f32 %v1318, %v1510
      %v1512 = vpop.f32.mrf.mxu0
      %v1513 = vadd.f32 %v1320, %v1512
      %1514 = vmatmul.bf16.gmra.mxu0 %v754
      %v1515 = vpop.f32.mrf.mxu0
      %v1516 = vadd.f32 %v1323, %v1515
      %v1517 = vpop.f32.mrf.mxu0
      %v1518 = vadd.f32 %v1325, %v1517
      %1519 = vmatmul.bf16.gmra.mxu0 %v755
      %v1520 = vpop.f32.mrf.mxu0
      %v1521 = vadd.f32 %v1328, %v1520
      %v1522 = vpop.f32.mrf.mxu0
      %v1523 = vadd.f32 %v1330, %v1522
      %1524 = vmatmul.bf16.gmra.mxu0 %v756
      %v1525 = vpop.f32.mrf.mxu0
      %v1526 = vadd.f32 %v1333, %v1525
      %v1527 = vpop.f32.mrf.mxu0
      %v1528 = vadd.f32 %v1335, %v1527
      %1529 = vmatmul.bf16.gmra.mxu0 %v757
      %v1530 = vpop.f32.mrf.mxu0
      %v1531 = vadd.f32 %v1338, %v1530
      %v1532 = vpop.f32.mrf.mxu0
      %v1533 = vadd.f32 %v1340, %v1532
      %1534 = vmatmul.bf16.gmra.mxu0 %v758
      %v1535 = vpop.f32.mrf.mxu0
      %v1536 = vadd.f32 %v1343, %v1535
      %v1537 = vpop.f32.mrf.mxu0
      %v1538 = vadd.f32 %v1345, %v1537
      %1539 = vmatmul.bf16.gmra.mxu0 %v759
      %v1540 = vpop.f32.mrf.mxu0
      %v1541 = vadd.f32 %v1348, %v1540
      %v1542 = vpop.f32.mrf.mxu0
      %v1543 = vadd.f32 %v1350, %v1542
      %1544 = vdwg.mxu0
      %1545 = vmatpush.bf16.msra.mxu0 %v1463
      %1546 = vmatpush.bf16.msra.mxu0 %v1462
      %1547 = vmatpush.bf16.msra.mxu0 %v1461
      %1548 = vmatpush.bf16.msra.mxu0 %v1460
      %1549 = vmatpush.bf16.msra.mxu0 %v1459
      %1550 = vmatpush.bf16.msra.mxu0 %v1458
      %1551 = vmatpush.bf16.msra.mxu0 %v1457
      %1552 = vmatpush.bf16.msra.mxu0 %v1456
      %1553 = vmatmul.bf16.gmra.mxu0 %v784
      %v1554 = vpop.f32.mrf.mxu0
      %v1555 = vadd.f32 %v1506, %v1554
      %v1556 = vpop.f32.mrf.mxu0
      %v1557 = vadd.f32 %v1508, %v1556
      %1558 = vmatmul.bf16.gmra.mxu0 %v796
      %v1559 = vpop.f32.mrf.mxu0
      %v1560 = vadd.f32 %v1511, %v1559
      %v1561 = vpop.f32.mrf.mxu0
      %v1562 = vadd.f32 %v1513, %v1561
      %1563 = vmatmul.bf16.gmra.mxu0 %v808
      %v1564 = vpop.f32.mrf.mxu0
      %v1565 = vadd.f32 %v1516, %v1564
      %v1566 = vpop.f32.mrf.mxu0
      %v1567 = vadd.f32 %v1518, %v1566
      %1568 = vmatmul.bf16.gmra.mxu0 %v820
      %v1569 = vpop.f32.mrf.mxu0
      %v1570 = vadd.f32 %v1521, %v1569
      %v1571 = vpop.f32.mrf.mxu0
      %v1572 = vadd.f32 %v1523, %v1571
      %1573 = vmatmul.bf16.gmra.mxu0 %v832
      %v1574 = vpop.f32.mrf.mxu0
      %v1575 = vadd.f32 %v1526, %v1574
      %v1576 = vpop.f32.mrf.mxu0
      %v1577 = vadd.f32 %v1528, %v1576
      %1578 = vmatmul.bf16.gmra.mxu0 %v844
      %v1579 = vpop.f32.mrf.mxu0
      %v1580 = vadd.f32 %v1531, %v1579
      %v1581 = vpop.f32.mrf.mxu0
      %v1582 = vadd.f32 %v1533, %v1581
      %1583 = vmatmul.bf16.gmra.mxu0 %v856
      %v1584 = vpop.f32.mrf.mxu0
      %v1585 = vadd.f32 %v1536, %v1584
      %v1586 = vpop.f32.mrf.mxu0
      %v1587 = vadd.f32 %v1538, %v1586
      %1588 = vmatmul.bf16.gmra.mxu0 %v868
      %v1589 = vpop.f32.mrf.mxu0
      %v1590 = vadd.f32 %v1541, %v1589
      %v1591 = vpop.f32.mrf.mxu0
      %v1592 = vadd.f32 %v1543, %v1591
      %1593 = vdwg.mxu0
      %1594 = vmatpush.bf16.msra.mxu0 %v1471
      %1595 = vmatpush.bf16.msra.mxu0 %v1470
      %1596 = vmatpush.bf16.msra.mxu0 %v1469
      %1597 = vmatpush.bf16.msra.mxu0 %v1468
      %1598 = vmatpush.bf16.msra.mxu0 %v1467
      %1599 = vmatpush.bf16.msra.mxu0 %v1466
      %1600 = vmatpush.bf16.msra.mxu0 %v1465
      %1601 = vmatpush.bf16.msra.mxu0 %v1464
      %1602 = vmatmul.bf16.gmra.mxu0 %v926
      %v1603 = vpop.f32.mrf.mxu0
      %v1604 = vadd.f32 %v1555, %v1603
      %v1605 = vpop.f32.mrf.mxu0
      %v1606 = vadd.f32 %v1557, %v1605
      %1607 = vmatmul.bf16.gmra.mxu0 %v929
      %v1608 = vpop.f32.mrf.mxu0
      %v1609 = vadd.f32 %v1560, %v1608
      %v1610 = vpop.f32.mrf.mxu0
      %v1611 = vadd.f32 %v1562, %v1610
      %1612 = vmatmul.bf16.gmra.mxu0 %v932
      %v1613 = vpop.f32.mrf.mxu0
      %v1614 = vadd.f32 %v1565, %v1613
      %v1615 = vpop.f32.mrf.mxu0
      %v1616 = vadd.f32 %v1567, %v1615
      %1617 = vmatmul.bf16.gmra.mxu0 %v935
      %v1618 = vpop.f32.mrf.mxu0
      %v1619 = vadd.f32 %v1570, %v1618
      %v1620 = vpop.f32.mrf.mxu0
      %v1621 = vadd.f32 %v1572, %v1620
      %1622 = vmatmul.bf16.gmra.mxu0 %v938
      %v1623 = vpop.f32.mrf.mxu0
      %v1624 = vadd.f32 %v1575, %v1623
      %v1625 = vpop.f32.mrf.mxu0
      %v1626 = vadd.f32 %v1577, %v1625
      %1627 = vmatmul.bf16.gmra.mxu0 %v941
      %v1628 = vpop.f32.mrf.mxu0
      %v1629 = vadd.f32 %v1580, %v1628
      %v1630 = vpop.f32.mrf.mxu0
      %v1631 = vadd.f32 %v1582, %v1630
      %1632 = vmatmul.bf16.gmra.mxu0 %v944
      %v1633 = vpop.f32.mrf.mxu0
      %v1634 = vadd.f32 %v1585, %v1633
      %v1635 = vpop.f32.mrf.mxu0
      %v1636 = vadd.f32 %v1587, %v1635
      %1637 = vmatmul.bf16.gmra.mxu0 %v947
      %v1638 = vpop.f32.mrf.mxu0
      %v1639 = vadd.f32 %v1590, %v1638
      %v1640 = vpop.f32.mrf.mxu0
      %v1641 = vadd.f32 %v1592, %v1640
      %1642 = vdwg.mxu0
      %s1643 = scalar_lea.vmem %s5, 384
      %v1644 = vld [vmem:[%s1643] sm:$0xf]
      %v1645 = vld [vmem:[%s1643 + $0x4] sm:$0xf]
      %v1646 = vld [vmem:[%s1643 + $0x8] sm:$0xf]
      %v1647 = vld [vmem:[%s1643 + $0xc] sm:$0xf]
      %v1648 = vld [vmem:[%s1643 + $0x10] sm:$0xf]
      %v1649 = vld [vmem:[%s1643 + $0x14] sm:$0xf]
      %v1650 = vld [vmem:[%s1643 + $0x18] sm:$0xf]
      %v1651 = vld [vmem:[%s1643 + $0x1c] sm:$0xf]
      %v1652 = vld [vmem:[%s1643 + $0x20] sm:$0xf]
      %v1653 = vld [vmem:[%s1643 + $0x24] sm:$0xf]
      %v1654 = vld [vmem:[%s1643 + $0x28] sm:$0xf]
      %v1655 = vld [vmem:[%s1643 + $0x2c] sm:$0xf]
      %v1656 = vld [vmem:[%s1643 + $0x30] sm:$0xf]
      %v1657 = vld [vmem:[%s1643 + $0x34] sm:$0xf]
      %v1658 = vld [vmem:[%s1643 + $0x38] sm:$0xf]
      %v1659 = vld [vmem:[%s1643 + $0x3c] sm:$0xf]
      %v1660 = vld [vmem:[%s1643 + $0x40] sm:$0xf]
      %v1661 = vld [vmem:[%s1643 + $0x44] sm:$0xf]
      %v1662 = vld [vmem:[%s1643 + $0x48] sm:$0xf]
      %v1663 = vld [vmem:[%s1643 + $0x4c] sm:$0xf]
      %v1664 = vld [vmem:[%s1643 + $0x50] sm:$0xf]
      %v1665 = vld [vmem:[%s1643 + $0x54] sm:$0xf]
      %v1666 = vld [vmem:[%s1643 + $0x58] sm:$0xf]
      %v1667 = vld [vmem:[%s1643 + $0x5c] sm:$0xf]
      %v1668 = vld [vmem:[%s1643 + $0x60] sm:$0xf]
      %v1669 = vld [vmem:[%s1643 + $0x64] sm:$0xf]
      %v1670 = vld [vmem:[%s1643 + $0x68] sm:$0xf]
      %v1671 = vld [vmem:[%s1643 + $0x6c] sm:$0xf]
      %v1672 = vld [vmem:[%s1643 + $0x70] sm:$0xf]
      %v1673 = vld [vmem:[%s1643 + $0x74] sm:$0xf]
      %v1674 = vld [vmem:[%s1643 + $0x78] sm:$0xf]
      %v1675 = vld [vmem:[%s1643 + $0x7c] sm:$0xf]
      %v1676 = vld [vmem:[%s1643 + $0x80] sm:$0xf]
      %v1677 = vld [vmem:[%s1643 + $0x84] sm:$0xf]
      %v1678 = vld [vmem:[%s1643 + $0x88] sm:$0xf]
      %v1679 = vld [vmem:[%s1643 + $0x8c] sm:$0xf]
      %v1680 = vld [vmem:[%s1643 + $0x90] sm:$0xf]
      %v1681 = vld [vmem:[%s1643 + $0x94] sm:$0xf]
      %v1682 = vld [vmem:[%s1643 + $0x98] sm:$0xf]
      %v1683 = vld [vmem:[%s1643 + $0x9c] sm:$0xf]
      %v1684 = vld [vmem:[%s1643 + $0xa0] sm:$0xf]
      %v1685 = vld [vmem:[%s1643 + $0xa4] sm:$0xf]
      %v1686 = vld [vmem:[%s1643 + $0xa8] sm:$0xf]
      %v1687 = vld [vmem:[%s1643 + $0xac] sm:$0xf]
      %v1688 = vld [vmem:[%s1643 + $0xb0] sm:$0xf]
      %v1689 = vld [vmem:[%s1643 + $0xb4] sm:$0xf]
      %v1690 = vld [vmem:[%s1643 + $0xb8] sm:$0xf]
      %v1691 = vld [vmem:[%s1643 + $0xbc] sm:$0xf]
      %v1740 = vunpack.c.l.b16 %v1644
      %v1741 = vunpack.c.l.b16 %v1645
      %v1742 = vunpack.c.l.b16 %v1646
      %v1743 = vunpack.c.l.b16 %v1647
      %v1744 = vunpack.c.l.b16 %v1648
      %v1745 = vunpack.c.l.b16 %v1649
      %v1746 = vunpack.c.l.b16 %v1650
      %v1747 = vunpack.c.l.b16 %v1651
      %v1748 = vunpack.c.l.b16 %v1652
      %v1749 = vunpack.c.l.b16 %v1653
      %v1750 = vunpack.c.l.b16 %v1654
      %v1751 = vunpack.c.l.b16 %v1655
      %v1752 = vunpack.c.l.b16 %v1656
      %v1753 = vunpack.c.l.b16 %v1657
      %v1754 = vunpack.c.l.b16 %v1658
      %v1755 = vunpack.c.l.b16 %v1659
      %v1756 = vunpack.c.l.b16 %v1660
      %v1757 = vunpack.c.l.b16 %v1661
      %v1758 = vunpack.c.l.b16 %v1662
      %v1759 = vunpack.c.l.b16 %v1663
      %v1760 = vunpack.c.l.b16 %v1664
      %v1761 = vunpack.c.l.b16 %v1665
      %v1762 = vunpack.c.l.b16 %v1666
      %v1763 = vunpack.c.l.b16 %v1667
      %v1764 = vunpack.c.l.b16 %v1668
      %v1765 = vunpack.c.l.b16 %v1669
      %v1766 = vunpack.c.l.b16 %v1670
      %v1767 = vunpack.c.l.b16 %v1671
      %v1768 = vunpack.c.l.b16 %v1672
      %v1769 = vunpack.c.l.b16 %v1673
      %v1770 = vunpack.c.l.b16 %v1674
      %v1771 = vunpack.c.l.b16 %v1675
      %v1772 = vunpack.c.l.b16 %v1676
      %v1773 = vunpack.c.l.b16 %v1677
      %v1774 = vunpack.c.l.b16 %v1678
      %v1775 = vunpack.c.l.b16 %v1679
      %v1776 = vunpack.c.l.b16 %v1680
      %v1777 = vunpack.c.l.b16 %v1681
      %v1778 = vunpack.c.l.b16 %v1682
      %v1779 = vunpack.c.l.b16 %v1683
      %v1780 = vunpack.c.l.b16 %v1684
      %v1781 = vunpack.c.l.b16 %v1685
      %v1782 = vunpack.c.l.b16 %v1686
      %v1783 = vunpack.c.l.b16 %v1687
      %v1784 = vunpack.c.l.b16 %v1688
      %v1785 = vunpack.c.l.b16 %v1689
      %v1786 = vunpack.c.l.b16 %v1690
      %v1787 = vunpack.c.l.b16 %v1691
      %v1788 = vpack.c.b16 %v1741, %v1740
      %v1789 = vpack.c.b16 %v1743, %v1742
      %v1790 = vpack.c.b16 %v1745, %v1744
      %v1791 = vpack.c.b16 %v1747, %v1746
      %v1792 = vpack.c.b16 %v1749, %v1748
      %v1793 = vpack.c.b16 %v1751, %v1750
      %v1794 = vpack.c.b16 %v1753, %v1752
      %v1795 = vpack.c.b16 %v1755, %v1754
      %v1796 = vpack.c.b16 %v1757, %v1756
      %v1797 = vpack.c.b16 %v1759, %v1758
      %v1798 = vpack.c.b16 %v1761, %v1760
      %v1799 = vpack.c.b16 %v1763, %v1762
      %v1800 = vpack.c.b16 %v1765, %v1764
      %v1801 = vpack.c.b16 %v1767, %v1766
      %v1802 = vpack.c.b16 %v1769, %v1768
      %v1803 = vpack.c.b16 %v1771, %v1770
      %v1804 = vpack.c.b16 %v1773, %v1772
      %v1805 = vpack.c.b16 %v1775, %v1774
      %v1806 = vpack.c.b16 %v1777, %v1776
      %v1807 = vpack.c.b16 %v1779, %v1778
      %v1808 = vpack.c.b16 %v1781, %v1780
      %v1809 = vpack.c.b16 %v1783, %v1782
      %v1810 = vpack.c.b16 %v1785, %v1784
      %v1811 = vpack.c.b16 %v1787, %v1786
      %1836 = vmatpush.bf16.msra.mxu0 %v1795
      %1837 = vmatpush.bf16.msra.mxu0 %v1794
      %1838 = vmatpush.bf16.msra.mxu0 %v1793
      %1839 = vmatpush.bf16.msra.mxu0 %v1792
      %1840 = vmatpush.bf16.msra.mxu0 %v1791
      %1841 = vmatpush.bf16.msra.mxu0 %v1790
      %1842 = vmatpush.bf16.msra.mxu0 %v1789
      %1843 = vmatpush.bf16.msra.mxu0 %v1788
      %1844 = vmatmul.bf16.gmra.mxu0 %v754
      %v1845 = vpop.f32.mrf.mxu0
      %v1846 = vadd.f32 0.0, %v1845
      %v1847 = vpop.f32.mrf.mxu0
      %v1848 = vadd.f32 0.0, %v1847
      %1849 = vmatmul.bf16.gmra.mxu0 %v755
      %v1850 = vpop.f32.mrf.mxu0
      %v1851 = vadd.f32 0.0, %v1850
      %v1852 = vpop.f32.mrf.mxu0
      %v1853 = vadd.f32 0.0, %v1852
      %1854 = vmatmul.bf16.gmra.mxu0 %v756
      %v1855 = vpop.f32.mrf.mxu0
      %v1856 = vadd.f32 0.0, %v1855
      %v1857 = vpop.f32.mrf.mxu0
      %v1858 = vadd.f32 0.0, %v1857
      %1859 = vmatmul.bf16.gmra.mxu0 %v757
      %v1860 = vpop.f32.mrf.mxu0
      %v1861 = vadd.f32 0.0, %v1860
      %v1862 = vpop.f32.mrf.mxu0
      %v1863 = vadd.f32 0.0, %v1862
      %1864 = vmatmul.bf16.gmra.mxu0 %v758
      %v1865 = vpop.f32.mrf.mxu0
      %v1866 = vadd.f32 0.0, %v1865
      %v1867 = vpop.f32.mrf.mxu0
      %v1868 = vadd.f32 0.0, %v1867
      %1869 = vmatmul.bf16.gmra.mxu0 %v759
      %v1870 = vpop.f32.mrf.mxu0
      %v1871 = vadd.f32 0.0, %v1870
      %v1872 = vpop.f32.mrf.mxu0
      %v1873 = vadd.f32 0.0, %v1872
      %1874 = vmatmul.bf16.gmra.mxu0 %v760
      %v1875 = vpop.f32.mrf.mxu0
      %v1876 = vadd.f32 0.0, %v1875
      %v1877 = vpop.f32.mrf.mxu0
      %v1878 = vadd.f32 0.0, %v1877
      %1879 = vmatmul.bf16.gmra.mxu0 %v761
      %v1880 = vpop.f32.mrf.mxu0
      %v1881 = vadd.f32 0.0, %v1880
      %v1882 = vpop.f32.mrf.mxu0
      %v1883 = vadd.f32 0.0, %v1882
      %1884 = vdwg.mxu0
      %1885 = vmatpush.bf16.msra.mxu0 %v1803
      %1886 = vmatpush.bf16.msra.mxu0 %v1802
      %1887 = vmatpush.bf16.msra.mxu0 %v1801
      %1888 = vmatpush.bf16.msra.mxu0 %v1800
      %1889 = vmatpush.bf16.msra.mxu0 %v1799
      %1890 = vmatpush.bf16.msra.mxu0 %v1798
      %1891 = vmatpush.bf16.msra.mxu0 %v1797
      %1892 = vmatpush.bf16.msra.mxu0 %v1796
      %1893 = vmatmul.bf16.gmra.mxu0 %v808
      %v1894 = vpop.f32.mrf.mxu0
      %v1895 = vadd.f32 %v1846, %v1894
      %v1896 = vpop.f32.mrf.mxu0
      %v1897 = vadd.f32 %v1848, %v1896
      %1898 = vmatmul.bf16.gmra.mxu0 %v820
      %v1899 = vpop.f32.mrf.mxu0
      %v1900 = vadd.f32 %v1851, %v1899
      %v1901 = vpop.f32.mrf.mxu0
      %v1902 = vadd.f32 %v1853, %v1901
      %1903 = vmatmul.bf16.gmra.mxu0 %v832
      %v1904 = vpop.f32.mrf.mxu0
      %v1905 = vadd.f32 %v1856, %v1904
      %v1906 = vpop.f32.mrf.mxu0
      %v1907 = vadd.f32 %v1858, %v1906
      %1908 = vmatmul.bf16.gmra.mxu0 %v844
      %v1909 = vpop.f32.mrf.mxu0
      %v1910 = vadd.f32 %v1861, %v1909
      %v1911 = vpop.f32.mrf.mxu0
      %v1912 = vadd.f32 %v1863, %v1911
      %1913 = vmatmul.bf16.gmra.mxu0 %v856
      %v1914 = vpop.f32.mrf.mxu0
      %v1915 = vadd.f32 %v1866, %v1914
      %v1916 = vpop.f32.mrf.mxu0
      %v1917 = vadd.f32 %v1868, %v1916
      %1918 = vmatmul.bf16.gmra.mxu0 %v868
      %v1919 = vpop.f32.mrf.mxu0
      %v1920 = vadd.f32 %v1871, %v1919
      %v1921 = vpop.f32.mrf.mxu0
      %v1922 = vadd.f32 %v1873, %v1921
      %1923 = vmatmul.bf16.gmra.mxu0 %v880
      %v1924 = vpop.f32.mrf.mxu0
      %v1925 = vadd.f32 %v1876, %v1924
      %v1926 = vpop.f32.mrf.mxu0
      %v1927 = vadd.f32 %v1878, %v1926
      %1928 = vmatmul.bf16.gmra.mxu0 %v892
      %v1929 = vpop.f32.mrf.mxu0
      %v1930 = vadd.f32 %v1881, %v1929
      %v1931 = vpop.f32.mrf.mxu0
      %v1932 = vadd.f32 %v1883, %v1931
      %1933 = vdwg.mxu0
      %1934 = vmatpush.bf16.msra.mxu0 %v1811
      %1935 = vmatpush.bf16.msra.mxu0 %v1810
      %1936 = vmatpush.bf16.msra.mxu0 %v1809
      %1937 = vmatpush.bf16.msra.mxu0 %v1808
      %1938 = vmatpush.bf16.msra.mxu0 %v1807
      %1939 = vmatpush.bf16.msra.mxu0 %v1806
      %1940 = vmatpush.bf16.msra.mxu0 %v1805
      %1941 = vmatpush.bf16.msra.mxu0 %v1804
      %1942 = vmatmul.bf16.gmra.mxu0 %v932
      %v1943 = vpop.f32.mrf.mxu0
      %v1944 = vadd.f32 %v1895, %v1943
      %v1945 = vpop.f32.mrf.mxu0
      %v1946 = vadd.f32 %v1897, %v1945
      %1947 = vmatmul.bf16.gmra.mxu0 %v935
      %v1948 = vpop.f32.mrf.mxu0
      %v1949 = vadd.f32 %v1900, %v1948
      %v1950 = vpop.f32.mrf.mxu0
      %v1951 = vadd.f32 %v1902, %v1950
      %1952 = vmatmul.bf16.gmra.mxu0 %v938
      %v1953 = vpop.f32.mrf.mxu0
      %v1954 = vadd.f32 %v1905, %v1953
      %v1955 = vpop.f32.mrf.mxu0
      %v1956 = vadd.f32 %v1907, %v1955
      %1957 = vmatmul.bf16.gmra.mxu0 %v941
      %v1958 = vpop.f32.mrf.mxu0
      %v1959 = vadd.f32 %v1910, %v1958
      %v1960 = vpop.f32.mrf.mxu0
      %v1961 = vadd.f32 %v1912, %v1960
      %1962 = vmatmul.bf16.gmra.mxu0 %v944
      %v1963 = vpop.f32.mrf.mxu0
      %v1964 = vadd.f32 %v1915, %v1963
      %v1965 = vpop.f32.mrf.mxu0
      %v1966 = vadd.f32 %v1917, %v1965
      %1967 = vmatmul.bf16.gmra.mxu0 %v947
      %v1968 = vpop.f32.mrf.mxu0
      %v1969 = vadd.f32 %v1920, %v1968
      %v1970 = vpop.f32.mrf.mxu0
      %v1971 = vadd.f32 %v1922, %v1970
      %1972 = vmatmul.bf16.gmra.mxu0 %v950
      %v1973 = vpop.f32.mrf.mxu0
      %v1974 = vadd.f32 %v1925, %v1973
      %v1975 = vpop.f32.mrf.mxu0
      %v1976 = vadd.f32 %v1927, %v1975
      %1977 = vmatmul.bf16.gmra.mxu0 %v953
      %v1978 = vpop.f32.mrf.mxu0
      %v1979 = vadd.f32 %v1930, %v1978
      %v1980 = vpop.f32.mrf.mxu0
      %v1981 = vadd.f32 %v1932, %v1980
      %1982 = vdwg.mxu0
      %v1983 = vadd.f32 %v1604, %v1944
      %v1984 = vadd.f32 %v1606, %v1946
      %v1985 = vadd.f32 %v1609, %v1949
      %v1986 = vadd.f32 %v1611, %v1951
      %v1987 = vadd.f32 %v1614, %v1954
      %v1988 = vadd.f32 %v1616, %v1956
      %v1989 = vadd.f32 %v1619, %v1959
      %v1990 = vadd.f32 %v1621, %v1961
      %v1991 = vadd.f32 %v1624, %v1964
      %v1992 = vadd.f32 %v1626, %v1966
      %v1993 = vadd.f32 %v1629, %v1969
      %v1994 = vadd.f32 %v1631, %v1971
      %v1995 = vadd.f32 %v1634, %v1974
      %v1996 = vadd.f32 %v1636, %v1976
      %v1997 = vadd.f32 %v1639, %v1979
      %v1998 = vadd.f32 %v1641, %v1981
      %1999 = vmatpush.msra.mxu0 %v1998
      %2000 = vmatpush.msra.mxu0 %v1997
      %2001 = vmatpush.msra.mxu0 %v1996
      %2002 = vmatpush.msra.mxu0 %v1995
      %2003 = vmatpush.msra.mxu0 %v1994
      %2004 = vmatpush.msra.mxu0 %v1993
      %2005 = vmatpush.msra.mxu0 %v1992
      %2006 = vmatpush.msra.mxu0 %v1991
      %2007 = vmatpush.msra.mxu0 %v1990
      %2008 = vmatpush.msra.mxu0 %v1989
      %2009 = vmatpush.msra.mxu0 %v1988
      %2010 = vmatpush.msra.mxu0 %v1987
      %2011 = vmatpush.msra.mxu0 %v1986
      %2012 = vmatpush.msra.mxu0 %v1985
      %2013 = vmatpush.msra.mxu0 %v1984
      %2014 = vmatpush.msra.mxu0 %v1983
      %2015 = vmatmul.f32.gmra.mxu0 1.0
      %v2016 = vpop.f32.mrf.mxu0
      %v2017 = vadd.f32 0.0, %v2016
      %2018 = vdwg.mxu0
      %v2019 = vmul.f32 %v1983, %v1983
      %v2020 = vmul.f32 %v1984, %v1984
      %v2021 = vmul.f32 %v1985, %v1985
      %v2022 = vmul.f32 %v1986, %v1986
      %v2023 = vmul.f32 %v1987, %v1987
      %v2024 = vmul.f32 %v1988, %v1988
      %v2025 = vmul.f32 %v1989, %v1989
      %v2026 = vmul.f32 %v1990, %v1990
      %v2027 = vmul.f32 %v1991, %v1991
      %v2028 = vmul.f32 %v1992, %v1992
      %v2029 = vmul.f32 %v1993, %v1993
      %v2030 = vmul.f32 %v1994, %v1994
      %v2031 = vmul.f32 %v1995, %v1995
      %v2032 = vmul.f32 %v1996, %v1996
      %v2033 = vmul.f32 %v1997, %v1997
      %v2034 = vmul.f32 %v1998, %v1998
      %2035 = vmatpush.msra.mxu0 %v2034
      %2036 = vmatpush.msra.mxu0 %v2033
      %2037 = vmatpush.msra.mxu0 %v2032
      %2038 = vmatpush.msra.mxu0 %v2031
      %2039 = vmatpush.msra.mxu0 %v2030
      %2040 = vmatpush.msra.mxu0 %v2029
      %2041 = vmatpush.msra.mxu0 %v2028
      %2042 = vmatpush.msra.mxu0 %v2027
      %2043 = vmatpush.msra.mxu0 %v2026
      %2044 = vmatpush.msra.mxu0 %v2025
      %2045 = vmatpush.msra.mxu0 %v2024
      %2046 = vmatpush.msra.mxu0 %v2023
      %2047 = vmatpush.msra.mxu0 %v2022
      %2048 = vmatpush.msra.mxu0 %v2021
      %2049 = vmatpush.msra.mxu0 %v2020
      %2050 = vmatpush.msra.mxu0 %v2019
      %2051 = vmatmul.f32.gmra.mxu0 1.0
      %v2052 = vpop.f32.mrf.mxu0
      %v2053 = vadd.f32 0.0, %v2052
      %2054 = vdwg.mxu0
      %v2056 = vrot.slane %v2053, 7
      %vm2058 = vcmask 1040384
      %v2059 = vsel %vm2058, %v2017, %v2056
      %2060 = vst [vmem:[%s467] sm:$0x3] %v2059
      %v2061 = vpack.c.bf16 %v1983, %v1983
      %v2062 = vpack.c.bf16 %v1984, %v1984
      %v2063 = vpack.c.bf16 %v1985, %v1985
      %v2064 = vpack.c.bf16 %v1986, %v1986
      %v2065 = vpack.c.bf16 %v1987, %v1987
      %v2066 = vpack.c.bf16 %v1988, %v1988
      %v2067 = vpack.c.bf16 %v1989, %v1989
      %v2068 = vpack.c.bf16 %v1990, %v1990
      %v2069 = vpack.c.bf16 %v1991, %v1991
      %v2070 = vpack.c.bf16 %v1992, %v1992
      %v2071 = vpack.c.bf16 %v1993, %v1993
      %v2072 = vpack.c.bf16 %v1994, %v1994
      %v2073 = vpack.c.bf16 %v1995, %v1995
      %v2074 = vpack.c.bf16 %v1996, %v1996
      %v2075 = vpack.c.bf16 %v1997, %v1997
      %v2076 = vpack.c.bf16 %v1998, %v1998
      %2077 = vst [vmem:[%s458] sm:$0xf] %v2061
      %2078 = vst [vmem:[%s458 + $0x4] sm:$0xf] %v2062
      %2079 = vst [vmem:[%s458 + $0x8] sm:$0xf] %v2063
      %2080 = vst [vmem:[%s458 + $0xc] sm:$0xf] %v2064
      %2081 = vst [vmem:[%s458 + $0x10] sm:$0xf] %v2065
      %2082 = vst [vmem:[%s458 + $0x14] sm:$0xf] %v2066
      %2083 = vst [vmem:[%s458 + $0x18] sm:$0xf] %v2067
      %2084 = vst [vmem:[%s458 + $0x1c] sm:$0xf] %v2068
      %2085 = vst [vmem:[%s458 + $0x20] sm:$0xf] %v2069
      %2086 = vst [vmem:[%s458 + $0x24] sm:$0xf] %v2070
      %2087 = vst [vmem:[%s458 + $0x28] sm:$0xf] %v2071
      %2088 = vst [vmem:[%s458 + $0x2c] sm:$0xf] %v2072
      %2089 = vst [vmem:[%s458 + $0x30] sm:$0xf] %v2073
      %2090 = vst [vmem:[%s458 + $0x34] sm:$0xf] %v2074
      %2091 = vst [vmem:[%s458 + $0x38] sm:$0xf] %v2075
      %2092 = vst [vmem:[%s458 + $0x3c] sm:$0xf] %v2076
      %s2093 = smul.u32 8, %s24
      %p2094 = scmp.lt.s32.totalorder %s23, 1
      %s2095 = scalar_select %p2094, %s23, 1
      %p2096 = scmp.lt.s32.totalorder %s2093, 15
      %s2097 = scalar_select %p2096, %s2093, 15
      %s2098 = smul.addr %s2097, 2
      %s2099 = smul.addr %s2095, 32
      %s2100 = sadd.s32 %s2098, %s2099
      %s2101 = smul.addr %s2100, 4
      %s2102 = scalar_lea.vmem %s6, %s2101
      %p2103 = scmp.lt.s32.totalorder %s23, 1
      %s2104 = scalar_select %p2103, %s23, 1
      %p2105 = scmp.lt.s32.totalorder %s24, 1
      %s2106 = scalar_select %p2105, %s24, 1
      %s2107 = smul.addr %s2104, 2
      %s2108 = sadd.s32 %s2106, %s2107
      %s2109 = smul.addr %s2108, 2
      %s2110 = scalar_lea.vmem %s7, %s2109
      // Predicated region
      $region45: #{double_conv.4} parent=43 // pred_check
        %p2111 = pneg %p214
      $region46: #{double_conv.4} parent=43 // pred_check_branch
        %2113 = sbr.rel (%p2111) target = $region48
      $region47: #{double_conv.4} parent=43 // pred_region
        %s2114 = smul.u32 8, %s24
      $region48: #{double_conv.4} parent=43 // pred_fallthru
        _
      // Predicated region
      $region49: #{double_conv.4} parent=43 // pred_check
        %p2115 = pneg %p242
      $region50: #{double_conv.4} parent=43 // pred_check_branch
        %2117 = sbr.rel (%p2115) target = $region52
      $region51: #{double_conv.4} parent=43 // pred_region
        _
      $region52: #{double_conv.4} parent=43 // pred_fallthru
        _
    $region44: #{double_conv.4} parent=5 // pred_fallthru
      _
    %p2118 = scmp.le.s32.totalorder 2, %s14
    // Predicated region
    $region53: #{double_conv.4} parent=5 // pred_check
      %p2119 = pneg %p2118
    $region54: #{double_conv.4} parent=5 // pred_check_branch
      %2121 = sbr.rel (%p2119) target = $region56
    $region55: #{double_conv.4} parent=5 // pred_region
      %s2122 = ssub.s32 %s14, 2
      // Predicated region
      $region57: #{double_conv.4} parent=55 // pred_check
        %p2123 = pneg %p220
      $region58: #{double_conv.4} parent=55 // pred_check_branch
        %2125 = sbr.rel (%p2123) target = $region60
      $region59: #{double_conv.4} parent=55 // pred_region
        %s2126 = smul.u32 8, %s26
        %p2127 = scmp.lt.s32.totalorder %s25, 1
        %s2128 = scalar_select %p2127, %s25, 1
        %p2129 = scmp.lt.s32.totalorder %s2126, 15
        %s2130 = scalar_select %p2129, %s2126, 15
        %s2131 = smul.addr %s2130, 2
        %s2132 = smul.addr %s2128, 32
        %s2133 = sadd.s32 %s2131, %s2132
        %s2134 = smul.addr %s2133, 4
        %s2135 = scalar_lea.vmem %s6, %s2134
      $region60: #{double_conv.4} parent=55 // pred_fallthru
        _
      // Predicated region
      $region61: #{double_conv.4} parent=55 // pred_check
        %p2136 = pneg %p248
      $region62: #{double_conv.4} parent=55 // pred_check_branch
        %2138 = sbr.rel (%p2136) target = $region64
      $region63: #{double_conv.4} parent=55 // pred_region
        %p2139 = scmp.lt.s32.totalorder %s25, 1
        %s2140 = scalar_select %p2139, %s25, 1
        %p2141 = scmp.lt.s32.totalorder %s26, 1
        %s2142 = scalar_select %p2141, %s26, 1
        %s2143 = smul.addr %s2140, 2
        %s2144 = sadd.s32 %s2142, %s2143
        %s2145 = smul.addr %s2144, 2
        %s2146 = scalar_lea.vmem %s7, %s2145
      $region64: #{double_conv.4} parent=55 // pred_fallthru
        _
    $region56: #{double_conv.4} parent=5 // pred_fallthru
      _
  $region6: #{double_conv.4} parent=0 // loop_footer
    %s18 = sadd.s32 1, %s14
  $region7: #{double_conv.4} parent=0 // loop_footer_branch
    %13 = sbr.rel target = $region3
  $region8: #{double_conv.4} parent=0 // loop_exit
    _

</llo_original>
